<compile_context>
chip_gen: v7x
topology: tpu7x:2x2x1
jax: 0.10.0
libtpu: 0.0.40
codegen_flags: <defaults>
</compile_context>

<pallas_src>
import math
import functools

import jax
import jax.numpy as jnp
from jax import lax
from jax.experimental import pallas as pl
from jax.experimental.pallas import tpu as pltpu


# ----------------------------- in-kernel math -------------------------------

def _add_layernorm(x, y, gamma, beta, eps):
    z = x + y
    mu = jnp.mean(z, axis=-1, keepdims=True)
    var = jnp.mean(jnp.square(z - mu), axis=-1, keepdims=True)
    return (z - mu) * lax.rsqrt(var + eps) * gamma + beta


def _heads_proj(xb, w, b):
    """Batched per-head projection.

    xb: (nh, N, H) bf16 (input broadcast over heads), w: (nh, H, hd) bf16,
    b: (nh, 1, hd) f32.  Returns (nh, N, hd) f32.
    """
    y = lax.dot_general(xb, w, (((2,), (1,)), ((0,), (0,))),
                        preferred_element_type=jnp.float32)
    return y + b


def _mha_heads(q, k, v, wo, bo, bias):
    """Multi-head attention, all heads in one batched MXU pass.

    q: (nh, S, hd) f32 (softmax scale already folded into the Q weights),
    k/v: (nh, T, hd) f32, wo: (nh, hd, H) bf16, bo: (1, H) f32,
    bias: (1, T) additive f32 mask or None.  Returns (S, H) f32.
    """
    s = lax.dot_general(q.astype(jnp.bfloat16), k.astype(jnp.bfloat16),
                        (((2,), (2,)), ((0,), (0,))),
                        preferred_element_type=jnp.float32)          # (nh,S,T)
    if bias is not None:
        s = s + bias
    s = s - jnp.max(s, axis=-1, keepdims=True)
    p = jnp.exp(s)
    p = p * pl.reciprocal(jnp.sum(p, axis=-1, keepdims=True), approx=True)
    ctx = lax.dot_general(p.astype(jnp.bfloat16), v.astype(jnp.bfloat16),
                          (((2,), (1,)), ((0,), (0,))),
                          preferred_element_type=jnp.float32)        # (nh,S,hd)
    per_head = lax.dot_general(ctx.astype(jnp.bfloat16), wo,
                               (((2,), (1,)), ((0,), (0,))),
                               preferred_element_type=jnp.float32)   # (nh,S,H)
    return jnp.sum(per_head, axis=0) + bo


# ------------------------------ fused kernel --------------------------------

def _decoder_kernel(x0_ref, enc_ref, bias_ref,
                    sa_wqkv_ref, sa_bqkv_ref, sa_wo_ref, sa_bo_ref,
                    ca_wq_ref, ca_bq_ref, ca_wkv_ref, ca_bkv_ref,
                    ca_wo_ref, ca_bo_ref,
                    ln_g_ref, ln_b_ref, w1_ref, b1_ref, w2_ref, b2_ref,
                    o_ref, *, num_heads, eps):
    nh = num_heads
    l = pl.program_id(1)

    # Layer 0: seed the VMEM-resident activation with the embedding+PE input.
    @pl.when(l == 0)
    def _():
        o_ref[...] = x0_ref[...]

    x = o_ref[...]                                   # (S, H) f32, layer input
    g, b = ln_g_ref[...], ln_b_ref[...]

    # ---- masked self-attention (reference passes attention_mask=None) ------
    wqkv, bqkv = sa_wqkv_ref[...], sa_bqkv_ref[...]  # (3nh,H,hd) / (3nh,1,hd)
    xb = jnp.broadcast_to(x.astype(jnp.bfloat16)[None], (nh,) + x.shape)
    q = _heads_proj(xb, wqkv[:nh], bqkv[:nh])
    k = _heads_proj(xb, wqkv[nh:2 * nh], bqkv[nh:2 * nh])
    v = _heads_proj(xb, wqkv[2 * nh:], bqkv[2 * nh:])
    attn = _mha_heads(q, k, v, sa_wo_ref[...], sa_bo_ref[...], None)
    h1 = _add_layernorm(x, attn, g, b, eps)

    # ---- encoder-decoder cross-attention (additive encoder mask) -----------
    wkv, bkv = ca_wkv_ref[...], ca_bkv_ref[...]      # (2nh,H,hd) / (2nh,1,hd)
    enc = enc_ref[...]                               # (T, H) bf16 (pre-cast)
    encb = jnp.broadcast_to(enc[None], (nh,) + enc.shape)
    h1b = jnp.broadcast_to(h1.astype(jnp.bfloat16)[None], (nh,) + h1.shape)
    q2 = _heads_proj(h1b, ca_wq_ref[...], ca_bq_ref[...])
    k2 = _heads_proj(encb, wkv[:nh], bkv[:nh])
    v2 = _heads_proj(encb, wkv[nh:], bkv[nh:])
    attn2 = _mha_heads(q2, k2, v2, ca_wo_ref[...], ca_bo_ref[...],
                       bias_ref[...])
    h2 = _add_layernorm(h1, attn2, g, b, eps)

    # ---- feed-forward -------------------------------------------------------
    hmid = jnp.dot(h2.astype(jnp.bfloat16), w1_ref[...],
                   preferred_element_type=jnp.float32) + b1_ref[...]
    hmid = jnp.maximum(hmid, 0.0)
    y = jnp.dot(hmid.astype(jnp.bfloat16), w2_ref[...],
                preferred_element_type=jnp.float32) + b2_ref[...]

    # Stays resident in VMEM across the L axis; DMA'd to HBM once per batch.
    o_ref[...] = _add_layernorm(h2, y, g, b, eps)


# ------------------------------ pallas wrapper -------------------------------

def _decoder_pallas(x0, enc16, enc_bias, pk, *, num_heads, eps=1e-5):
    B, S, H = x0.shape
    L = pk["sa_wqkv"].shape[0]

    def batch_spec(arr):                 # (B, ...) -> blocked on b, lead squeezed
        nd = arr.ndim
        return pl.BlockSpec((None,) + arr.shape[1:],
                            lambda bi, li: (bi,) + (0,) * (nd - 1))

    def layer_spec(arr):                 # (L, ...) -> blocked on l, lead squeezed
        nd = arr.ndim
        return pl.BlockSpec((None,) + arr.shape[1:],
                            lambda bi, li: (li,) + (0,) * (nd - 1))

    weight_keys = ["sa_wqkv", "sa_bqkv", "sa_wo", "sa_bo",
                   "ca_wq", "ca_bq", "ca_wkv", "ca_bkv", "ca_wo", "ca_bo",
                   "ln_g", "ln_b", "w1", "b1", "w2", "b2"]
    weight_args = [pk[kk] for kk in weight_keys]

    in_specs = ([batch_spec(x0), batch_spec(enc16), batch_spec(enc_bias)]
                + [layer_spec(w) for w in weight_args])

    return pl.pallas_call(
        functools.partial(_decoder_kernel, num_heads=num_heads, eps=eps),
        out_shape=jax.ShapeDtypeStruct((B, S, H), jnp.float32),
        grid=(B, L),
        in_specs=in_specs,
        # Constant block index over L => activation is a VMEM-resident
        # accumulator across layers, written back once per batch.
        out_specs=pl.BlockSpec((None, S, H), lambda bi, li: (bi, 0, 0)),
        compiler_params=pltpu.CompilerParams(
            dimension_semantics=("parallel", "arbitrary"),
            vmem_limit_bytes=32 * 1024 * 1024),
    )(x0, enc16, enc_bias, *weight_args)


# ------------------------------- model glue ----------------------------------

def sinusoidal_pos_encoding(seq_len, hidden):
    pos = jnp.arange(seq_len, dtype=jnp.float32)[:, None]
    div = jnp.exp(jnp.arange(0, hidden, 2, dtype=jnp.float32)
                  * (-math.log(10000.0) / hidden))
    pe = jnp.zeros((seq_len, hidden), jnp.float32)
    pe = pe.at[:, 0::2].set(jnp.sin(pos * div))
    pe = pe.at[:, 1::2].set(jnp.cos(pos * div))
    return pe


@functools.partial(jax.jit, static_argnames=("num_heads",))
def transformer_decoder(input_ids, enc_output, enc_attention_mask, packed, *,
                        num_heads):
    # TODO(synk): embedding gather + positional encoding stay in plain JAX; a
    # scalar-prefetch gather kernel is overkill at these sizes.
    emb = jnp.take(packed["word_embedding"], input_ids, axis=0)      # (B,S,H)
    B, S, H = emb.shape
    x0 = emb + sinusoidal_pos_encoding(S, H)[None]   # PE const-folded under jit
    # encoder mask (B, T), 1 = attend / 0 = pad  ->  additive bias (B, 1, T)
    enc_bias = (1.0 - enc_attention_mask.astype(jnp.float32))[:, None, :] * -1e9
    enc16 = enc_output.astype(jnp.bfloat16)
    return _decoder_pallas(x0, enc16, enc_bias, packed, num_heads=num_heads)


# ----------------------------- parameter init --------------------------------

def _init_linear(key, fan_in, fan_out):
    kw, kb = jax.random.split(key)
    return (0.02 * jax.random.normal(kw, (fan_in, fan_out), jnp.float32),
            0.02 * jax.random.normal(kb, (fan_out,), jnp.float32))


def _init_mha(key, hidden):
    ks = jax.random.split(key, 4)
    wq, bq = _init_linear(ks[0], hidden, hidden)
    wk, bk = _init_linear(ks[1], hidden, hidden)
    wv, bv = _init_linear(ks[2], hidden, hidden)
    wo, bo = _init_linear(ks[3], hidden, hidden)
    return dict(wq=wq, bq=bq, wk=wk, bk=bk, wv=wv, bv=bv, wo=wo, bo=bo)


def _init_layer(key, hidden):
    ks = jax.random.split(key, 6)
    w1, b1 = _init_linear(ks[2], hidden, 4 * hidden)
    w2, b2 = _init_linear(ks[3], 4 * hidden, hidden)
    return dict(
        self_attn=_init_mha(ks[0], hidden),
        cross_attn=_init_mha(ks[1], hidden),
        ln_g=1.0 + 0.02 * jax.random.normal(ks[4], (hidden,), jnp.float32),
        ln_b=0.02 * jax.random.normal(ks[5], (hidden,), jnp.float32),
        w1=w1, b1=b1, w2=w2, b2=b2)


def init_decoder_params(key, vocab, hidden, num_layers):
    ks = jax.random.split(key, num_layers + 1)
    return dict(
        word_embedding=0.02 * jax.random.normal(ks[0], (vocab, hidden),
                                                jnp.float32),
        layers=[_init_layer(ks[i + 1], hidden) for i in range(num_layers)])


def pack_decoder_params(params, num_heads):
    """One-time host-side repack for the fused kernel: stack layers on a
    leading L axis, split projections head-major, fold the 1/sqrt(head_dim)
    scale into the Q projection and pre-cast matmul weights to bf16."""
    H = params["word_embedding"].shape[1]
    nh = num_heads
    hd = H // nh
    scale = 1.0 / math.sqrt(hd)

    def heads_in(w):                     # (H,H)  -> (nh,H,hd)
        return jnp.transpose(w.reshape(H, nh, hd), (1, 0, 2))

    def heads_b(bvec):                   # (H,)   -> (nh,1,hd)
        return bvec.reshape(nh, 1, hd)

    def heads_out(w):                    # (H,H)  -> (nh,hd,H)
        return w.reshape(nh, hd, H)

    def pack_layer(lp):
        sa, ca = lp["self_attn"], lp["cross_attn"]
        return dict(
            sa_wqkv=jnp.concatenate(
                [heads_in(sa["wq"]) * scale, heads_in(sa["wk"]),
                 heads_in(sa["wv"])], axis=0).astype(jnp.bfloat16),
            sa_bqkv=jnp.concatenate(
                [heads_b(sa["bq"]) * scale, heads_b(sa["bk"]),
                 heads_b(sa["bv"])], axis=0),
            sa_wo=heads_out(sa["wo"]).astype(jnp.bfloat16),
            sa_bo=sa["bo"].reshape(1, H),
            ca_wq=(heads_in(ca["wq"]) * scale).astype(jnp.bfloat16),
            ca_bq=heads_b(ca["bq"]) * scale,
            ca_wkv=jnp.concatenate(
                [heads_in(ca["wk"]), heads_in(ca["wv"])],
                axis=0).astype(jnp.bfloat16),
            ca_bkv=jnp.concatenate(
                [heads_b(ca["bk"]), heads_b(ca["bv"])], axis=0),
            ca_wo=heads_out(ca["wo"]).astype(jnp.bfloat16),
            ca_bo=ca["bo"].reshape(1, H),
            ln_g=lp["ln_g"].reshape(1, H),
            ln_b=lp["ln_b"].reshape(1, H),
            w1=lp["w1"].astype(jnp.bfloat16),
            b1=lp["b1"].reshape(1, -1),
            w2=lp["w2"].astype(jnp.bfloat16),
            b2=lp["b2"].reshape(1, H),
        )

    per_layer = [pack_layer(lp) for lp in params["layers"]]
    packed = jax.tree_util.tree_map(lambda *xs: jnp.stack(xs, axis=0),
                                    *per_layer)
    packed["word_embedding"] = params["word_embedding"]
    return packed


# ------------------------ pure-JAX f32 reference ------------------------------

def _reference_decoder(input_ids, enc_output, enc_attention_mask, params,
                       num_heads):
    emb = jnp.take(params["word_embedding"], input_ids, axis=0)
    B, S, H = emb.shape
    nh = num_heads
    hd = H // nh
    x = emb + sinusoidal_pos_encoding(S, H)[None]

    def layernorm(z, g, b_, eps=1e-5):
        mu = z.mean(-1, keepdims=True)
        var = ((z - mu) ** 2).mean(-1, keepdims=True)
        return (z - mu) / jnp.sqrt(var + eps) * g + b_

    def mha(xq, xkv, p, mask):
        def split(t):
            return t.reshape(t.shape[0], t.shape[1], nh, hd).transpose(0, 2, 1, 3)
        q = split(xq @ p["wq"] + p["bq"])
        k = split(xkv @ p["wk"] + p["bk"])
        v = split(xkv @ p["wv"] + p["bv"])
        s = jnp.einsum("bhqd,bhkd->bhqk", q, k) / math.sqrt(hd)
        if mask is not None:
            s = s + (1.0 - mask)[:, None, None, :] * -1e9
        a = jax.nn.softmax(s, axis=-1)
        ctx = jnp.einsum("bhqk,bhkd->bhqd", a, v)
        ctx = ctx.transpose(0, 2, 1, 3).reshape(xq.shape[0], xq.shape[1], H)
        return ctx @ p["wo"] + p["bo"]

    for lp in params["layers"]:
        h1 = layernorm(x + mha(x, x, lp["self_attn"], None),
                       lp["ln_g"], lp["ln_b"])
        h2 = layernorm(h1 + mha(h1, enc_output, lp["cross_attn"],
                                enc_attention_mask),
                       lp["ln_g"], lp["ln_b"])
        ff = jnp.maximum(h2 @ lp["w1"] + lp["b1"], 0.0) @ lp["w2"] + lp["b2"]
        x = layernorm(h2 + ff, lp["ln_g"], lp["ln_b"])
    return x


# ---------------------------------- main --------------------------------------

if __name__ == "__main__":
    # config: transformer_hidden_size=32, num_heads=4, encoder_layer_num=2
    B, DEC_S, ENC_S, H, NUM_HEADS, NUM_LAYERS, VOCAB = 2, 8, 8, 32, 4, 2, 50

    root = jax.random.PRNGKey(0)
    k_ids, k_enc, k_params = jax.random.split(root, 3)

    input_ids = jax.random.randint(k_ids, (B, DEC_S), 0, VOCAB, dtype=jnp.int32)
    enc_output = jax.random.normal(k_enc, (B, ENC_S, H), jnp.float32)
    enc_attention_mask = jnp.array(
        [[1] * ENC_S, [1] * (ENC_S - 2) + [0, 0]], dtype=jnp.float32
    )  # (B, ENC_S): 1 = attend, 0 = padding

    params = init_decoder_params(k_params, VOCAB, H, NUM_LAYERS)
    packed = pack_decoder_params(params, NUM_HEADS)

    out = transformer_decoder(input_ids, enc_output, enc_attention_mask,
                              packed, num_heads=NUM_HEADS)
    out = jax.block_until_ready(out)

    ref = jax.block_until_ready(
        _reference_decoder(input_ids, enc_output, enc_attention_mask, params,
                           NUM_HEADS))

    assert out.shape == (B, DEC_S, H)
    assert bool(jnp.all(jnp.isfinite(out)))
    max_err = float(jnp.max(jnp.abs(out - ref)))
    assert max_err < 0.1, f"kernel/reference mismatch: max abs err {max_err}"
    print("KERNEL_OK")
</pallas_src>

<mosaic_0001>
module attributes {stable_mosaic.version = 11 : i64} {
  func.func @_decoder_kernel(%arg0: i32, %arg1: i32, %arg2: memref<1x8x32xf32, #tpu.memory_space<vmem>>, %arg3: memref<1x8x32xbf16, #tpu.memory_space<vmem>>, %arg4: memref<1x1x8xf32, #tpu.memory_space<vmem>>, %arg5: memref<1x12x32x8xbf16, #tpu.memory_space<vmem>>, %arg6: memref<1x12x1x8xf32, #tpu.memory_space<vmem>>, %arg7: memref<1x4x8x32xbf16, #tpu.memory_space<vmem>>, %arg8: memref<1x1x32xf32, #tpu.memory_space<vmem>>, %arg9: memref<1x4x32x8xbf16, #tpu.memory_space<vmem>>, %arg10: memref<1x4x1x8xf32, #tpu.memory_space<vmem>>, %arg11: memref<1x8x32x8xbf16, #tpu.memory_space<vmem>>, %arg12: memref<1x8x1x8xf32, #tpu.memory_space<vmem>>, %arg13: memref<1x4x8x32xbf16, #tpu.memory_space<vmem>>, %arg14: memref<1x1x32xf32, #tpu.memory_space<vmem>>, %arg15: memref<1x1x32xf32, #tpu.memory_space<vmem>>, %arg16: memref<1x1x32xf32, #tpu.memory_space<vmem>>, %arg17: memref<1x32x128xbf16, #tpu.memory_space<vmem>>, %arg18: memref<1x1x128xf32, #tpu.memory_space<vmem>>, %arg19: memref<1x128x32xbf16, #tpu.memory_space<vmem>>, %arg20: memref<1x1x32xf32, #tpu.memory_space<vmem>>, %arg21: memref<1x8x32xf32, #tpu.memory_space<vmem>>) attributes {dimension_semantics = [#tpu.dimension_semantics<parallel>, #tpu.dimension_semantics<arbitrary>], iteration_bounds = array<i64: 2, 2>, scalar_prefetch = 0 : i64, scratch_operands = 0 : i64, tpu.core_type = #tpu.core_type<tc>, window_params = [{transform_indices = @transform_0, window_bounds = array<i64: 1, 8, 32>}, {transform_indices = @transform_1, window_bounds = array<i64: 1, 8, 32>}, {transform_indices = @transform_2, window_bounds = array<i64: 1, 1, 8>}, {transform_indices = @transform_3, window_bounds = array<i64: 1, 12, 32, 8>}, {transform_indices = @transform_4, window_bounds = array<i64: 1, 12, 1, 8>}, {transform_indices = @transform_5, window_bounds = array<i64: 1, 4, 8, 32>}, {transform_indices = @transform_6, window_bounds = array<i64: 1, 1, 32>}, {transform_indices = @transform_7, window_bounds = array<i64: 1, 4, 32, 8>}, {transform_indices = @transform_8, window_bounds = array<i64: 1, 4, 1, 8>}, {transform_indices = @transform_9, window_bounds = array<i64: 1, 8, 32, 8>}, {transform_indices = @transform_10, window_bounds = array<i64: 1, 8, 1, 8>}, {transform_indices = @transform_11, window_bounds = array<i64: 1, 4, 8, 32>}, {transform_indices = @transform_12, window_bounds = array<i64: 1, 1, 32>}, {transform_indices = @transform_13, window_bounds = array<i64: 1, 1, 32>}, {transform_indices = @transform_14, window_bounds = array<i64: 1, 1, 32>}, {transform_indices = @transform_15, window_bounds = array<i64: 1, 32, 128>}, {transform_indices = @transform_16, window_bounds = array<i64: 1, 1, 128>}, {transform_indices = @transform_17, window_bounds = array<i64: 1, 128, 32>}, {transform_indices = @transform_18, window_bounds = array<i64: 1, 1, 32>}, {transform_indices = @transform_19, window_bounds = array<i64: 1, 8, 32>}]} {
    %c0_i32 = arith.constant 0 : i32
    %0 = arith.cmpi eq, %arg1, %c0_i32 : i32
    %1 = arith.extui %0 : i1 to i32
    %c0_i32_0 = arith.constant 0 : i32
    %2 = arith.cmpi ne, %1, %c0_i32_0 : i32
    scf.if %2 {
      %c0_103 = arith.constant 0 : index
      %c0_104 = arith.constant 0 : index
      %c0_105 = arith.constant 0 : index
      %207 = vector.load %arg2[%c0_103, %c0_104, %c0_105] : memref<1x8x32xf32, #tpu.memory_space<vmem>>, vector<1x8x32xf32>
      %208 = vector.shape_cast %207 : vector<1x8x32xf32> to vector<8x32xf32>
      %c0_106 = arith.constant 0 : index
      %c0_107 = arith.constant 0 : index
      %c0_108 = arith.constant 0 : index
      %209 = vector.load %arg21[%c0_106, %c0_107, %c0_108] : memref<1x8x32xf32, #tpu.memory_space<vmem>>, vector<1x8x32xf32>
      %210 = vector.shape_cast %209 : vector<1x8x32xf32> to vector<8x32xf32>
      %211 = vector.shape_cast %208 : vector<8x32xf32> to vector<1x8x32xf32>
      tpu.vector_store %arg21[%c0_106, %c0_107, %c0_108], %211 {strides = array<i32>} : memref<1x8x32xf32, #tpu.memory_space<vmem>>, vector<1x8x32xf32>,
    } else {
    }
    %c0 = arith.constant 0 : index
    %c0_1 = arith.constant 0 : index
    %c0_2 = arith.constant 0 : index
    %3 = vector.load %arg21[%c0, %c0_1, %c0_2] : memref<1x8x32xf32, #tpu.memory_space<vmem>>, vector<1x8x32xf32>
    %4 = vector.shape_cast %3 : vector<1x8x32xf32> to vector<8x32xf32>
    %c0_3 = arith.constant 0 : index
    %c0_4 = arith.constant 0 : index
    %c0_5 = arith.constant 0 : index
    %5 = vector.load %arg15[%c0_3, %c0_4, %c0_5] : memref<1x1x32xf32, #tpu.memory_space<vmem>>, vector<1x1x32xf32>
    %6 = vector.shape_cast %5 : vector<1x1x32xf32> to vector<1x32xf32>
    %c0_6 = arith.constant 0 : index
    %c0_7 = arith.constant 0 : index
    %c0_8 = arith.constant 0 : index
    %7 = vector.load %arg16[%c0_6, %c0_7, %c0_8] : memref<1x1x32xf32, #tpu.memory_space<vmem>>, vector<1x1x32xf32>
    %8 = vector.shape_cast %7 : vector<1x1x32xf32> to vector<1x32xf32>
    %c0_9 = arith.constant 0 : index
    %c0_10 = arith.constant 0 : index
    %c0_11 = arith.constant 0 : index
    %c0_12 = arith.constant 0 : index
    %9 = vector.load %arg5[%c0_9, %c0_10, %c0_11, %c0_12] : memref<1x12x32x8xbf16, #tpu.memory_space<vmem>>, vector<1x12x32x8xbf16>
    %10 = vector.shape_cast %9 : vector<1x12x32x8xbf16> to vector<12x32x8xbf16>
    %c0_13 = arith.constant 0 : index
    %c0_14 = arith.constant 0 : index
    %c0_15 = arith.constant 0 : index
    %c0_16 = arith.constant 0 : index
    %11 = vector.load %arg6[%c0_13, %c0_14, %c0_15, %c0_16] : memref<1x12x1x8xf32, #tpu.memory_space<vmem>>, vector<1x12x1x8xf32>
    %12 = vector.shape_cast %11 : vector<1x12x1x8xf32> to vector<12x1x8xf32>
    %13 = arith.truncf %4 : vector<8x32xf32> to vector<8x32xbf16>
    %14 = vector.shape_cast %13 : vector<8x32xbf16> to vector<1x8x32xbf16>
    %15 = vector.shape_cast %14 : vector<1x8x32xbf16> to vector<1x8x32xbf16>
    %16 = vector.broadcast %15 : vector<1x8x32xbf16> to vector<4x8x32xbf16>
    %17 = vector.extract_strided_slice %10 {offsets = [0, 0, 0], sizes = [4, 32, 8], strides = [1, 1, 1]} : vector<12x32x8xbf16> to vector<4x32x8xbf16>
    %18 = vector.extract_strided_slice %12 {offsets = [0, 0, 0], sizes = [4, 1, 8], strides = [1, 1, 1]} : vector<12x1x8xf32> to vector<4x1x8xf32>
    %cst = arith.constant dense<0.000000e+00> : vector<4x8x8xf32>
    %19 = tpu.matmul %16, %17, %cst {dimension_numbers = #tpu.dot_dimension_numbers<[2], [1], [1], [2], [0, 0, 0, 1, 1, 2], [0], [0]>} : vector<4x8x32xbf16>, vector<4x32x8xbf16>, vector<4x8x8xf32> -> vector<4x8x8xf32>
    %20 = vector.broadcast %18 : vector<4x1x8xf32> to vector<4x8x8xf32>
    %21 = arith.addf %19, %20 : vector<4x8x8xf32>
    %22 = vector.extract_strided_slice %10 {offsets = [4, 0, 0], sizes = [4, 32, 8], strides = [1, 1, 1]} : vector<12x32x8xbf16> to vector<4x32x8xbf16>
    %23 = vector.extract_strided_slice %12 {offsets = [4, 0, 0], sizes = [4, 1, 8], strides = [1, 1, 1]} : vector<12x1x8xf32> to vector<4x1x8xf32>
    %cst_17 = arith.constant dense<0.000000e+00> : vector<4x8x8xf32>
    %24 = tpu.matmul %16, %22, %cst_17 {dimension_numbers = #tpu.dot_dimension_numbers<[2], [1], [1], [2], [0, 0, 0, 1, 1, 2], [0], [0]>} : vector<4x8x32xbf16>, vector<4x32x8xbf16>, vector<4x8x8xf32> -> vector<4x8x8xf32>
    %25 = vector.broadcast %23 : vector<4x1x8xf32> to vector<4x8x8xf32>
    %26 = arith.addf %24, %25 : vector<4x8x8xf32>
    %27 = vector.extract_strided_slice %10 {offsets = [8, 0, 0], sizes = [4, 32, 8], strides = [1, 1, 1]} : vector<12x32x8xbf16> to vector<4x32x8xbf16>
    %28 = vector.extract_strided_slice %12 {offsets = [8, 0, 0], sizes = [4, 1, 8], strides = [1, 1, 1]} : vector<12x1x8xf32> to vector<4x1x8xf32>
    %cst_18 = arith.constant dense<0.000000e+00> : vector<4x8x8xf32>
    %29 = tpu.matmul %16, %27, %cst_18 {dimension_numbers = #tpu.dot_dimension_numbers<[2], [1], [1], [2], [0, 0, 0, 1, 1, 2], [0], [0]>} : vector<4x8x32xbf16>, vector<4x32x8xbf16>, vector<4x8x8xf32> -> vector<4x8x8xf32>
    %30 = vector.broadcast %28 : vector<4x1x8xf32> to vector<4x8x8xf32>
    %31 = arith.addf %29, %30 : vector<4x8x8xf32>
    %c0_19 = arith.constant 0 : index
    %c0_20 = arith.constant 0 : index
    %c0_21 = arith.constant 0 : index
    %c0_22 = arith.constant 0 : index
    %32 = vector.load %arg7[%c0_19, %c0_20, %c0_21, %c0_22] : memref<1x4x8x32xbf16, #tpu.memory_space<vmem>>, vector<1x4x8x32xbf16>
    %33 = vector.shape_cast %32 : vector<1x4x8x32xbf16> to vector<4x8x32xbf16>
    %c0_23 = arith.constant 0 : index
    %c0_24 = arith.constant 0 : index
    %c0_25 = arith.constant 0 : index
    %34 = vector.load %arg8[%c0_23, %c0_24, %c0_25] : memref<1x1x32xf32, #tpu.memory_space<vmem>>, vector<1x1x32xf32>
    %35 = vector.shape_cast %34 : vector<1x1x32xf32> to vector<1x32xf32>
    %36 = arith.truncf %21 : vector<4x8x8xf32> to vector<4x8x8xbf16>
    %37 = arith.truncf %26 : vector<4x8x8xf32> to vector<4x8x8xbf16>
    %cst_26 = arith.constant dense<0.000000e+00> : vector<4x8x8xf32>
    %38 = tpu.matmul %36, %37, %cst_26 {dimension_numbers = #tpu.dot_dimension_numbers<[2], [2], [1], [1], [0, 0, 0, 1, 1, 1], [0], [0]>} : vector<4x8x8xbf16>, vector<4x8x8xbf16>, vector<4x8x8xf32> -> vector<4x8x8xf32>
    %cst_27 = arith.constant dense<0xFF800000> : vector<4x8xf32>
    %39 = vector.multi_reduction <maximumf>, %38, %cst_27 [2] : vector<4x8x8xf32> to vector<4x8xf32>
    %40 = vector.shape_cast %39 : vector<4x8xf32> to vector<4x8x1xf32>
    %41 = vector.broadcast %40 : vector<4x8x1xf32> to vector<4x8x8xf32>
    %42 = arith.subf %38, %41 : vector<4x8x8xf32>
    %43 = math.exp %42 : vector<4x8x8xf32>
    %cst_28 = arith.constant dense<0.000000e+00> : vector<4x8xf32>
    %44 = vector.multi_reduction <add>, %43, %cst_28 [2] : vector<4x8x8xf32> to vector<4x8xf32>
    %45 = vector.shape_cast %44 : vector<4x8xf32> to vector<4x8x1xf32>
    %46 = tpu.reciprocal %45 {approx = true} : vector<4x8x1xf32> -> vector<4x8x1xf32>
    %47 = vector.broadcast %46 : vector<4x8x1xf32> to vector<4x8x8xf32>
    %48 = arith.mulf %43, %47 : vector<4x8x8xf32>
    %49 = arith.truncf %48 : vector<4x8x8xf32> to vector<4x8x8xbf16>
    %50 = arith.truncf %31 : vector<4x8x8xf32> to vector<4x8x8xbf16>
    %cst_29 = arith.constant dense<0.000000e+00> : vector<4x8x8xf32>
    %51 = tpu.matmul %49, %50, %cst_29 {dimension_numbers = #tpu.dot_dimension_numbers<[2], [1], [1], [2], [0, 0, 0, 1, 1, 2], [0], [0]>} : vector<4x8x8xbf16>, vector<4x8x8xbf16>, vector<4x8x8xf32> -> vector<4x8x8xf32>
    %52 = arith.truncf %51 : vector<4x8x8xf32> to vector<4x8x8xbf16>
    %cst_30 = arith.constant dense<0.000000e+00> : vector<4x8x32xf32>
    %53 = tpu.matmul %52, %33, %cst_30 {dimension_numbers = #tpu.dot_dimension_numbers<[2], [1], [1], [2], [0, 0, 0, 1, 1, 2], [0], [0]>} : vector<4x8x8xbf16>, vector<4x8x32xbf16>, vector<4x8x32xf32> -> vector<4x8x32xf32>
    %cst_31 = arith.constant dense<0.000000e+00> : vector<8x32xf32>
    %54 = vector.multi_reduction <add>, %53, %cst_31 [0] : vector<4x8x32xf32> to vector<8x32xf32>
    %55 = vector.broadcast %35 : vector<1x32xf32> to vector<8x32xf32>
    %56 = arith.addf %54, %55 : vector<8x32xf32>
    %57 = arith.addf %4, %56 : vector<8x32xf32>
    %cst_32 = arith.constant dense<0.000000e+00> : vector<8xf32>
    %58 = vector.multi_reduction <add>, %57, %cst_32 [1] : vector<8x32xf32> to vector<8xf32>
    %59 = vector.shape_cast %58 : vector<8xf32> to vector<8x1xf32>
    %cst_33 = arith.constant 3.200000e+01 : f32
    %60 = vector.broadcast %cst_33 : f32 to vector<8x1xf32>
    %61 = arith.divf %59, %60 : vector<8x1xf32>
    %62 = vector.broadcast %61 : vector<8x1xf32> to vector<8x32xf32>
    %63 = arith.subf %57, %62 : vector<8x32xf32>
    %64 = arith.mulf %63, %63 : vector<8x32xf32>
    %cst_34 = arith.constant dense<0.000000e+00> : vector<8xf32>
    %65 = vector.multi_reduction <add>, %64, %cst_34 [1] : vector<8x32xf32> to vector<8xf32>
    %66 = vector.shape_cast %65 : vector<8xf32> to vector<8x1xf32>
    %cst_35 = arith.constant 3.200000e+01 : f32
    %67 = vector.broadcast %cst_35 : f32 to vector<8x1xf32>
    %68 = arith.divf %66, %67 : vector<8x1xf32>
    %69 = vector.broadcast %61 : vector<8x1xf32> to vector<8x32xf32>
    %70 = arith.subf %57, %69 : vector<8x32xf32>
    %cst_36 = arith.constant 9.99999974E-6 : f32
    %71 = vector.broadcast %cst_36 : f32 to vector<8x1xf32>
    %72 = arith.addf %68, %71 : vector<8x1xf32>
    %73 = math.rsqrt %72 : vector<8x1xf32>
    %74 = vector.broadcast %73 : vector<8x1xf32> to vector<8x32xf32>
    %75 = arith.mulf %70, %74 : vector<8x32xf32>
    %76 = vector.broadcast %6 : vector<1x32xf32> to vector<8x32xf32>
    %77 = arith.mulf %75, %76 : vector<8x32xf32>
    %78 = vector.broadcast %8 : vector<1x32xf32> to vector<8x32xf32>
    %79 = arith.addf %77, %78 : vector<8x32xf32>
    %c0_37 = arith.constant 0 : index
    %c0_38 = arith.constant 0 : index
    %c0_39 = arith.constant 0 : index
    %c0_40 = arith.constant 0 : index
    %80 = vector.load %arg11[%c0_37, %c0_38, %c0_39, %c0_40] : memref<1x8x32x8xbf16, #tpu.memory_space<vmem>>, vector<1x8x32x8xbf16>
    %81 = vector.shape_cast %80 : vector<1x8x32x8xbf16> to vector<8x32x8xbf16>
    %c0_41 = arith.constant 0 : index
    %c0_42 = arith.constant 0 : index
    %c0_43 = arith.constant 0 : index
    %c0_44 = arith.constant 0 : index
    %82 = vector.load %arg12[%c0_41, %c0_42, %c0_43, %c0_44] : memref<1x8x1x8xf32, #tpu.memory_space<vmem>>, vector<1x8x1x8xf32>
    %83 = vector.shape_cast %82 : vector<1x8x1x8xf32> to vector<8x1x8xf32>
    %c0_45 = arith.constant 0 : index
    %c0_46 = arith.constant 0 : index
    %c0_47 = arith.constant 0 : index
    %84 = vector.load %arg3[%c0_45, %c0_46, %c0_47] : memref<1x8x32xbf16, #tpu.memory_space<vmem>>, vector<1x8x32xbf16>
    %85 = vector.shape_cast %84 : vector<1x8x32xbf16> to vector<8x32xbf16>
    %86 = vector.shape_cast %85 : vector<8x32xbf16> to vector<1x8x32xbf16>
    %87 = vector.shape_cast %86 : vector<1x8x32xbf16> to vector<1x8x32xbf16>
    %88 = vector.broadcast %87 : vector<1x8x32xbf16> to vector<4x8x32xbf16>
    %89 = arith.truncf %79 : vector<8x32xf32> to vector<8x32xbf16>
    %90 = vector.shape_cast %89 : vector<8x32xbf16> to vector<1x8x32xbf16>
    %91 = vector.shape_cast %90 : vector<1x8x32xbf16> to vector<1x8x32xbf16>
    %92 = vector.broadcast %91 : vector<1x8x32xbf16> to vector<4x8x32xbf16>
    %c0_48 = arith.constant 0 : index
    %c0_49 = arith.constant 0 : index
    %c0_50 = arith.constant 0 : index
    %c0_51 = arith.constant 0 : index
    %93 = vector.load %arg9[%c0_48, %c0_49, %c0_50, %c0_51] : memref<1x4x32x8xbf16, #tpu.memory_space<vmem>>, vector<1x4x32x8xbf16>
    %94 = vector.shape_cast %93 : vector<1x4x32x8xbf16> to vector<4x32x8xbf16>
    %c0_52 = arith.constant 0 : index
    %c0_53 = arith.constant 0 : index
    %c0_54 = arith.constant 0 : index
    %c0_55 = arith.constant 0 : index
    %95 = vector.load %arg10[%c0_52, %c0_53, %c0_54, %c0_55] : memref<1x4x1x8xf32, #tpu.memory_space<vmem>>, vector<1x4x1x8xf32>
    %96 = vector.shape_cast %95 : vector<1x4x1x8xf32> to vector<4x1x8xf32>
    %cst_56 = arith.constant dense<0.000000e+00> : vector<4x8x8xf32>
    %97 = tpu.matmul %92, %94, %cst_56 {dimension_numbers = #tpu.dot_dimension_numbers<[2], [1], [1], [2], [0, 0, 0, 1, 1, 2], [0], [0]>} : vector<4x8x32xbf16>, vector<4x32x8xbf16>, vector<4x8x8xf32> -> vector<4x8x8xf32>
    %98 = vector.broadcast %96 : vector<4x1x8xf32> to vector<4x8x8xf32>
    %99 = arith.addf %97, %98 : vector<4x8x8xf32>
    %100 = vector.extract_strided_slice %81 {offsets = [0, 0, 0], sizes = [4, 32, 8], strides = [1, 1, 1]} : vector<8x32x8xbf16> to vector<4x32x8xbf16>
    %101 = vector.extract_strided_slice %83 {offsets = [0, 0, 0], sizes = [4, 1, 8], strides = [1, 1, 1]} : vector<8x1x8xf32> to vector<4x1x8xf32>
    %cst_57 = arith.constant dense<0.000000e+00> : vector<4x8x8xf32>
    %102 = tpu.matmul %88, %100, %cst_57 {dimension_numbers = #tpu.dot_dimension_numbers<[2], [1], [1], [2], [0, 0, 0, 1, 1, 2], [0], [0]>} : vector<4x8x32xbf16>, vector<4x32x8xbf16>, vector<4x8x8xf32> -> vector<4x8x8xf32>
    %103 = vector.broadcast %101 : vector<4x1x8xf32> to vector<4x8x8xf32>
    %104 = arith.addf %102, %103 : vector<4x8x8xf32>
    %105 = vector.extract_strided_slice %81 {offsets = [4, 0, 0], sizes = [4, 32, 8], strides = [1, 1, 1]} : vector<8x32x8xbf16> to vector<4x32x8xbf16>
    %106 = vector.extract_strided_slice %83 {offsets = [4, 0, 0], sizes = [4, 1, 8], strides = [1, 1, 1]} : vector<8x1x8xf32> to vector<4x1x8xf32>
    %cst_58 = arith.constant dense<0.000000e+00> : vector<4x8x8xf32>
    %107 = tpu.matmul %88, %105, %cst_58 {dimension_numbers = #tpu.dot_dimension_numbers<[2], [1], [1], [2], [0, 0, 0, 1, 1, 2], [0], [0]>} : vector<4x8x32xbf16>, vector<4x32x8xbf16>, vector<4x8x8xf32> -> vector<4x8x8xf32>
    %108 = vector.broadcast %106 : vector<4x1x8xf32> to vector<4x8x8xf32>
    %109 = arith.addf %107, %108 : vector<4x8x8xf32>
    %c0_59 = arith.constant 0 : index
    %c0_60 = arith.constant 0 : index
    %c0_61 = arith.constant 0 : index
    %c0_62 = arith.constant 0 : index
    %110 = vector.load %arg13[%c0_59, %c0_60, %c0_61, %c0_62] : memref<1x4x8x32xbf16, #tpu.memory_space<vmem>>, vector<1x4x8x32xbf16>
    %111 = vector.shape_cast %110 : vector<1x4x8x32xbf16> to vector<4x8x32xbf16>
    %c0_63 = arith.constant 0 : index
    %c0_64 = arith.constant 0 : index
    %c0_65 = arith.constant 0 : index
    %112 = vector.load %arg14[%c0_63, %c0_64, %c0_65] : memref<1x1x32xf32, #tpu.memory_space<vmem>>, vector<1x1x32xf32>
    %113 = vector.shape_cast %112 : vector<1x1x32xf32> to vector<1x32xf32>
    %c0_66 = arith.constant 0 : index
    %c0_67 = arith.constant 0 : index
    %c0_68 = arith.constant 0 : index
    %114 = vector.load %arg4[%c0_66, %c0_67, %c0_68] : memref<1x1x8xf32, #tpu.memory_space<vmem>>, vector<1x1x8xf32>
    %115 = vector.shape_cast %114 : vector<1x1x8xf32> to vector<1x8xf32>
    %116 = arith.truncf %99 : vector<4x8x8xf32> to vector<4x8x8xbf16>
    %117 = arith.truncf %104 : vector<4x8x8xf32> to vector<4x8x8xbf16>
    %cst_69 = arith.constant dense<0.000000e+00> : vector<4x8x8xf32>
    %118 = tpu.matmul %116, %117, %cst_69 {dimension_numbers = #tpu.dot_dimension_numbers<[2], [2], [1], [1], [0, 0, 0, 1, 1, 1], [0], [0]>} : vector<4x8x8xbf16>, vector<4x8x8xbf16>, vector<4x8x8xf32> -> vector<4x8x8xf32>
    %119 = vector.shape_cast %115 : vector<1x8xf32> to vector<1x1x8xf32>
    %120 = vector.broadcast %119 : vector<1x1x8xf32> to vector<4x8x8xf32>
    %121 = arith.addf %118, %120 : vector<4x8x8xf32>
    %cst_70 = arith.constant dense<0xFF800000> : vector<4x8xf32>
    %122 = vector.multi_reduction <maximumf>, %121, %cst_70 [2] : vector<4x8x8xf32> to vector<4x8xf32>
    %123 = vector.shape_cast %122 : vector<4x8xf32> to vector<4x8x1xf32>
    %124 = vector.broadcast %123 : vector<4x8x1xf32> to vector<4x8x8xf32>
    %125 = arith.subf %121, %124 : vector<4x8x8xf32>
    %126 = math.exp %125 : vector<4x8x8xf32>
    %cst_71 = arith.constant dense<0.000000e+00> : vector<4x8xf32>
    %127 = vector.multi_reduction <add>, %126, %cst_71 [2] : vector<4x8x8xf32> to vector<4x8xf32>
    %128 = vector.shape_cast %127 : vector<4x8xf32> to vector<4x8x1xf32>
    %129 = tpu.reciprocal %128 {approx = true} : vector<4x8x1xf32> -> vector<4x8x1xf32>
    %130 = vector.broadcast %129 : vector<4x8x1xf32> to vector<4x8x8xf32>
    %131 = arith.mulf %126, %130 : vector<4x8x8xf32>
    %132 = arith.truncf %131 : vector<4x8x8xf32> to vector<4x8x8xbf16>
    %133 = arith.truncf %109 : vector<4x8x8xf32> to vector<4x8x8xbf16>
    %cst_72 = arith.constant dense<0.000000e+00> : vector<4x8x8xf32>
    %134 = tpu.matmul %132, %133, %cst_72 {dimension_numbers = #tpu.dot_dimension_numbers<[2], [1], [1], [2], [0, 0, 0, 1, 1, 2], [0], [0]>} : vector<4x8x8xbf16>, vector<4x8x8xbf16>, vector<4x8x8xf32> -> vector<4x8x8xf32>
    %135 = arith.truncf %134 : vector<4x8x8xf32> to vector<4x8x8xbf16>
    %cst_73 = arith.constant dense<0.000000e+00> : vector<4x8x32xf32>
    %136 = tpu.matmul %135, %111, %cst_73 {dimension_numbers = #tpu.dot_dimension_numbers<[2], [1], [1], [2], [0, 0, 0, 1, 1, 2], [0], [0]>} : vector<4x8x8xbf16>, vector<4x8x32xbf16>, vector<4x8x32xf32> -> vector<4x8x32xf32>
    %cst_74 = arith.constant dense<0.000000e+00> : vector<8x32xf32>
    %137 = vector.multi_reduction <add>, %136, %cst_74 [0] : vector<4x8x32xf32> to vector<8x32xf32>
    %138 = vector.broadcast %113 : vector<1x32xf32> to vector<8x32xf32>
    %139 = arith.addf %137, %138 : vector<8x32xf32>
    %140 = arith.addf %79, %139 : vector<8x32xf32>
    %cst_75 = arith.constant dense<0.000000e+00> : vector<8xf32>
    %141 = vector.multi_reduction <add>, %140, %cst_75 [1] : vector<8x32xf32> to vector<8xf32>
    %142 = vector.shape_cast %141 : vector<8xf32> to vector<8x1xf32>
    %cst_76 = arith.constant 3.200000e+01 : f32
    %143 = vector.broadcast %cst_76 : f32 to vector<8x1xf32>
    %144 = arith.divf %142, %143 : vector<8x1xf32>
    %145 = vector.broadcast %144 : vector<8x1xf32> to vector<8x32xf32>
    %146 = arith.subf %140, %145 : vector<8x32xf32>
    %147 = arith.mulf %146, %146 : vector<8x32xf32>
    %cst_77 = arith.constant dense<0.000000e+00> : vector<8xf32>
    %148 = vector.multi_reduction <add>, %147, %cst_77 [1] : vector<8x32xf32> to vector<8xf32>
    %149 = vector.shape_cast %148 : vector<8xf32> to vector<8x1xf32>
    %cst_78 = arith.constant 3.200000e+01 : f32
    %150 = vector.broadcast %cst_78 : f32 to vector<8x1xf32>
    %151 = arith.divf %149, %150 : vector<8x1xf32>
    %152 = vector.broadcast %144 : vector<8x1xf32> to vector<8x32xf32>
    %153 = arith.subf %140, %152 : vector<8x32xf32>
    %cst_79 = arith.constant 9.99999974E-6 : f32
    %154 = vector.broadcast %cst_79 : f32 to vector<8x1xf32>
    %155 = arith.addf %151, %154 : vector<8x1xf32>
    %156 = math.rsqrt %155 : vector<8x1xf32>
    %157 = vector.broadcast %156 : vector<8x1xf32> to vector<8x32xf32>
    %158 = arith.mulf %153, %157 : vector<8x32xf32>
    %159 = vector.broadcast %6 : vector<1x32xf32> to vector<8x32xf32>
    %160 = arith.mulf %158, %159 : vector<8x32xf32>
    %161 = vector.broadcast %8 : vector<1x32xf32> to vector<8x32xf32>
    %162 = arith.addf %160, %161 : vector<8x32xf32>
    %163 = arith.truncf %162 : vector<8x32xf32> to vector<8x32xbf16>
    %c0_80 = arith.constant 0 : index
    %c0_81 = arith.constant 0 : index
    %c0_82 = arith.constant 0 : index
    %164 = vector.load %arg17[%c0_80, %c0_81, %c0_82] : memref<1x32x128xbf16, #tpu.memory_space<vmem>>, vector<1x32x128xbf16>
    %165 = vector.shape_cast %164 : vector<1x32x128xbf16> to vector<32x128xbf16>
    %cst_83 = arith.constant dense<0.000000e+00> : vector<8x128xf32>
    %166 = tpu.matmul %163, %165, %cst_83 {dimension_numbers = #tpu.dot_dimension_numbers<[1], [0], [0], [1], [0, 0, 1, 1], [], []>} : vector<8x32xbf16>, vector<32x128xbf16>, vector<8x128xf32> -> vector<8x128xf32>
    %c0_84 = arith.constant 0 : index
    %c0_85 = arith.constant 0 : index
    %c0_86 = arith.constant 0 : index
    %167 = vector.load %arg18[%c0_84, %c0_85, %c0_86] : memref<1x1x128xf32, #tpu.memory_space<vmem>>, vector<1x1x128xf32>
    %168 = vector.shape_cast %167 : vector<1x1x128xf32> to vector<1x128xf32>
    %169 = vector.broadcast %168 : vector<1x128xf32> to vector<8x128xf32>
    %170 = arith.addf %166, %169 : vector<8x128xf32>
    %cst_87 = arith.constant 0.000000e+00 : f32
    %171 = vector.broadcast %cst_87 : f32 to vector<8x128xf32>
    %172 = arith.maximumf %170, %171 : vector<8x128xf32>
    %173 = arith.truncf %172 : vector<8x128xf32> to vector<8x128xbf16>
    %c0_88 = arith.constant 0 : index
    %c0_89 = arith.constant 0 : index
    %c0_90 = arith.constant 0 : index
    %174 = vector.load %arg19[%c0_88, %c0_89, %c0_90] : memref<1x128x32xbf16, #tpu.memory_space<vmem>>, vector<1x128x32xbf16>
    %175 = vector.shape_cast %174 : vector<1x128x32xbf16> to vector<128x32xbf16>
    %cst_91 = arith.constant dense<0.000000e+00> : vector<8x32xf32>
    %176 = tpu.matmul %173, %175, %cst_91 {dimension_numbers = #tpu.dot_dimension_numbers<[1], [0], [0], [1], [0, 0, 1, 1], [], []>} : vector<8x128xbf16>, vector<128x32xbf16>, vector<8x32xf32> -> vector<8x32xf32>
    %c0_92 = arith.constant 0 : index
    %c0_93 = arith.constant 0 : index
    %c0_94 = arith.constant 0 : index
    %177 = vector.load %arg20[%c0_92, %c0_93, %c0_94] : memref<1x1x32xf32, #tpu.memory_space<vmem>>, vector<1x1x32xf32>
    %178 = vector.shape_cast %177 : vector<1x1x32xf32> to vector<1x32xf32>
    %179 = vector.broadcast %178 : vector<1x32xf32> to vector<8x32xf32>
    %180 = arith.addf %176, %179 : vector<8x32xf32>
    %181 = arith.addf %162, %180 : vector<8x32xf32>
    %cst_95 = arith.constant dense<0.000000e+00> : vector<8xf32>
    %182 = vector.multi_reduction <add>, %181, %cst_95 [1] : vector<8x32xf32> to vector<8xf32>
    %183 = vector.shape_cast %182 : vector<8xf32> to vector<8x1xf32>
    %cst_96 = arith.constant 3.200000e+01 : f32
    %184 = vector.broadcast %cst_96 : f32 to vector<8x1xf32>
    %185 = arith.divf %183, %184 : vector<8x1xf32>
    %186 = vector.broadcast %185 : vector<8x1xf32> to vector<8x32xf32>
    %187 = arith.subf %181, %186 : vector<8x32xf32>
    %188 = arith.mulf %187, %187 : vector<8x32xf32>
    %cst_97 = arith.constant dense<0.000000e+00> : vector<8xf32>
    %189 = vector.multi_reduction <add>, %188, %cst_97 [1] : vector<8x32xf32> to vector<8xf32>
    %190 = vector.shape_cast %189 : vector<8xf32> to vector<8x1xf32>
    %cst_98 = arith.constant 3.200000e+01 : f32
    %191 = vector.broadcast %cst_98 : f32 to vector<8x1xf32>
    %192 = arith.divf %190, %191 : vector<8x1xf32>
    %193 = vector.broadcast %185 : vector<8x1xf32> to vector<8x32xf32>
    %194 = arith.subf %181, %193 : vector<8x32xf32>
    %cst_99 = arith.constant 9.99999974E-6 : f32
    %195 = vector.broadcast %cst_99 : f32 to vector<8x1xf32>
    %196 = arith.addf %192, %195 : vector<8x1xf32>
    %197 = math.rsqrt %196 : vector<8x1xf32>
    %198 = vector.broadcast %197 : vector<8x1xf32> to vector<8x32xf32>
    %199 = arith.mulf %194, %198 : vector<8x32xf32>
    %200 = vector.broadcast %6 : vector<1x32xf32> to vector<8x32xf32>
    %201 = arith.mulf %199, %200 : vector<8x32xf32>
    %202 = vector.broadcast %8 : vector<1x32xf32> to vector<8x32xf32>
    %203 = arith.addf %201, %202 : vector<8x32xf32>
    %c0_100 = arith.constant 0 : index
    %c0_101 = arith.constant 0 : index
    %c0_102 = arith.constant 0 : index
    %204 = vector.load %arg21[%c0_100, %c0_101, %c0_102] : memref<1x8x32xf32, #tpu.memory_space<vmem>>, vector<1x8x32xf32>
    %205 = vector.shape_cast %204 : vector<1x8x32xf32> to vector<8x32xf32>
    %206 = vector.shape_cast %203 : vector<8x32xf32> to vector<1x8x32xf32>
    tpu.vector_store %arg21[%c0_100, %c0_101, %c0_102], %206 {strides = array<i32>} : memref<1x8x32xf32, #tpu.memory_space<vmem>>, vector<1x8x32xf32>,
    return
  }
  func.func @transform_0(%arg0: i32, %arg1: i32) -> (i32, i32, i32) {
    %c0_i32 = arith.constant 0 : i32
    %c0_i32_0 = arith.constant 0 : i32
    %c0_i32_1 = arith.constant 0 : i32
    return %arg0, %c0_i32, %c0_i32_0 : i32, i32, i32
  }
  func.func @transform_1(%arg0: i32, %arg1: i32) -> (i32, i32, i32) {
    %c0_i32 = arith.constant 0 : i32
    %c0_i32_0 = arith.constant 0 : i32
    %c0_i32_1 = arith.constant 0 : i32
    return %arg0, %c0_i32, %c0_i32_0 : i32, i32, i32
  }
  func.func @transform_2(%arg0: i32, %arg1: i32) -> (i32, i32, i32) {
    %c0_i32 = arith.constant 0 : i32
    %c0_i32_0 = arith.constant 0 : i32
    %c0_i32_1 = arith.constant 0 : i32
    return %arg0, %c0_i32, %c0_i32_0 : i32, i32, i32
  }
  func.func @transform_3(%arg0: i32, %arg1: i32) -> (i32, i32, i32, i32) {
    %c0_i32 = arith.constant 0 : i32
    %c0_i32_0 = arith.constant 0 : i32
    %c0_i32_1 = arith.constant 0 : i32
    %c0_i32_2 = arith.constant 0 : i32
    return %arg1, %c0_i32, %c0_i32_0, %c0_i32_1 : i32, i32, i32, i32
  }
  func.func @transform_4(%arg0: i32, %arg1: i32) -> (i32, i32, i32, i32) {
    %c0_i32 = arith.constant 0 : i32
    %c0_i32_0 = arith.constant 0 : i32
    %c0_i32_1 = arith.constant 0 : i32
    %c0_i32_2 = arith.constant 0 : i32
    return %arg1, %c0_i32, %c0_i32_0, %c0_i32_1 : i32, i32, i32, i32
  }
  func.func @transform_5(%arg0: i32, %arg1: i32) -> (i32, i32, i32, i32) {
    %c0_i32 = arith.constant 0 : i32
    %c0_i32_0 = arith.constant 0 : i32
    %c0_i32_1 = arith.constant 0 : i32
    %c0_i32_2 = arith.constant 0 : i32
    return %arg1, %c0_i32, %c0_i32_0, %c0_i32_1 : i32, i32, i32, i32
  }
  func.func @transform_6(%arg0: i32, %arg1: i32) -> (i32, i32, i32) {
    %c0_i32 = arith.constant 0 : i32
    %c0_i32_0 = arith.constant 0 : i32
    %c0_i32_1 = arith.constant 0 : i32
    return %arg1, %c0_i32, %c0_i32_0 : i32, i32, i32
  }
  func.func @transform_7(%arg0: i32, %arg1: i32) -> (i32, i32, i32, i32) {
    %c0_i32 = arith.constant 0 : i32
    %c0_i32_0 = arith.constant 0 : i32
    %c0_i32_1 = arith.constant 0 : i32
    %c0_i32_2 = arith.constant 0 : i32
    return %arg1, %c0_i32, %c0_i32_0, %c0_i32_1 : i32, i32, i32, i32
  }
  func.func @transform_8(%arg0: i32, %arg1: i32) -> (i32, i32, i32, i32) {
    %c0_i32 = arith.constant 0 : i32
    %c0_i32_0 = arith.constant 0 : i32
    %c0_i32_1 = arith.constant 0 : i32
    %c0_i32_2 = arith.constant 0 : i32
    return %arg1, %c0_i32, %c0_i32_0, %c0_i32_1 : i32, i32, i32, i32
  }
  func.func @transform_9(%arg0: i32, %arg1: i32) -> (i32, i32, i32, i32) {
    %c0_i32 = arith.constant 0 : i32
    %c0_i32_0 = arith.constant 0 : i32
    %c0_i32_1 = arith.constant 0 : i32
    %c0_i32_2 = arith.constant 0 : i32
    return %arg1, %c0_i32, %c0_i32_0, %c0_i32_1 : i32, i32, i32, i32
  }
  func.func @transform_10(%arg0: i32, %arg1: i32) -> (i32, i32, i32, i32) {
    %c0_i32 = arith.constant 0 : i32
    %c0_i32_0 = arith.constant 0 : i32
    %c0_i32_1 = arith.constant 0 : i32
    %c0_i32_2 = arith.constant 0 : i32
    return %arg1, %c0_i32, %c0_i32_0, %c0_i32_1 : i32, i32, i32, i32
  }
  func.func @transform_11(%arg0: i32, %arg1: i32) -> (i32, i32, i32, i32) {
    %c0_i32 = arith.constant 0 : i32
    %c0_i32_0 = arith.constant 0 : i32
    %c0_i32_1 = arith.constant 0 : i32
    %c0_i32_2 = arith.constant 0 : i32
    return %arg1, %c0_i32, %c0_i32_0, %c0_i32_1 : i32, i32, i32, i32
  }
  func.func @transform_12(%arg0: i32, %arg1: i32) -> (i32, i32, i32) {
    %c0_i32 = arith.constant 0 : i32
    %c0_i32_0 = arith.constant 0 : i32
    %c0_i32_1 = arith.constant 0 : i32
    return %arg1, %c0_i32, %c0_i32_0 : i32, i32, i32
  }
  func.func @transform_13(%arg0: i32, %arg1: i32) -> (i32, i32, i32) {
    %c0_i32 = arith.constant 0 : i32
    %c0_i32_0 = arith.constant 0 : i32
    %c0_i32_1 = arith.constant 0 : i32
    return %arg1, %c0_i32, %c0_i32_0 : i32, i32, i32
  }
  func.func @transform_14(%arg0: i32, %arg1: i32) -> (i32, i32, i32) {
    %c0_i32 = arith.constant 0 : i32
    %c0_i32_0 = arith.constant 0 : i32
    %c0_i32_1 = arith.constant 0 : i32
    return %arg1, %c0_i32, %c0_i32_0 : i32, i32, i32
  }
  func.func @transform_15(%arg0: i32, %arg1: i32) -> (i32, i32, i32) {
    %c0_i32 = arith.constant 0 : i32
    %c0_i32_0 = arith.constant 0 : i32
    %c0_i32_1 = arith.constant 0 : i32
    return %arg1, %c0_i32, %c0_i32_0 : i32, i32, i32
  }
  func.func @transform_16(%arg0: i32, %arg1: i32) -> (i32, i32, i32) {
    %c0_i32 = arith.constant 0 : i32
    %c0_i32_0 = arith.constant 0 : i32
    %c0_i32_1 = arith.constant 0 : i32
    return %arg1, %c0_i32, %c0_i32_0 : i32, i32, i32
  }
  func.func @transform_17(%arg0: i32, %arg1: i32) -> (i32, i32, i32) {
    %c0_i32 = arith.constant 0 : i32
    %c0_i32_0 = arith.constant 0 : i32
    %c0_i32_1 = arith.constant 0 : i32
    return %arg1, %c0_i32, %c0_i32_0 : i32, i32, i32
  }
  func.func @transform_18(%arg0: i32, %arg1: i32) -> (i32, i32, i32) {
    %c0_i32 = arith.constant 0 : i32
    %c0_i32_0 = arith.constant 0 : i32
    %c0_i32_1 = arith.constant 0 : i32
    return %arg1, %c0_i32, %c0_i32_0 : i32, i32, i32
  }
  func.func @transform_19(%arg0: i32, %arg1: i32) -> (i32, i32, i32) {
    %c0_i32 = arith.constant 0 : i32
    %c0_i32_0 = arith.constant 0 : i32
    %c0_i32_1 = arith.constant 0 : i32
    return %arg0, %c0_i32, %c0_i32_0 : i32, i32, i32
  }
}

</mosaic_0001>

<llo_original>
// kernel: transformer_decoder.1
$region0: #{transformer_decoder.1}
  #allocation0 [shape = 'u32[]', space=smem, size = 0x4, offset = 0x4, fixed_abs, tag = 'smem constant byte address 0x4 - core index']
  #allocation1 [shape = 'u32[144,128]{1,0:T(1,128)}', space=vmem, size = 0x12000, scoped, tag = 'internal scratch']
  %s0 = inlined_call_operand.vmem [shape: f32[2,8,32], index: 0, kind: input, shape index: {}]
  %s1 = inlined_call_operand.vmem [shape: bf16[2,8,32], index: 1, kind: input, shape index: {}]
  %s2 = inlined_call_operand.vmem [shape: f32[2,1,8], index: 2, kind: input, shape index: {}]
  %s3 = inlined_call_operand.vmem [shape: bf16[2,12,32,8], index: 3, kind: input, shape index: {}]
  %s4 = inlined_call_operand.vmem [shape: f32[2,12,1,8], index: 4, kind: input, shape index: {}]
  %s5 = inlined_call_operand.vmem [shape: bf16[2,4,8,32], index: 5, kind: input, shape index: {}]
  %s6 = inlined_call_operand.vmem [shape: f32[2,1,32], index: 6, kind: input, shape index: {}]
  %s7 = inlined_call_operand.vmem [shape: bf16[2,4,32,8], index: 7, kind: input, shape index: {}]
  %s8 = inlined_call_operand.vmem [shape: f32[2,4,1,8], index: 8, kind: input, shape index: {}]
  %s9 = inlined_call_operand.vmem [shape: bf16[2,8,32,8], index: 9, kind: input, shape index: {}]
  %s10 = inlined_call_operand.vmem [shape: f32[2,8,1,8], index: 10, kind: input, shape index: {}]
  %s11 = inlined_call_operand.vmem [shape: bf16[2,4,8,32], index: 11, kind: input, shape index: {}]
  %s12 = inlined_call_operand.vmem [shape: f32[2,1,32], index: 12, kind: input, shape index: {}]
  %s13 = inlined_call_operand.vmem [shape: f32[2,1,32], index: 13, kind: input, shape index: {}]
  %s14 = inlined_call_operand.vmem [shape: f32[2,1,32], index: 14, kind: input, shape index: {}]
  %s15 = inlined_call_operand.vmem [shape: bf16[2,32,128], index: 15, kind: input, shape index: {}]
  %s16 = inlined_call_operand.vmem [shape: f32[2,1,128], index: 16, kind: input, shape index: {}]
  %s17 = inlined_call_operand.vmem [shape: bf16[2,128,32], index: 17, kind: input, shape index: {}]
  %s18 = inlined_call_operand.vmem [shape: f32[2,1,32], index: 18, kind: input, shape index: {}]
  %s19 = inlined_call_operand.hbm [shape: f32[2,8,32], index: 19, kind: output, shape index: {}]
  %s20 = sld [smem:[#allocation0]]
  $region113: #{transformer_decoder.1} parent=0
    _
  %s22 = ssub.s32 1, %s20
  %s23 = scalar_select 0, %s22, %s20
  $region1: #{transformer_decoder.1} parent=0
    #allocation2 [shape = 'u8[8192]{0}', space=vmem, size = 0x2000, scoped, tag = 'output window, operand 0']
    #allocation3 [shape = 's32[2]{0}', space=sflag, size = 0x8, scoped, tag = 'scoped memory for transformer_decoder.1']
    %24 = vsyncpa [#allocation3], 0
    %s25 = scalar_lea.sflag [#allocation3], 1
    %26 = vsyncpa %s25, 0
    loop: start=0, step=1, limit=6
    $region2: #{transformer_decoder.1} parent=1 // loop_pre_header
      _
    $region3: #{transformer_decoder.1} parent=1 // loop_header
      %s28 = sphi 0, %s32
      %p29 = scmp.ge.s32.totalorder %s28, 6
      %s35 = sphi 0, %s47
      %s36 = sphi 0, %s43
      %s37 = sphi 0, %s35
      %s38 = sphi 0, %s36
      %s39 = sphi 0, %s37
      %s40 = sphi 0, %s38
      %s50 = sphi 0, %s52
      %s53 = sphi 0, %s50
      %s54 = sphi 0, %s53
      %s70 = sphi 0, %s54
      %s76 = sphi 0, %s78
      %s79 = sphi 0, %s76
      %s80 = sphi 0, %s79
      %s96 = sphi 0, %s80
      %s102 = sphi 0, %s104
      %s105 = sphi 0, %s102
      %s106 = sphi 0, %s105
      %s122 = sphi 0, %s106
      %s128 = sphi 0, %s130
      %s131 = sphi 0, %s128
      %s132 = sphi 0, %s131
      %s148 = sphi 0, %s132
      %s154 = sphi 0, %s156
      %s157 = sphi 0, %s154
      %s158 = sphi 0, %s157
      %s174 = sphi 0, %s158
      %s180 = sphi 0, %s182
      %s183 = sphi 0, %s180
      %s184 = sphi 0, %s183
      %s200 = sphi 0, %s184
      %s206 = sphi 0, %s208
      %s209 = sphi 0, %s206
      %s210 = sphi 0, %s209
      %s226 = sphi 0, %s210
      %s232 = sphi 0, %s234
      %s235 = sphi 0, %s232
      %s236 = sphi 0, %s235
      %s252 = sphi 0, %s236
      %s258 = sphi 0, %s260
      %s261 = sphi 0, %s258
      %s262 = sphi 0, %s261
      %s278 = sphi 0, %s262
      %s284 = sphi 0, %s286
      %s287 = sphi 0, %s284
      %s288 = sphi 0, %s287
      %s304 = sphi 0, %s288
      %s310 = sphi 0, %s312
      %s313 = sphi 0, %s310
      %s314 = sphi 0, %s313
      %s330 = sphi 0, %s314
      %s336 = sphi 0, %s338
      %s339 = sphi 0, %s336
      %s340 = sphi 0, %s339
      %s356 = sphi 0, %s340
      %s362 = sphi 0, %s364
      %s365 = sphi 0, %s362
      %s366 = sphi 0, %s365
      %s382 = sphi 0, %s366
      %s388 = sphi 0, %s390
      %s391 = sphi 0, %s388
      %s392 = sphi 0, %s391
      %s408 = sphi 0, %s392
      %s414 = sphi 0, %s416
      %s417 = sphi 0, %s414
      %s418 = sphi 0, %s417
      %s434 = sphi 0, %s418
      %s440 = sphi 0, %s442
      %s443 = sphi 0, %s440
      %s444 = sphi 0, %s443
      %s460 = sphi 0, %s444
      %s466 = sphi 0, %s468
      %s469 = sphi 0, %s466
      %s470 = sphi 0, %s469
      %s486 = sphi 0, %s470
      %s492 = sphi 0, %s494
      %s495 = sphi 0, %s492
      %s496 = sphi 0, %s495
      %s512 = sphi 0, %s496
      %s518 = sphi 0, %s520
      %s521 = sphi 0, %s518
      %s522 = sphi 0, %s521
      %s538 = sphi 0, %s522
      %s544 = sphi 0, %s546
      %s547 = sphi 0, %s544
      %s548 = sphi 0, %s547
      %s564 = sphi 0, %s548
    $region4: #{transformer_decoder.1} parent=1 // loop_header_branch
      %31 = sbr.rel (%p29) target = $region8
    $region5: #{transformer_decoder.1} parent=1 // loop_body
      %s33 = ssub.s32 %s28, 1
      %s34 = ssub.s32 %s28, 2
      %s41 = sadd.s32 1, %s36
      %p42 = scmp.ge.s32.totalorder %s41, 2
      %s43 = scalar_select %p42, 0, %s41
      %s44 = sadd.s32 1, %s35
      %s45 = scalar_select %p42, %s44, %s35
      %p46 = scmp.ge.s32.totalorder %s45, 2
      %s47 = scalar_select %p46, 0, %s45
      %s48 = ssub.s32 %s35, %s47
      %p49 = scmp.eq.s32.totalorder %s48, 0
      %s51 = sadd.s32 %s50, 1
      %s52 = scalar_select %p49, %s50, %s51
      %p55 = pneg %p49
      %p56 = scmp.eq.s32.totalorder %s28, 3
      %p57 = por %p55, %p56
      %p58 = scmp.ne.s32.totalorder %s50, %s53
      %p59 = scmp.eq.s32.totalorder %s28, 0
      %p60 = por %p58, %p59
      %p61 = scmp.ne.s32.totalorder %s50, %s53
      %p62 = scmp.eq.s32.totalorder %s33, 3
      %p63 = por %p61, %p62
      %p64 = scmp.ne.s32.totalorder %s53, %s54
      %p65 = scmp.eq.s32.totalorder %s33, 0
      %p66 = por %p64, %p65
      %p67 = scmp.ne.s32.totalorder %s53, %s54
      %p68 = scmp.eq.s32.totalorder %s34, 3
      %p69 = por %p67, %p68
      %p71 = scmp.ne.s32.totalorder %s54, %s70
      %p72 = scmp.eq.s32.totalorder %s34, 0
      %p73 = por %p71, %p72
      %s74 = ssub.s32 %s35, %s47
      %p75 = scmp.eq.s32.totalorder %s74, 0
      %s77 = sadd.s32 %s76, 1
      %s78 = scalar_select %p75, %s76, %s77
      %p81 = pneg %p75
      %p82 = scmp.eq.s32.totalorder %s28, 3
      %p83 = por %p81, %p82
      %p84 = scmp.ne.s32.totalorder %s76, %s79
      %p85 = scmp.eq.s32.totalorder %s28, 0
      %p86 = por %p84, %p85
      %p87 = scmp.ne.s32.totalorder %s76, %s79
      %p88 = scmp.eq.s32.totalorder %s33, 3
      %p89 = por %p87, %p88
      %p90 = scmp.ne.s32.totalorder %s79, %s80
      %p91 = scmp.eq.s32.totalorder %s33, 0
      %p92 = por %p90, %p91
      %p93 = scmp.ne.s32.totalorder %s79, %s80
      %p94 = scmp.eq.s32.totalorder %s34, 3
      %p95 = por %p93, %p94
      %p97 = scmp.ne.s32.totalorder %s80, %s96
      %p98 = scmp.eq.s32.totalorder %s34, 0
      %p99 = por %p97, %p98
      %s100 = ssub.s32 %s35, %s47
      %p101 = scmp.eq.s32.totalorder %s100, 0
      %s103 = sadd.s32 %s102, 1
      %s104 = scalar_select %p101, %s102, %s103
      %p107 = pneg %p101
      %p108 = scmp.eq.s32.totalorder %s28, 3
      %p109 = por %p107, %p108
      %p110 = scmp.ne.s32.totalorder %s102, %s105
      %p111 = scmp.eq.s32.totalorder %s28, 0
      %p112 = por %p110, %p111
      %p113 = scmp.ne.s32.totalorder %s102, %s105
      %p114 = scmp.eq.s32.totalorder %s33, 3
      %p115 = por %p113, %p114
      %p116 = scmp.ne.s32.totalorder %s105, %s106
      %p117 = scmp.eq.s32.totalorder %s33, 0
      %p118 = por %p116, %p117
      %p119 = scmp.ne.s32.totalorder %s105, %s106
      %p120 = scmp.eq.s32.totalorder %s34, 3
      %p121 = por %p119, %p120
      %p123 = scmp.ne.s32.totalorder %s106, %s122
      %p124 = scmp.eq.s32.totalorder %s34, 0
      %p125 = por %p123, %p124
      %s126 = ssub.s32 %s36, %s43
      %p127 = scmp.eq.s32.totalorder %s126, 0
      %s129 = sadd.s32 %s128, 1
      %s130 = scalar_select %p127, %s128, %s129
      %p133 = pneg %p127
      %p134 = scmp.eq.s32.totalorder %s28, 3
      %p135 = por %p133, %p134
      %p136 = scmp.ne.s32.totalorder %s128, %s131
      %p137 = scmp.eq.s32.totalorder %s28, 0
      %p138 = por %p136, %p137
      %p139 = scmp.ne.s32.totalorder %s128, %s131
      %p140 = scmp.eq.s32.totalorder %s33, 3
      %p141 = por %p139, %p140
      %p142 = scmp.ne.s32.totalorder %s131, %s132
      %p143 = scmp.eq.s32.totalorder %s33, 0
      %p144 = por %p142, %p143
      %p145 = scmp.ne.s32.totalorder %s131, %s132
      %p146 = scmp.eq.s32.totalorder %s34, 3
      %p147 = por %p145, %p146
      %p149 = scmp.ne.s32.totalorder %s132, %s148
      %p150 = scmp.eq.s32.totalorder %s34, 0
      %p151 = por %p149, %p150
      %s152 = ssub.s32 %s36, %s43
      %p153 = scmp.eq.s32.totalorder %s152, 0
      %s155 = sadd.s32 %s154, 1
      %s156 = scalar_select %p153, %s154, %s155
      %p159 = pneg %p153
      %p160 = scmp.eq.s32.totalorder %s28, 3
      %p161 = por %p159, %p160
      %p162 = scmp.ne.s32.totalorder %s154, %s157
      %p163 = scmp.eq.s32.totalorder %s28, 0
      %p164 = por %p162, %p163
      %p165 = scmp.ne.s32.totalorder %s154, %s157
      %p166 = scmp.eq.s32.totalorder %s33, 3
      %p167 = por %p165, %p166
      %p168 = scmp.ne.s32.totalorder %s157, %s158
      %p169 = scmp.eq.s32.totalorder %s33, 0
      %p170 = por %p168, %p169
      %p171 = scmp.ne.s32.totalorder %s157, %s158
      %p172 = scmp.eq.s32.totalorder %s34, 3
      %p173 = por %p171, %p172
      %p175 = scmp.ne.s32.totalorder %s158, %s174
      %p176 = scmp.eq.s32.totalorder %s34, 0
      %p177 = por %p175, %p176
      %s178 = ssub.s32 %s36, %s43
      %p179 = scmp.eq.s32.totalorder %s178, 0
      %s181 = sadd.s32 %s180, 1
      %s182 = scalar_select %p179, %s180, %s181
      %p185 = pneg %p179
      %p186 = scmp.eq.s32.totalorder %s28, 3
      %p187 = por %p185, %p186
      %p188 = scmp.ne.s32.totalorder %s180, %s183
      %p189 = scmp.eq.s32.totalorder %s28, 0
      %p190 = por %p188, %p189
      %p191 = scmp.ne.s32.totalorder %s180, %s183
      %p192 = scmp.eq.s32.totalorder %s33, 3
      %p193 = por %p191, %p192
      %p194 = scmp.ne.s32.totalorder %s183, %s184
      %p195 = scmp.eq.s32.totalorder %s33, 0
      %p196 = por %p194, %p195
      %p197 = scmp.ne.s32.totalorder %s183, %s184
      %p198 = scmp.eq.s32.totalorder %s34, 3
      %p199 = por %p197, %p198
      %p201 = scmp.ne.s32.totalorder %s184, %s200
      %p202 = scmp.eq.s32.totalorder %s34, 0
      %p203 = por %p201, %p202
      %s204 = ssub.s32 %s36, %s43
      %p205 = scmp.eq.s32.totalorder %s204, 0
      %s207 = sadd.s32 %s206, 1
      %s208 = scalar_select %p205, %s206, %s207
      %p211 = pneg %p205
      %p212 = scmp.eq.s32.totalorder %s28, 3
      %p213 = por %p211, %p212
      %p214 = scmp.ne.s32.totalorder %s206, %s209
      %p215 = scmp.eq.s32.totalorder %s28, 0
      %p216 = por %p214, %p215
      %p217 = scmp.ne.s32.totalorder %s206, %s209
      %p218 = scmp.eq.s32.totalorder %s33, 3
      %p219 = por %p217, %p218
      %p220 = scmp.ne.s32.totalorder %s209, %s210
      %p221 = scmp.eq.s32.totalorder %s33, 0
      %p222 = por %p220, %p221
      %p223 = scmp.ne.s32.totalorder %s209, %s210
      %p224 = scmp.eq.s32.totalorder %s34, 3
      %p225 = por %p223, %p224
      %p227 = scmp.ne.s32.totalorder %s210, %s226
      %p228 = scmp.eq.s32.totalorder %s34, 0
      %p229 = por %p227, %p228
      %s230 = ssub.s32 %s36, %s43
      %p231 = scmp.eq.s32.totalorder %s230, 0
      %s233 = sadd.s32 %s232, 1
      %s234 = scalar_select %p231, %s232, %s233
      %p237 = pneg %p231
      %p238 = scmp.eq.s32.totalorder %s28, 3
      %p239 = por %p237, %p238
      %p240 = scmp.ne.s32.totalorder %s232, %s235
      %p241 = scmp.eq.s32.totalorder %s28, 0
      %p242 = por %p240, %p241
      %p243 = scmp.ne.s32.totalorder %s232, %s235
      %p244 = scmp.eq.s32.totalorder %s33, 3
      %p245 = por %p243, %p244
      %p246 = scmp.ne.s32.totalorder %s235, %s236
      %p247 = scmp.eq.s32.totalorder %s33, 0
      %p248 = por %p246, %p247
      %p249 = scmp.ne.s32.totalorder %s235, %s236
      %p250 = scmp.eq.s32.totalorder %s34, 3
      %p251 = por %p249, %p250
      %p253 = scmp.ne.s32.totalorder %s236, %s252
      %p254 = scmp.eq.s32.totalorder %s34, 0
      %p255 = por %p253, %p254
      %s256 = ssub.s32 %s36, %s43
      %p257 = scmp.eq.s32.totalorder %s256, 0
      %s259 = sadd.s32 %s258, 1
      %s260 = scalar_select %p257, %s258, %s259
      %p263 = pneg %p257
      %p264 = scmp.eq.s32.totalorder %s28, 3
      %p265 = por %p263, %p264
      %p266 = scmp.ne.s32.totalorder %s258, %s261
      %p267 = scmp.eq.s32.totalorder %s28, 0
      %p268 = por %p266, %p267
      %p269 = scmp.ne.s32.totalorder %s258, %s261
      %p270 = scmp.eq.s32.totalorder %s33, 3
      %p271 = por %p269, %p270
      %p272 = scmp.ne.s32.totalorder %s261, %s262
      %p273 = scmp.eq.s32.totalorder %s33, 0
      %p274 = por %p272, %p273
      %p275 = scmp.ne.s32.totalorder %s261, %s262
      %p276 = scmp.eq.s32.totalorder %s34, 3
      %p277 = por %p275, %p276
      %p279 = scmp.ne.s32.totalorder %s262, %s278
      %p280 = scmp.eq.s32.totalorder %s34, 0
      %p281 = por %p279, %p280
      %s282 = ssub.s32 %s36, %s43
      %p283 = scmp.eq.s32.totalorder %s282, 0
      %s285 = sadd.s32 %s284, 1
      %s286 = scalar_select %p283, %s284, %s285
      %p289 = pneg %p283
      %p290 = scmp.eq.s32.totalorder %s28, 3
      %p291 = por %p289, %p290
      %p292 = scmp.ne.s32.totalorder %s284, %s287
      %p293 = scmp.eq.s32.totalorder %s28, 0
      %p294 = por %p292, %p293
      %p295 = scmp.ne.s32.totalorder %s284, %s287
      %p296 = scmp.eq.s32.totalorder %s33, 3
      %p297 = por %p295, %p296
      %p298 = scmp.ne.s32.totalorder %s287, %s288
      %p299 = scmp.eq.s32.totalorder %s33, 0
      %p300 = por %p298, %p299
      %p301 = scmp.ne.s32.totalorder %s287, %s288
      %p302 = scmp.eq.s32.totalorder %s34, 3
      %p303 = por %p301, %p302
      %p305 = scmp.ne.s32.totalorder %s288, %s304
      %p306 = scmp.eq.s32.totalorder %s34, 0
      %p307 = por %p305, %p306
      %s308 = ssub.s32 %s36, %s43
      %p309 = scmp.eq.s32.totalorder %s308, 0
      %s311 = sadd.s32 %s310, 1
      %s312 = scalar_select %p309, %s310, %s311
      %p315 = pneg %p309
      %p316 = scmp.eq.s32.totalorder %s28, 3
      %p317 = por %p315, %p316
      %p318 = scmp.ne.s32.totalorder %s310, %s313
      %p319 = scmp.eq.s32.totalorder %s28, 0
      %p320 = por %p318, %p319
      %p321 = scmp.ne.s32.totalorder %s310, %s313
      %p322 = scmp.eq.s32.totalorder %s33, 3
      %p323 = por %p321, %p322
      %p324 = scmp.ne.s32.totalorder %s313, %s314
      %p325 = scmp.eq.s32.totalorder %s33, 0
      %p326 = por %p324, %p325
      %p327 = scmp.ne.s32.totalorder %s313, %s314
      %p328 = scmp.eq.s32.totalorder %s34, 3
      %p329 = por %p327, %p328
      %p331 = scmp.ne.s32.totalorder %s314, %s330
      %p332 = scmp.eq.s32.totalorder %s34, 0
      %p333 = por %p331, %p332
      %s334 = ssub.s32 %s36, %s43
      %p335 = scmp.eq.s32.totalorder %s334, 0
      %s337 = sadd.s32 %s336, 1
      %s338 = scalar_select %p335, %s336, %s337
      %p341 = pneg %p335
      %p342 = scmp.eq.s32.totalorder %s28, 3
      %p343 = por %p341, %p342
      %p344 = scmp.ne.s32.totalorder %s336, %s339
      %p345 = scmp.eq.s32.totalorder %s28, 0
      %p346 = por %p344, %p345
      %p347 = scmp.ne.s32.totalorder %s336, %s339
      %p348 = scmp.eq.s32.totalorder %s33, 3
      %p349 = por %p347, %p348
      %p350 = scmp.ne.s32.totalorder %s339, %s340
      %p351 = scmp.eq.s32.totalorder %s33, 0
      %p352 = por %p350, %p351
      %p353 = scmp.ne.s32.totalorder %s339, %s340
      %p354 = scmp.eq.s32.totalorder %s34, 3
      %p355 = por %p353, %p354
      %p357 = scmp.ne.s32.totalorder %s340, %s356
      %p358 = scmp.eq.s32.totalorder %s34, 0
      %p359 = por %p357, %p358
      %s360 = ssub.s32 %s36, %s43
      %p361 = scmp.eq.s32.totalorder %s360, 0
      %s363 = sadd.s32 %s362, 1
      %s364 = scalar_select %p361, %s362, %s363
      %p367 = pneg %p361
      %p368 = scmp.eq.s32.totalorder %s28, 3
      %p369 = por %p367, %p368
      %p370 = scmp.ne.s32.totalorder %s362, %s365
      %p371 = scmp.eq.s32.totalorder %s28, 0
      %p372 = por %p370, %p371
      %p373 = scmp.ne.s32.totalorder %s362, %s365
      %p374 = scmp.eq.s32.totalorder %s33, 3
      %p375 = por %p373, %p374
      %p376 = scmp.ne.s32.totalorder %s365, %s366
      %p377 = scmp.eq.s32.totalorder %s33, 0
      %p378 = por %p376, %p377
      %p379 = scmp.ne.s32.totalorder %s365, %s366
      %p380 = scmp.eq.s32.totalorder %s34, 3
      %p381 = por %p379, %p380
      %p383 = scmp.ne.s32.totalorder %s366, %s382
      %p384 = scmp.eq.s32.totalorder %s34, 0
      %p385 = por %p383, %p384
      %s386 = ssub.s32 %s36, %s43
      %p387 = scmp.eq.s32.totalorder %s386, 0
      %s389 = sadd.s32 %s388, 1
      %s390 = scalar_select %p387, %s388, %s389
      %p393 = pneg %p387
      %p394 = scmp.eq.s32.totalorder %s28, 3
      %p395 = por %p393, %p394
      %p396 = scmp.ne.s32.totalorder %s388, %s391
      %p397 = scmp.eq.s32.totalorder %s28, 0
      %p398 = por %p396, %p397
      %p399 = scmp.ne.s32.totalorder %s388, %s391
      %p400 = scmp.eq.s32.totalorder %s33, 3
      %p401 = por %p399, %p400
      %p402 = scmp.ne.s32.totalorder %s391, %s392
      %p403 = scmp.eq.s32.totalorder %s33, 0
      %p404 = por %p402, %p403
      %p405 = scmp.ne.s32.totalorder %s391, %s392
      %p406 = scmp.eq.s32.totalorder %s34, 3
      %p407 = por %p405, %p406
      %p409 = scmp.ne.s32.totalorder %s392, %s408
      %p410 = scmp.eq.s32.totalorder %s34, 0
      %p411 = por %p409, %p410
      %s412 = ssub.s32 %s36, %s43
      %p413 = scmp.eq.s32.totalorder %s412, 0
      %s415 = sadd.s32 %s414, 1
      %s416 = scalar_select %p413, %s414, %s415
      %p419 = pneg %p413
      %p420 = scmp.eq.s32.totalorder %s28, 3
      %p421 = por %p419, %p420
      %p422 = scmp.ne.s32.totalorder %s414, %s417
      %p423 = scmp.eq.s32.totalorder %s28, 0
      %p424 = por %p422, %p423
      %p425 = scmp.ne.s32.totalorder %s414, %s417
      %p426 = scmp.eq.s32.totalorder %s33, 3
      %p427 = por %p425, %p426
      %p428 = scmp.ne.s32.totalorder %s417, %s418
      %p429 = scmp.eq.s32.totalorder %s33, 0
      %p430 = por %p428, %p429
      %p431 = scmp.ne.s32.totalorder %s417, %s418
      %p432 = scmp.eq.s32.totalorder %s34, 3
      %p433 = por %p431, %p432
      %p435 = scmp.ne.s32.totalorder %s418, %s434
      %p436 = scmp.eq.s32.totalorder %s34, 0
      %p437 = por %p435, %p436
      %s438 = ssub.s32 %s36, %s43
      %p439 = scmp.eq.s32.totalorder %s438, 0
      %s441 = sadd.s32 %s440, 1
      %s442 = scalar_select %p439, %s440, %s441
      %p445 = pneg %p439
      %p446 = scmp.eq.s32.totalorder %s28, 3
      %p447 = por %p445, %p446
      %p448 = scmp.ne.s32.totalorder %s440, %s443
      %p449 = scmp.eq.s32.totalorder %s28, 0
      %p450 = por %p448, %p449
      %p451 = scmp.ne.s32.totalorder %s440, %s443
      %p452 = scmp.eq.s32.totalorder %s33, 3
      %p453 = por %p451, %p452
      %p454 = scmp.ne.s32.totalorder %s443, %s444
      %p455 = scmp.eq.s32.totalorder %s33, 0
      %p456 = por %p454, %p455
      %p457 = scmp.ne.s32.totalorder %s443, %s444
      %p458 = scmp.eq.s32.totalorder %s34, 3
      %p459 = por %p457, %p458
      %p461 = scmp.ne.s32.totalorder %s444, %s460
      %p462 = scmp.eq.s32.totalorder %s34, 0
      %p463 = por %p461, %p462
      %s464 = ssub.s32 %s36, %s43
      %p465 = scmp.eq.s32.totalorder %s464, 0
      %s467 = sadd.s32 %s466, 1
      %s468 = scalar_select %p465, %s466, %s467
      %p471 = pneg %p465
      %p472 = scmp.eq.s32.totalorder %s28, 3
      %p473 = por %p471, %p472
      %p474 = scmp.ne.s32.totalorder %s466, %s469
      %p475 = scmp.eq.s32.totalorder %s28, 0
      %p476 = por %p474, %p475
      %p477 = scmp.ne.s32.totalorder %s466, %s469
      %p478 = scmp.eq.s32.totalorder %s33, 3
      %p479 = por %p477, %p478
      %p480 = scmp.ne.s32.totalorder %s469, %s470
      %p481 = scmp.eq.s32.totalorder %s33, 0
      %p482 = por %p480, %p481
      %p483 = scmp.ne.s32.totalorder %s469, %s470
      %p484 = scmp.eq.s32.totalorder %s34, 3
      %p485 = por %p483, %p484
      %p487 = scmp.ne.s32.totalorder %s470, %s486
      %p488 = scmp.eq.s32.totalorder %s34, 0
      %p489 = por %p487, %p488
      %s490 = ssub.s32 %s36, %s43
      %p491 = scmp.eq.s32.totalorder %s490, 0
      %s493 = sadd.s32 %s492, 1
      %s494 = scalar_select %p491, %s492, %s493
      %p497 = pneg %p491
      %p498 = scmp.eq.s32.totalorder %s28, 3
      %p499 = por %p497, %p498
      %p500 = scmp.ne.s32.totalorder %s492, %s495
      %p501 = scmp.eq.s32.totalorder %s28, 0
      %p502 = por %p500, %p501
      %p503 = scmp.ne.s32.totalorder %s492, %s495
      %p504 = scmp.eq.s32.totalorder %s33, 3
      %p505 = por %p503, %p504
      %p506 = scmp.ne.s32.totalorder %s495, %s496
      %p507 = scmp.eq.s32.totalorder %s33, 0
      %p508 = por %p506, %p507
      %p509 = scmp.ne.s32.totalorder %s495, %s496
      %p510 = scmp.eq.s32.totalorder %s34, 3
      %p511 = por %p509, %p510
      %p513 = scmp.ne.s32.totalorder %s496, %s512
      %p514 = scmp.eq.s32.totalorder %s34, 0
      %p515 = por %p513, %p514
      %s516 = ssub.s32 %s36, %s43
      %p517 = scmp.eq.s32.totalorder %s516, 0
      %s519 = sadd.s32 %s518, 1
      %s520 = scalar_select %p517, %s518, %s519
      %p523 = pneg %p517
      %p524 = scmp.eq.s32.totalorder %s28, 3
      %p525 = por %p523, %p524
      %p526 = scmp.ne.s32.totalorder %s518, %s521
      %p527 = scmp.eq.s32.totalorder %s28, 0
      %p528 = por %p526, %p527
      %p529 = scmp.ne.s32.totalorder %s518, %s521
      %p530 = scmp.eq.s32.totalorder %s33, 3
      %p531 = por %p529, %p530
      %p532 = scmp.ne.s32.totalorder %s521, %s522
      %p533 = scmp.eq.s32.totalorder %s33, 0
      %p534 = por %p532, %p533
      %p535 = scmp.ne.s32.totalorder %s521, %s522
      %p536 = scmp.eq.s32.totalorder %s34, 3
      %p537 = por %p535, %p536
      %p539 = scmp.ne.s32.totalorder %s522, %s538
      %p540 = scmp.eq.s32.totalorder %s34, 0
      %p541 = por %p539, %p540
      %s542 = ssub.s32 %s35, %s47
      %p543 = scmp.eq.s32.totalorder %s542, 0
      %s545 = sadd.s32 %s544, 1
      %s546 = scalar_select %p543, %s544, %s545
      %p549 = pneg %p543
      %p550 = scmp.eq.s32.totalorder %s28, 3
      %p551 = por %p549, %p550
      %p552 = scmp.ne.s32.totalorder %s544, %s547
      %p553 = scmp.eq.s32.totalorder %s28, 0
      %p554 = por %p552, %p553
      %p555 = scmp.ne.s32.totalorder %s544, %s547
      %p556 = scmp.eq.s32.totalorder %s33, 3
      %p557 = por %p555, %p556
      %p558 = scmp.ne.s32.totalorder %s547, %s548
      %p559 = scmp.eq.s32.totalorder %s33, 0
      %p560 = por %p558, %p559
      %p561 = scmp.ne.s32.totalorder %s547, %s548
      %p562 = scmp.eq.s32.totalorder %s34, 3
      %p563 = por %p561, %p562
      %p565 = scmp.ne.s32.totalorder %s548, %s564
      %p566 = scmp.eq.s32.totalorder %s34, 0
      %p567 = por %p565, %p566
      %p568 = scmp.le.s32.totalorder 1, %s28
      %p569 = scmp.lt.s32.totalorder %s28, 5
      %p570 = pnand %p568, %p569
      %p571 = pneg %p570
      // Predicated region
      $region9: #{transformer_decoder.1} parent=5 // pred_check
        _
      $region10: #{transformer_decoder.1} parent=5 // pred_check_branch
        %573 = sbr.rel (%p570) target = $region12
      $region11: #{transformer_decoder.1} parent=5 // pred_region
        %s574 = ssub.s32 %s28, 1
      $region12: #{transformer_decoder.1} parent=5 // pred_fallthru
        _
      %p575 = scmp.lt.s32.totalorder %s28, 4
      // Predicated region
      $region13: #{transformer_decoder.1} parent=5 // pred_check
        %p576 = pneg %p575
      $region14: #{transformer_decoder.1} parent=5 // pred_check_branch
        %578 = sbr.rel (%p576) target = $region16
      $region15: #{transformer_decoder.1} parent=5 // pred_region
        // Predicated region
        $region17: #{transformer_decoder.1} parent=15 // pred_check
          %p579 = pneg %p60
        $region18: #{transformer_decoder.1} parent=15 // pred_check_branch
          %581 = sbr.rel (%p579) target = $region20
        $region19: #{transformer_decoder.1} parent=15 // pred_region
          %p582 = scmp.lt.s32.totalorder %s35, 1
          %s583 = scalar_select %p582, %s35, 1
          %s584 = smul.addr %s583, 8
          %s585 = scalar_lea.vmem %s0, %s584
        $region20: #{transformer_decoder.1} parent=15 // pred_fallthru
          _
        // Predicated region
        $region21: #{transformer_decoder.1} parent=15 // pred_check
          %p586 = pneg %p86
        $region22: #{transformer_decoder.1} parent=15 // pred_check_branch
          %588 = sbr.rel (%p586) target = $region24
        $region23: #{transformer_decoder.1} parent=15 // pred_region
          %p589 = scmp.lt.s32.totalorder %s35, 1
          %s590 = scalar_select %p589, %s35, 1
          %s591 = smul.addr %s590, 4
          %s592 = scalar_lea.vmem %s1, %s591
        $region24: #{transformer_decoder.1} parent=15 // pred_fallthru
          _
        // Predicated region
        $region25: #{transformer_decoder.1} parent=15 // pred_check
          %p593 = pneg %p112
        $region26: #{transformer_decoder.1} parent=15 // pred_check_branch
          %595 = sbr.rel (%p593) target = $region28
        $region27: #{transformer_decoder.1} parent=15 // pred_region
          %p596 = scmp.lt.s32.totalorder %s35, 1
          %s597 = scalar_select %p596, %s35, 1
          %s598 = scalar_lea.vmem %s2, %s597
        $region28: #{transformer_decoder.1} parent=15 // pred_fallthru
          _
        // Predicated region
        $region29: #{transformer_decoder.1} parent=15 // pred_check
          %p599 = pneg %p138
        $region30: #{transformer_decoder.1} parent=15 // pred_check_branch
          %601 = sbr.rel (%p599) target = $region32
        $region31: #{transformer_decoder.1} parent=15 // pred_region
          %p602 = scmp.lt.s32.totalorder %s36, 1
          %s603 = scalar_select %p602, %s36, 1
          %s604 = smul.addr %s603, 48
          %s605 = smul.addr %s604, 4
          %s606 = scalar_lea.vmem %s3, %s605
        $region32: #{transformer_decoder.1} parent=15 // pred_fallthru
          _
        // Predicated region
        $region33: #{transformer_decoder.1} parent=15 // pred_check
          %p607 = pneg %p164
        $region34: #{transformer_decoder.1} parent=15 // pred_check_branch
          %609 = sbr.rel (%p607) target = $region36
        $region35: #{transformer_decoder.1} parent=15 // pred_region
          %p610 = scmp.lt.s32.totalorder %s36, 1
          %s611 = scalar_select %p610, %s36, 1
          %s612 = smul.addr %s611, 12
          %s613 = scalar_lea.vmem %s4, %s612
        $region36: #{transformer_decoder.1} parent=15 // pred_fallthru
          _
        // Predicated region
        $region37: #{transformer_decoder.1} parent=15 // pred_check
          %p614 = pneg %p190
        $region38: #{transformer_decoder.1} parent=15 // pred_check_branch
          %616 = sbr.rel (%p614) target = $region40
        $region39: #{transformer_decoder.1} parent=15 // pred_region
          %p617 = scmp.lt.s32.totalorder %s36, 1
          %s618 = scalar_select %p617, %s36, 1
          %s619 = smul.addr %s618, 4
          %s620 = smul.addr %s619, 4
          %s621 = scalar_lea.vmem %s5, %s620
        $region40: #{transformer_decoder.1} parent=15 // pred_fallthru
          _
        // Predicated region
        $region41: #{transformer_decoder.1} parent=15 // pred_check
          %p622 = pneg %p216
        $region42: #{transformer_decoder.1} parent=15 // pred_check_branch
          %624 = sbr.rel (%p622) target = $region44
        $region43: #{transformer_decoder.1} parent=15 // pred_region
          %p625 = scmp.lt.s32.totalorder %s36, 1
          %s626 = scalar_select %p625, %s36, 1
          %s627 = scalar_lea.vmem %s6, %s626
        $region44: #{transformer_decoder.1} parent=15 // pred_fallthru
          _
        // Predicated region
        $region45: #{transformer_decoder.1} parent=15 // pred_check
          %p628 = pneg %p242
        $region46: #{transformer_decoder.1} parent=15 // pred_check_branch
          %630 = sbr.rel (%p628) target = $region48
        $region47: #{transformer_decoder.1} parent=15 // pred_region
          %p631 = scmp.lt.s32.totalorder %s36, 1
          %s632 = scalar_select %p631, %s36, 1
          %s633 = smul.addr %s632, 16
          %s634 = smul.addr %s633, 4
          %s635 = scalar_lea.vmem %s7, %s634
        $region48: #{transformer_decoder.1} parent=15 // pred_fallthru
          _
        // Predicated region
        $region49: #{transformer_decoder.1} parent=15 // pred_check
          %p636 = pneg %p268
        $region50: #{transformer_decoder.1} parent=15 // pred_check_branch
          %638 = sbr.rel (%p636) target = $region52
        $region51: #{transformer_decoder.1} parent=15 // pred_region
          %p639 = scmp.lt.s32.totalorder %s36, 1
          %s640 = scalar_select %p639, %s36, 1
          %s641 = smul.addr %s640, 4
          %s642 = scalar_lea.vmem %s8, %s641
        $region52: #{transformer_decoder.1} parent=15 // pred_fallthru
          _
        // Predicated region
        $region53: #{transformer_decoder.1} parent=15 // pred_check
          %p643 = pneg %p294
        $region54: #{transformer_decoder.1} parent=15 // pred_check_branch
          %645 = sbr.rel (%p643) target = $region56
        $region55: #{transformer_decoder.1} parent=15 // pred_region
          %p646 = scmp.lt.s32.totalorder %s36, 1
          %s647 = scalar_select %p646, %s36, 1
          %s648 = smul.addr %s647, 32
          %s649 = smul.addr %s648, 4
          %s650 = scalar_lea.vmem %s9, %s649
        $region56: #{transformer_decoder.1} parent=15 // pred_fallthru
          _
        // Predicated region
        $region57: #{transformer_decoder.1} parent=15 // pred_check
          %p651 = pneg %p320
        $region58: #{transformer_decoder.1} parent=15 // pred_check_branch
          %653 = sbr.rel (%p651) target = $region60
        $region59: #{transformer_decoder.1} parent=15 // pred_region
          %p654 = scmp.lt.s32.totalorder %s36, 1
          %s655 = scalar_select %p654, %s36, 1
          %s656 = smul.addr %s655, 8
          %s657 = scalar_lea.vmem %s10, %s656
        $region60: #{transformer_decoder.1} parent=15 // pred_fallthru
          _
        // Predicated region
        $region61: #{transformer_decoder.1} parent=15 // pred_check
          %p658 = pneg %p346
        $region62: #{transformer_decoder.1} parent=15 // pred_check_branch
          %660 = sbr.rel (%p658) target = $region64
        $region63: #{transformer_decoder.1} parent=15 // pred_region
          %p661 = scmp.lt.s32.totalorder %s36, 1
          %s662 = scalar_select %p661, %s36, 1
          %s663 = smul.addr %s662, 4
          %s664 = smul.addr %s663, 4
          %s665 = scalar_lea.vmem %s11, %s664
        $region64: #{transformer_decoder.1} parent=15 // pred_fallthru
          _
        // Predicated region
        $region65: #{transformer_decoder.1} parent=15 // pred_check
          %p666 = pneg %p372
        $region66: #{transformer_decoder.1} parent=15 // pred_check_branch
          %668 = sbr.rel (%p666) target = $region68
        $region67: #{transformer_decoder.1} parent=15 // pred_region
          %p669 = scmp.lt.s32.totalorder %s36, 1
          %s670 = scalar_select %p669, %s36, 1
          %s671 = scalar_lea.vmem %s12, %s670
        $region68: #{transformer_decoder.1} parent=15 // pred_fallthru
          _
        // Predicated region
        $region69: #{transformer_decoder.1} parent=15 // pred_check
          %p672 = pneg %p398
        $region70: #{transformer_decoder.1} parent=15 // pred_check_branch
          %674 = sbr.rel (%p672) target = $region72
        $region71: #{transformer_decoder.1} parent=15 // pred_region
          %p675 = scmp.lt.s32.totalorder %s36, 1
          %s676 = scalar_select %p675, %s36, 1
          %s677 = scalar_lea.vmem %s13, %s676
        $region72: #{transformer_decoder.1} parent=15 // pred_fallthru
          _
        // Predicated region
        $region73: #{transformer_decoder.1} parent=15 // pred_check
          %p678 = pneg %p424
        $region74: #{transformer_decoder.1} parent=15 // pred_check_branch
          %680 = sbr.rel (%p678) target = $region76
        $region75: #{transformer_decoder.1} parent=15 // pred_region
          %p681 = scmp.lt.s32.totalorder %s36, 1
          %s682 = scalar_select %p681, %s36, 1
          %s683 = scalar_lea.vmem %s14, %s682
        $region76: #{transformer_decoder.1} parent=15 // pred_fallthru
          _
        // Predicated region
        $region77: #{transformer_decoder.1} parent=15 // pred_check
          %p684 = pneg %p450
        $region78: #{transformer_decoder.1} parent=15 // pred_check_branch
          %686 = sbr.rel (%p684) target = $region80
        $region79: #{transformer_decoder.1} parent=15 // pred_region
          %p687 = scmp.lt.s32.totalorder %s36, 1
          %s688 = scalar_select %p687, %s36, 1
          %s689 = smul.addr %s688, 4
          %s690 = smul.addr %s689, 4
          %s691 = scalar_lea.vmem %s15, %s690
        $region80: #{transformer_decoder.1} parent=15 // pred_fallthru
          _
        // Predicated region
        $region81: #{transformer_decoder.1} parent=15 // pred_check
          %p692 = pneg %p476
        $region82: #{transformer_decoder.1} parent=15 // pred_check_branch
          %694 = sbr.rel (%p692) target = $region84
        $region83: #{transformer_decoder.1} parent=15 // pred_region
          %p695 = scmp.lt.s32.totalorder %s36, 1
          %s696 = scalar_select %p695, %s36, 1
          %s697 = scalar_lea.vmem %s16, %s696
        $region84: #{transformer_decoder.1} parent=15 // pred_fallthru
          _
        // Predicated region
        $region85: #{transformer_decoder.1} parent=15 // pred_check
          %p698 = pneg %p502
        $region86: #{transformer_decoder.1} parent=15 // pred_check_branch
          %700 = sbr.rel (%p698) target = $region88
        $region87: #{transformer_decoder.1} parent=15 // pred_region
          %p701 = scmp.lt.s32.totalorder %s36, 1
          %s702 = scalar_select %p701, %s36, 1
          %s703 = smul.addr %s702, 16
          %s704 = smul.addr %s703, 4
          %s705 = scalar_lea.vmem %s17, %s704
        $region88: #{transformer_decoder.1} parent=15 // pred_fallthru
          _
        // Predicated region
        $region89: #{transformer_decoder.1} parent=15 // pred_check
          %p706 = pneg %p528
        $region90: #{transformer_decoder.1} parent=15 // pred_check_branch
          %708 = sbr.rel (%p706) target = $region92
        $region91: #{transformer_decoder.1} parent=15 // pred_region
          %p709 = scmp.lt.s32.totalorder %s36, 1
          %s710 = scalar_select %p709, %s36, 1
          %s711 = scalar_lea.vmem %s18, %s710
        $region92: #{transformer_decoder.1} parent=15 // pred_fallthru
          _
      $region16: #{transformer_decoder.1} parent=5 // pred_fallthru
        _
      %p712 = scmp.le.s32.totalorder 1, %s28
      %p713 = scmp.lt.s32.totalorder %s28, 5
      %p714 = pnand %p712, %p713
      %p715 = pneg %p714
      // Predicated region
      $region93: #{transformer_decoder.1} parent=5 // pred_check
        _
      $region94: #{transformer_decoder.1} parent=5 // pred_check_branch
        %717 = sbr.rel (%p714) target = $region96
      $region95: #{transformer_decoder.1} parent=5 // pred_region
        %s718 = ssub.s32 %s28, 1
        %p719 = scmp.lt.s32.totalorder %s37, 1
        %s720 = scalar_select %p719, %s37, 1
        %s721 = smul.addr %s720, 8
        %s722 = scalar_lea.vmem %s0, %s721
        %p723 = pneg %p66
        %p724 = pneg %p63
        %p725 = scmp.lt.s32.totalorder %s37, 1
        %s726 = scalar_select %p725, %s37, 1
        %s727 = smul.addr %s726, 4
        %s728 = scalar_lea.vmem %s1, %s727
        %p729 = pneg %p92
        %p730 = pneg %p89
        %p731 = scmp.lt.s32.totalorder %s37, 1
        %s732 = scalar_select %p731, %s37, 1
        %s733 = scalar_lea.vmem %s2, %s732
        %p734 = pneg %p118
        %p735 = pneg %p115
        %p736 = scmp.lt.s32.totalorder %s38, 1
        %s737 = scalar_select %p736, %s38, 1
        %s738 = smul.addr %s737, 48
        %s739 = smul.addr %s738, 4
        %s740 = scalar_lea.vmem %s3, %s739
        %p741 = pneg %p144
        %p742 = pneg %p141
        %p743 = scmp.lt.s32.totalorder %s38, 1
        %s744 = scalar_select %p743, %s38, 1
        %s745 = smul.addr %s744, 12
        %s746 = scalar_lea.vmem %s4, %s745
        %p747 = pneg %p170
        %p748 = pneg %p167
        %p749 = scmp.lt.s32.totalorder %s38, 1
        %s750 = scalar_select %p749, %s38, 1
        %s751 = smul.addr %s750, 4
        %s752 = smul.addr %s751, 4
        %s753 = scalar_lea.vmem %s5, %s752
        %p754 = pneg %p196
        %p755 = pneg %p193
        %p756 = scmp.lt.s32.totalorder %s38, 1
        %s757 = scalar_select %p756, %s38, 1
        %s758 = scalar_lea.vmem %s6, %s757
        %p759 = pneg %p222
        %p760 = pneg %p219
        %p761 = scmp.lt.s32.totalorder %s38, 1
        %s762 = scalar_select %p761, %s38, 1
        %s763 = smul.addr %s762, 16
        %s764 = smul.addr %s763, 4
        %s765 = scalar_lea.vmem %s7, %s764
        %p766 = pneg %p248
        %p767 = pneg %p245
        %p768 = scmp.lt.s32.totalorder %s38, 1
        %s769 = scalar_select %p768, %s38, 1
        %s770 = smul.addr %s769, 4
        %s771 = scalar_lea.vmem %s8, %s770
        %p772 = pneg %p274
        %p773 = pneg %p271
        %p774 = scmp.lt.s32.totalorder %s38, 1
        %s775 = scalar_select %p774, %s38, 1
        %s776 = smul.addr %s775, 32
        %s777 = smul.addr %s776, 4
        %s778 = scalar_lea.vmem %s9, %s777
        %p779 = pneg %p300
        %p780 = pneg %p297
        %p781 = scmp.lt.s32.totalorder %s38, 1
        %s782 = scalar_select %p781, %s38, 1
        %s783 = smul.addr %s782, 8
        %s784 = scalar_lea.vmem %s10, %s783
        %p785 = pneg %p326
        %p786 = pneg %p323
        %p787 = scmp.lt.s32.totalorder %s38, 1
        %s788 = scalar_select %p787, %s38, 1
        %s789 = smul.addr %s788, 4
        %s790 = smul.addr %s789, 4
        %s791 = scalar_lea.vmem %s11, %s790
        %p792 = pneg %p352
        %p793 = pneg %p349
        %p794 = scmp.lt.s32.totalorder %s38, 1
        %s795 = scalar_select %p794, %s38, 1
        %s796 = scalar_lea.vmem %s12, %s795
        %p797 = pneg %p378
        %p798 = pneg %p375
        %p799 = scmp.lt.s32.totalorder %s38, 1
        %s800 = scalar_select %p799, %s38, 1
        %s801 = scalar_lea.vmem %s13, %s800
        %p802 = pneg %p404
        %p803 = pneg %p401
        %p804 = scmp.lt.s32.totalorder %s38, 1
        %s805 = scalar_select %p804, %s38, 1
        %s806 = scalar_lea.vmem %s14, %s805
        %p807 = pneg %p430
        %p808 = pneg %p427
        %p809 = scmp.lt.s32.totalorder %s38, 1
        %s810 = scalar_select %p809, %s38, 1
        %s811 = smul.addr %s810, 4
        %s812 = smul.addr %s811, 4
        %s813 = scalar_lea.vmem %s15, %s812
        %p814 = pneg %p456
        %p815 = pneg %p453
        %p816 = scmp.lt.s32.totalorder %s38, 1
        %s817 = scalar_select %p816, %s38, 1
        %s818 = scalar_lea.vmem %s16, %s817
        %p819 = pneg %p482
        %p820 = pneg %p479
        %p821 = scmp.lt.s32.totalorder %s38, 1
        %s822 = scalar_select %p821, %s38, 1
        %s823 = smul.addr %s822, 16
        %s824 = smul.addr %s823, 4
        %s825 = scalar_lea.vmem %s17, %s824
        %p826 = pneg %p508
        %p827 = pneg %p505
        %p828 = scmp.lt.s32.totalorder %s38, 1
        %s829 = scalar_select %p828, %s38, 1
        %s830 = scalar_lea.vmem %s18, %s829
        %p831 = pneg %p534
        %p832 = pneg %p531
        %p833 = pneg %p560
        %p834 = pneg %p557
        %s835 = sand.u32 %s547, 1
        %s836 = scalar_lea.sflag [#allocation3], %s835
        %s837 = sand.u32 %s547, 1
        %s838 = smul.addr %s837, 8
        %s839 = scalar_lea.vmem [#allocation2], %s838
        %p840 = scmp.lt.s32.totalorder %s37, 1
        %s841 = scalar_select %p840, %s37, 1
        %s842 = smul.addr %s841, 8
        %s843 = scalar_lea.vmem %s0, %s842
        %p844 = scmp.lt.s32.totalorder %s37, 1
        %s845 = scalar_select %p844, %s37, 1
        %s846 = smul.addr %s845, 4
        %s847 = scalar_lea.vmem %s1, %s846
        %p848 = scmp.lt.s32.totalorder %s37, 1
        %s849 = scalar_select %p848, %s37, 1
        %s850 = scalar_lea.vmem %s2, %s849
        %p851 = scmp.lt.s32.totalorder %s38, 1
        %s852 = scalar_select %p851, %s38, 1
        %s853 = smul.addr %s852, 48
        %s854 = smul.addr %s853, 4
        %s855 = scalar_lea.vmem %s3, %s854
        %p856 = scmp.lt.s32.totalorder %s38, 1
        %s857 = scalar_select %p856, %s38, 1
        %s858 = smul.addr %s857, 12
        %s859 = scalar_lea.vmem %s4, %s858
        %p860 = scmp.lt.s32.totalorder %s38, 1
        %s861 = scalar_select %p860, %s38, 1
        %s862 = smul.addr %s861, 4
        %s863 = smul.addr %s862, 4
        %s864 = scalar_lea.vmem %s5, %s863
        %p865 = scmp.lt.s32.totalorder %s38, 1
        %s866 = scalar_select %p865, %s38, 1
        %s867 = scalar_lea.vmem %s6, %s866
        %p868 = scmp.lt.s32.totalorder %s38, 1
        %s869 = scalar_select %p868, %s38, 1
        %s870 = smul.addr %s869, 16
        %s871 = smul.addr %s870, 4
        %s872 = scalar_lea.vmem %s7, %s871
        %p873 = scmp.lt.s32.totalorder %s38, 1
        %s874 = scalar_select %p873, %s38, 1
        %s875 = smul.addr %s874, 4
        %s876 = scalar_lea.vmem %s8, %s875
        %p877 = scmp.lt.s32.totalorder %s38, 1
        %s878 = scalar_select %p877, %s38, 1
        %s879 = smul.addr %s878, 32
        %s880 = smul.addr %s879, 4
        %s881 = scalar_lea.vmem %s9, %s880
        %p882 = scmp.lt.s32.totalorder %s38, 1
        %s883 = scalar_select %p882, %s38, 1
        %s884 = smul.addr %s883, 8
        %s885 = scalar_lea.vmem %s10, %s884
        %p886 = scmp.lt.s32.totalorder %s38, 1
        %s887 = scalar_select %p886, %s38, 1
        %s888 = smul.addr %s887, 4
        %s889 = smul.addr %s888, 4
        %s890 = scalar_lea.vmem %s11, %s889
        %p891 = scmp.lt.s32.totalorder %s38, 1
        %s892 = scalar_select %p891, %s38, 1
        %s893 = scalar_lea.vmem %s12, %s892
        %p894 = scmp.lt.s32.totalorder %s38, 1
        %s895 = scalar_select %p894, %s38, 1
        %s896 = scalar_lea.vmem %s13, %s895
        %p897 = scmp.lt.s32.totalorder %s38, 1
        %s898 = scalar_select %p897, %s38, 1
        %s899 = scalar_lea.vmem %s14, %s898
        %p900 = scmp.lt.s32.totalorder %s38, 1
        %s901 = scalar_select %p900, %s38, 1
        %s902 = smul.addr %s901, 4
        %s903 = smul.addr %s902, 4
        %s904 = scalar_lea.vmem %s15, %s903
        %p905 = scmp.lt.s32.totalorder %s38, 1
        %s906 = scalar_select %p905, %s38, 1
        %s907 = scalar_lea.vmem %s16, %s906
        %p908 = scmp.lt.s32.totalorder %s38, 1
        %s909 = scalar_select %p908, %s38, 1
        %s910 = smul.addr %s909, 16
        %s911 = smul.addr %s910, 4
        %s912 = scalar_lea.vmem %s17, %s911
        %p913 = scmp.lt.s32.totalorder %s38, 1
        %s914 = scalar_select %p913, %s38, 1
        %s915 = scalar_lea.vmem %s18, %s914
        %p917 = scmp.eq.s32.totalorder %s38, 0
        // Predicated region
        $region97: #{transformer_decoder.1} parent=95 // pred_check
          %p918 = pneg %p917
        $region98: #{transformer_decoder.1} parent=95 // pred_check_branch
          %920 = sbr.rel (%p918) target = $region100
        $region99: #{transformer_decoder.1} parent=95 // pred_region
          %v921 = vld [vmem:[%s843] sm:$0xff]
          %vm922 = vcmask 261120
          %923 = vst.msk [vmem:[%s839] sm:$0xff] %vm922, %v921
        $region100: #{transformer_decoder.1} parent=95 // pred_fallthru
          _
        %v924 = vld [vmem:[%s839] sm:$0xff]
        %v925 = vld [vmem:[%s896] sm:$0x1]
        %v926 = vld [vmem:[%s899] sm:$0x1]
        %v927 = vld [vmem:[%s855] sm:$0xf]
        %v928 = vld [vmem:[%s855 + $0x4] sm:$0xf]
        %v929 = vld [vmem:[%s855 + $0x8] sm:$0xf]
        %v930 = vld [vmem:[%s855 + $0xc] sm:$0xf]
        %v931 = vld [vmem:[%s855 + $0x10] sm:$0xf]
        %v932 = vld [vmem:[%s855 + $0x14] sm:$0xf]
        %v933 = vld [vmem:[%s855 + $0x18] sm:$0xf]
        %v934 = vld [vmem:[%s855 + $0x1c] sm:$0xf]
        %v935 = vld [vmem:[%s855 + $0x20] sm:$0xf]
        %v936 = vld [vmem:[%s855 + $0x24] sm:$0xf]
        %v937 = vld [vmem:[%s855 + $0x28] sm:$0xf]
        %v938 = vld [vmem:[%s855 + $0x2c] sm:$0xf]
        %v939 = vld [vmem:[%s855 + $0x30] sm:$0xf]
        %v940 = vld [vmem:[%s855 + $0x34] sm:$0xf]
        %v941 = vld [vmem:[%s855 + $0x38] sm:$0xf]
        %v942 = vld [vmem:[%s855 + $0x3c] sm:$0xf]
        %v943 = vld [vmem:[%s855 + $0x40] sm:$0xf]
        %v944 = vld [vmem:[%s855 + $0x44] sm:$0xf]
        %v945 = vld [vmem:[%s855 + $0x48] sm:$0xf]
        %v946 = vld [vmem:[%s855 + $0x4c] sm:$0xf]
        %v947 = vld [vmem:[%s855 + $0x50] sm:$0xf]
        %v948 = vld [vmem:[%s855 + $0x54] sm:$0xf]
        %v949 = vld [vmem:[%s855 + $0x58] sm:$0xf]
        %v950 = vld [vmem:[%s855 + $0x5c] sm:$0xf]
        %v951 = vld [vmem:[%s855 + $0x60] sm:$0xf]
        %v952 = vld [vmem:[%s855 + $0x64] sm:$0xf]
        %v953 = vld [vmem:[%s855 + $0x68] sm:$0xf]
        %v954 = vld [vmem:[%s855 + $0x6c] sm:$0xf]
        %v955 = vld [vmem:[%s855 + $0x70] sm:$0xf]
        %v956 = vld [vmem:[%s855 + $0x74] sm:$0xf]
        %v957 = vld [vmem:[%s855 + $0x78] sm:$0xf]
        %v958 = vld [vmem:[%s855 + $0x7c] sm:$0xf]
        %v959 = vld [vmem:[%s855 + $0x80] sm:$0xf]
        %v960 = vld [vmem:[%s855 + $0x84] sm:$0xf]
        %v961 = vld [vmem:[%s855 + $0x88] sm:$0xf]
        %v962 = vld [vmem:[%s855 + $0x8c] sm:$0xf]
        %v963 = vld [vmem:[%s855 + $0x90] sm:$0xf]
        %v964 = vld [vmem:[%s855 + $0x94] sm:$0xf]
        %v965 = vld [vmem:[%s855 + $0x98] sm:$0xf]
        %v966 = vld [vmem:[%s855 + $0x9c] sm:$0xf]
        %v967 = vld [vmem:[%s855 + $0xa0] sm:$0xf]
        %v968 = vld [vmem:[%s855 + $0xa4] sm:$0xf]
        %v969 = vld [vmem:[%s855 + $0xa8] sm:$0xf]
        %v970 = vld [vmem:[%s855 + $0xac] sm:$0xf]
        %v971 = vld [vmem:[%s855 + $0xb0] sm:$0xf]
        %v972 = vld [vmem:[%s855 + $0xb4] sm:$0xf]
        %v973 = vld [vmem:[%s855 + $0xb8] sm:$0xf]
        %v974 = vld [vmem:[%s855 + $0xbc] sm:$0xf]
        %v975 = vld [vmem:[%s859] sm:$0x1]
        %v976 = vld [vmem:[%s859 + $0x1] sm:$0x1]
        %v977 = vld [vmem:[%s859 + $0x2] sm:$0x1]
        %v978 = vld [vmem:[%s859 + $0x3] sm:$0x1]
        %v979 = vld [vmem:[%s859 + $0x4] sm:$0x1]
        %v980 = vld [vmem:[%s859 + $0x5] sm:$0x1]
        %v981 = vld [vmem:[%s859 + $0x6] sm:$0x1]
        %v982 = vld [vmem:[%s859 + $0x7] sm:$0x1]
        %v983 = vld [vmem:[%s859 + $0x8] sm:$0x1]
        %v984 = vld [vmem:[%s859 + $0x9] sm:$0x1]
        %v985 = vld [vmem:[%s859 + $0xa] sm:$0x1]
        %v986 = vld [vmem:[%s859 + $0xb] sm:$0x1]
        %v987 = vpack.c.bf16 %v924, %v924
        %v992 = vlaneseq
        %v993 = vshrl.u32 %v992, 7
        %v994 = vsub.s32 0, %v993
        %v995 = vrot.slane %v975, %v994
        %v996 = vlaneseq
        %v997 = vshrl.u32 %v996, 7
        %v998 = vsub.s32 0, %v997
        %v999 = vrot.slane %v976, %v998
        %v1000 = vlaneseq
        %v1001 = vshrl.u32 %v1000, 7
        %v1002 = vsub.s32 0, %v1001
        %v1003 = vrot.slane %v977, %v1002
        %v1004 = vlaneseq
        %v1005 = vshrl.u32 %v1004, 7
        %v1006 = vsub.s32 0, %v1005
        %v1007 = vrot.slane %v978, %v1006
        %v1016 = vunpack.c.l.b16 %v927
        %v1017 = vunpack.c.l.b16 %v928
        %v1018 = vunpack.c.l.b16 %v929
        %v1019 = vunpack.c.l.b16 %v930
        %v1020 = vpack.c.b16 %v1017, %v1016
        %v1021 = vpack.c.b16 %v1019, %v1018
        %vm1024 = vcmask 261120
        %v1026 = vsel %vm1024, %v987, 0
        %1028 = vmatprep.subr.bf16.mxu0 0
        %1029 = vmatpush1.bf16.msra.mxu0 %v1020
        %1030 = vmatprep.subr.bf16.mxu0 0
        %1031 = vmatpush1.bf16.msra.mxu0 %v1021
        %1032 = vmatprep.subr.bf16.mxu0 0
        %1033 = vmatpush1.bf16.msra.mxu0 0
        %1034 = vmatprep.subr.bf16.mxu0 0
        %1035 = vmatpush1.bf16.msra.mxu0 0
        %1036 = vmatprep.subr.bf16.mxu0 0
        %1037 = vmatpush1.bf16.msra.mxu0 0
        %1038 = vmatprep.subr.bf16.mxu0 0
        %1039 = vmatpush1.bf16.msra.mxu0 0
        %1040 = vmatprep.subr.bf16.mxu0 0
        %1041 = vmatpush1.bf16.msra.mxu0 0
        %1042 = vmatprep.subr.bf16.mxu0 0
        %1043 = vmatpush1.bf16.msra.mxu0 0
        %1044 = vmatprep.subr.bf16.mxu0 0
        %1045 = vmatpush1.bf16.msra.mxu0 0
        %1046 = vmatprep.subr.bf16.mxu0 0
        %1047 = vmatpush1.bf16.msra.mxu0 0
        %1048 = vmatprep.subr.bf16.mxu0 0
        %1049 = vmatpush1.bf16.msra.mxu0 0
        %1050 = vmatprep.subr.bf16.mxu0 0
        %1051 = vmatpush1.bf16.msra.mxu0 0
        %1052 = vmatprep.subr.bf16.mxu0 0
        %1053 = vmatpush1.bf16.msra.mxu0 0
        %1054 = vmatprep.subr.bf16.mxu0 0
        %1055 = vmatpush1.bf16.msra.mxu0 0
        %1056 = vmatprep.subr.bf16.mxu0 0
        %1057 = vmatpush1.bf16.msra.mxu0 0
        %1058 = vmatprep.subr.bf16.mxu0 0
        %1059 = vmatpush1.bf16.msra.mxu0 0
        %1060 = vmatprep.mubr.bf16.mxu0 0
        %1061 = vmatmul.mubr.bf16.gmra.mrb[0].mxu0 %v1026
        %v1062 = vpop.f32.mrb[0].mxu0
        %v1063 = vadd.f32 %v995, %v1062
        %v1064 = vpop.f32.mrb[0].mxu0
        %v1065 = vpop.f32.mrb[0].mxu0
        %v1066 = vpop.f32.mrb[0].mxu0
        %1067 = vdwg.mxu0
        %v1072 = vunpack.c.l.b16 %v931
        %v1073 = vunpack.c.l.b16 %v932
        %v1074 = vunpack.c.l.b16 %v933
        %v1075 = vunpack.c.l.b16 %v934
        %v1076 = vpack.c.b16 %v1073, %v1072
        %v1077 = vpack.c.b16 %v1075, %v1074
        %1080 = vmatprep.subr.bf16.mxu0 0
        %1081 = vmatpush1.bf16.msra.mxu0 %v1076
        %1082 = vmatprep.subr.bf16.mxu0 0
        %1083 = vmatpush1.bf16.msra.mxu0 %v1077
        %1084 = vmatprep.subr.bf16.mxu0 0
        %1085 = vmatpush1.bf16.msra.mxu0 0
        %1086 = vmatprep.subr.bf16.mxu0 0
        %1087 = vmatpush1.bf16.msra.mxu0 0
        %1088 = vmatprep.subr.bf16.mxu0 0
        %1089 = vmatpush1.bf16.msra.mxu0 0
        %1090 = vmatprep.subr.bf16.mxu0 0
        %1091 = vmatpush1.bf16.msra.mxu0 0
        %1092 = vmatprep.subr.bf16.mxu0 0
        %1093 = vmatpush1.bf16.msra.mxu0 0
        %1094 = vmatprep.subr.bf16.mxu0 0
        %1095 = vmatpush1.bf16.msra.mxu0 0
        %1096 = vmatprep.subr.bf16.mxu0 0
        %1097 = vmatpush1.bf16.msra.mxu0 0
        %1098 = vmatprep.subr.bf16.mxu0 0
        %1099 = vmatpush1.bf16.msra.mxu0 0
        %1100 = vmatprep.subr.bf16.mxu0 0
        %1101 = vmatpush1.bf16.msra.mxu0 0
        %1102 = vmatprep.subr.bf16.mxu0 0
        %1103 = vmatpush1.bf16.msra.mxu0 0
        %1104 = vmatprep.subr.bf16.mxu0 0
        %1105 = vmatpush1.bf16.msra.mxu0 0
        %1106 = vmatprep.subr.bf16.mxu0 0
        %1107 = vmatpush1.bf16.msra.mxu0 0
        %1108 = vmatprep.subr.bf16.mxu0 0
        %1109 = vmatpush1.bf16.msra.mxu0 0
        %1110 = vmatprep.subr.bf16.mxu0 0
        %1111 = vmatpush1.bf16.msra.mxu0 0
        %1112 = vmatprep.mubr.bf16.mxu0 0
        %1113 = vmatmul.mubr.bf16.gmra.mrb[0].mxu0 %v1026
        %v1114 = vpop.f32.mrb[0].mxu0
        %v1115 = vadd.f32 %v999, %v1114
        %v1116 = vpop.f32.mrb[0].mxu0
        %v1117 = vpop.f32.mrb[0].mxu0
        %v1118 = vpop.f32.mrb[0].mxu0
        %1119 = vdwg.mxu0
        %v1124 = vunpack.c.l.b16 %v935
        %v1125 = vunpack.c.l.b16 %v936
        %v1126 = vunpack.c.l.b16 %v937
        %v1127 = vunpack.c.l.b16 %v938
        %v1128 = vpack.c.b16 %v1125, %v1124
        %v1129 = vpack.c.b16 %v1127, %v1126
        %1132 = vmatprep.subr.bf16.mxu0 0
        %1133 = vmatpush1.bf16.msra.mxu0 %v1128
        %1134 = vmatprep.subr.bf16.mxu0 0
        %1135 = vmatpush1.bf16.msra.mxu0 %v1129
        %1136 = vmatprep.subr.bf16.mxu0 0
        %1137 = vmatpush1.bf16.msra.mxu0 0
        %1138 = vmatprep.subr.bf16.mxu0 0
        %1139 = vmatpush1.bf16.msra.mxu0 0
        %1140 = vmatprep.subr.bf16.mxu0 0
        %1141 = vmatpush1.bf16.msra.mxu0 0
        %1142 = vmatprep.subr.bf16.mxu0 0
        %1143 = vmatpush1.bf16.msra.mxu0 0
        %1144 = vmatprep.subr.bf16.mxu0 0
        %1145 = vmatpush1.bf16.msra.mxu0 0
        %1146 = vmatprep.subr.bf16.mxu0 0
        %1147 = vmatpush1.bf16.msra.mxu0 0
        %1148 = vmatprep.subr.bf16.mxu0 0
        %1149 = vmatpush1.bf16.msra.mxu0 0
        %1150 = vmatprep.subr.bf16.mxu0 0
        %1151 = vmatpush1.bf16.msra.mxu0 0
        %1152 = vmatprep.subr.bf16.mxu0 0
        %1153 = vmatpush1.bf16.msra.mxu0 0
        %1154 = vmatprep.subr.bf16.mxu0 0
        %1155 = vmatpush1.bf16.msra.mxu0 0
        %1156 = vmatprep.subr.bf16.mxu0 0
        %1157 = vmatpush1.bf16.msra.mxu0 0
        %1158 = vmatprep.subr.bf16.mxu0 0
        %1159 = vmatpush1.bf16.msra.mxu0 0
        %1160 = vmatprep.subr.bf16.mxu0 0
        %1161 = vmatpush1.bf16.msra.mxu0 0
        %1162 = vmatprep.subr.bf16.mxu0 0
        %1163 = vmatpush1.bf16.msra.mxu0 0
        %1164 = vmatprep.mubr.bf16.mxu0 0
        %1165 = vmatmul.mubr.bf16.gmra.mrb[0].mxu0 %v1026
        %v1166 = vpop.f32.mrb[0].mxu0
        %v1167 = vadd.f32 %v1003, %v1166
        %v1168 = vpop.f32.mrb[0].mxu0
        %v1169 = vpop.f32.mrb[0].mxu0
        %v1170 = vpop.f32.mrb[0].mxu0
        %1171 = vdwg.mxu0
        %v1176 = vunpack.c.l.b16 %v939
        %v1177 = vunpack.c.l.b16 %v940
        %v1178 = vunpack.c.l.b16 %v941
        %v1179 = vunpack.c.l.b16 %v942
        %v1180 = vpack.c.b16 %v1177, %v1176
        %v1181 = vpack.c.b16 %v1179, %v1178
        %1184 = vmatprep.subr.bf16.mxu0 0
        %1185 = vmatpush1.bf16.msra.mxu0 %v1180
        %1186 = vmatprep.subr.bf16.mxu0 0
        %1187 = vmatpush1.bf16.msra.mxu0 %v1181
        %1188 = vmatprep.subr.bf16.mxu0 0
        %1189 = vmatpush1.bf16.msra.mxu0 0
        %1190 = vmatprep.subr.bf16.mxu0 0
        %1191 = vmatpush1.bf16.msra.mxu0 0
        %1192 = vmatprep.subr.bf16.mxu0 0
        %1193 = vmatpush1.bf16.msra.mxu0 0
        %1194 = vmatprep.subr.bf16.mxu0 0
        %1195 = vmatpush1.bf16.msra.mxu0 0
        %1196 = vmatprep.subr.bf16.mxu0 0
        %1197 = vmatpush1.bf16.msra.mxu0 0
        %1198 = vmatprep.subr.bf16.mxu0 0
        %1199 = vmatpush1.bf16.msra.mxu0 0
        %1200 = vmatprep.subr.bf16.mxu0 0
        %1201 = vmatpush1.bf16.msra.mxu0 0
        %1202 = vmatprep.subr.bf16.mxu0 0
        %1203 = vmatpush1.bf16.msra.mxu0 0
        %1204 = vmatprep.subr.bf16.mxu0 0
        %1205 = vmatpush1.bf16.msra.mxu0 0
        %1206 = vmatprep.subr.bf16.mxu0 0
        %1207 = vmatpush1.bf16.msra.mxu0 0
        %1208 = vmatprep.subr.bf16.mxu0 0
        %1209 = vmatpush1.bf16.msra.mxu0 0
        %1210 = vmatprep.subr.bf16.mxu0 0
        %1211 = vmatpush1.bf16.msra.mxu0 0
        %1212 = vmatprep.subr.bf16.mxu0 0
        %1213 = vmatpush1.bf16.msra.mxu0 0
        %1214 = vmatprep.subr.bf16.mxu0 0
        %1215 = vmatpush1.bf16.msra.mxu0 0
        %1216 = vmatprep.mubr.bf16.mxu0 0
        %1217 = vmatmul.mubr.bf16.gmra.mrb[0].mxu0 %v1026
        %v1218 = vpop.f32.mrb[0].mxu0
        %v1219 = vadd.f32 %v1007, %v1218
        %v1220 = vpop.f32.mrb[0].mxu0
        %v1221 = vpop.f32.mrb[0].mxu0
        %v1222 = vpop.f32.mrb[0].mxu0
        %1223 = vdwg.mxu0
        %v1228 = vlaneseq
        %v1229 = vshrl.u32 %v1228, 7
        %v1230 = vsub.s32 0, %v1229
        %v1231 = vrot.slane %v979, %v1230
        %v1232 = vlaneseq
        %v1233 = vshrl.u32 %v1232, 7
        %v1234 = vsub.s32 0, %v1233
        %v1235 = vrot.slane %v980, %v1234
        %v1236 = vlaneseq
        %v1237 = vshrl.u32 %v1236, 7
        %v1238 = vsub.s32 0, %v1237
        %v1239 = vrot.slane %v981, %v1238
        %v1240 = vlaneseq
        %v1241 = vshrl.u32 %v1240, 7
        %v1242 = vsub.s32 0, %v1241
        %v1243 = vrot.slane %v982, %v1242
        %v1252 = vunpack.c.l.b16 %v943
        %v1253 = vunpack.c.l.b16 %v944
        %v1254 = vunpack.c.l.b16 %v945
        %v1255 = vunpack.c.l.b16 %v946
        %v1256 = vpack.c.b16 %v1253, %v1252
        %v1257 = vpack.c.b16 %v1255, %v1254
        %1260 = vmatprep.subr.bf16.mxu0 0
        %1261 = vmatpush1.bf16.msra.mxu0 %v1256
        %1262 = vmatprep.subr.bf16.mxu0 0
        %1263 = vmatpush1.bf16.msra.mxu0 %v1257
        %1264 = vmatprep.subr.bf16.mxu0 0
        %1265 = vmatpush1.bf16.msra.mxu0 0
        %1266 = vmatprep.subr.bf16.mxu0 0
        %1267 = vmatpush1.bf16.msra.mxu0 0
        %1268 = vmatprep.subr.bf16.mxu0 0
        %1269 = vmatpush1.bf16.msra.mxu0 0
        %1270 = vmatprep.subr.bf16.mxu0 0
        %1271 = vmatpush1.bf16.msra.mxu0 0
        %1272 = vmatprep.subr.bf16.mxu0 0
        %1273 = vmatpush1.bf16.msra.mxu0 0
        %1274 = vmatprep.subr.bf16.mxu0 0
        %1275 = vmatpush1.bf16.msra.mxu0 0
        %1276 = vmatprep.subr.bf16.mxu0 0
        %1277 = vmatpush1.bf16.msra.mxu0 0
        %1278 = vmatprep.subr.bf16.mxu0 0
        %1279 = vmatpush1.bf16.msra.mxu0 0
        %1280 = vmatprep.subr.bf16.mxu0 0
        %1281 = vmatpush1.bf16.msra.mxu0 0
        %1282 = vmatprep.subr.bf16.mxu0 0
        %1283 = vmatpush1.bf16.msra.mxu0 0
        %1284 = vmatprep.subr.bf16.mxu0 0
        %1285 = vmatpush1.bf16.msra.mxu0 0
        %1286 = vmatprep.subr.bf16.mxu0 0
        %1287 = vmatpush1.bf16.msra.mxu0 0
        %1288 = vmatprep.subr.bf16.mxu0 0
        %1289 = vmatpush1.bf16.msra.mxu0 0
        %1290 = vmatprep.subr.bf16.mxu0 0
        %1291 = vmatpush1.bf16.msra.mxu0 0
        %1292 = vmatprep.mubr.bf16.mxu0 0
        %1293 = vmatmul.mubr.bf16.gmra.mrb[0].mxu0 %v1026
        %v1294 = vpop.f32.mrb[0].mxu0
        %v1295 = vadd.f32 %v1231, %v1294
        %v1296 = vpop.f32.mrb[0].mxu0
        %v1297 = vpop.f32.mrb[0].mxu0
        %v1298 = vpop.f32.mrb[0].mxu0
        %1299 = vdwg.mxu0
        %v1304 = vunpack.c.l.b16 %v947
        %v1305 = vunpack.c.l.b16 %v948
        %v1306 = vunpack.c.l.b16 %v949
        %v1307 = vunpack.c.l.b16 %v950
        %v1308 = vpack.c.b16 %v1305, %v1304
        %v1309 = vpack.c.b16 %v1307, %v1306
        %1312 = vmatprep.subr.bf16.mxu0 0
        %1313 = vmatpush1.bf16.msra.mxu0 %v1308
        %1314 = vmatprep.subr.bf16.mxu0 0
        %1315 = vmatpush1.bf16.msra.mxu0 %v1309
        %1316 = vmatprep.subr.bf16.mxu0 0
        %1317 = vmatpush1.bf16.msra.mxu0 0
        %1318 = vmatprep.subr.bf16.mxu0 0
        %1319 = vmatpush1.bf16.msra.mxu0 0
        %1320 = vmatprep.subr.bf16.mxu0 0
        %1321 = vmatpush1.bf16.msra.mxu0 0
        %1322 = vmatprep.subr.bf16.mxu0 0
        %1323 = vmatpush1.bf16.msra.mxu0 0
        %1324 = vmatprep.subr.bf16.mxu0 0
        %1325 = vmatpush1.bf16.msra.mxu0 0
        %1326 = vmatprep.subr.bf16.mxu0 0
        %1327 = vmatpush1.bf16.msra.mxu0 0
        %1328 = vmatprep.subr.bf16.mxu0 0
        %1329 = vmatpush1.bf16.msra.mxu0 0
        %1330 = vmatprep.subr.bf16.mxu0 0
        %1331 = vmatpush1.bf16.msra.mxu0 0
        %1332 = vmatprep.subr.bf16.mxu0 0
        %1333 = vmatpush1.bf16.msra.mxu0 0
        %1334 = vmatprep.subr.bf16.mxu0 0
        %1335 = vmatpush1.bf16.msra.mxu0 0
        %1336 = vmatprep.subr.bf16.mxu0 0
        %1337 = vmatpush1.bf16.msra.mxu0 0
        %1338 = vmatprep.subr.bf16.mxu0 0
        %1339 = vmatpush1.bf16.msra.mxu0 0
        %1340 = vmatprep.subr.bf16.mxu0 0
        %1341 = vmatpush1.bf16.msra.mxu0 0
        %1342 = vmatprep.subr.bf16.mxu0 0
        %1343 = vmatpush1.bf16.msra.mxu0 0
        %1344 = vmatprep.mubr.bf16.mxu0 0
        %1345 = vmatmul.mubr.bf16.gmra.mrb[0].mxu0 %v1026
        %v1346 = vpop.f32.mrb[0].mxu0
        %v1347 = vadd.f32 %v1235, %v1346
        %v1348 = vpop.f32.mrb[0].mxu0
        %v1349 = vpop.f32.mrb[0].mxu0
        %v1350 = vpop.f32.mrb[0].mxu0
        %1351 = vdwg.mxu0
        %v1356 = vunpack.c.l.b16 %v951
        %v1357 = vunpack.c.l.b16 %v952
        %v1358 = vunpack.c.l.b16 %v953
        %v1359 = vunpack.c.l.b16 %v954
        %v1360 = vpack.c.b16 %v1357, %v1356
        %v1361 = vpack.c.b16 %v1359, %v1358
        %1364 = vmatprep.subr.bf16.mxu0 0
        %1365 = vmatpush1.bf16.msra.mxu0 %v1360
        %1366 = vmatprep.subr.bf16.mxu0 0
        %1367 = vmatpush1.bf16.msra.mxu0 %v1361
        %1368 = vmatprep.subr.bf16.mxu0 0
        %1369 = vmatpush1.bf16.msra.mxu0 0
        %1370 = vmatprep.subr.bf16.mxu0 0
        %1371 = vmatpush1.bf16.msra.mxu0 0
        %1372 = vmatprep.subr.bf16.mxu0 0
        %1373 = vmatpush1.bf16.msra.mxu0 0
        %1374 = vmatprep.subr.bf16.mxu0 0
        %1375 = vmatpush1.bf16.msra.mxu0 0
        %1376 = vmatprep.subr.bf16.mxu0 0
        %1377 = vmatpush1.bf16.msra.mxu0 0
        %1378 = vmatprep.subr.bf16.mxu0 0
        %1379 = vmatpush1.bf16.msra.mxu0 0
        %1380 = vmatprep.subr.bf16.mxu0 0
        %1381 = vmatpush1.bf16.msra.mxu0 0
        %1382 = vmatprep.subr.bf16.mxu0 0
        %1383 = vmatpush1.bf16.msra.mxu0 0
        %1384 = vmatprep.subr.bf16.mxu0 0
        %1385 = vmatpush1.bf16.msra.mxu0 0
        %1386 = vmatprep.subr.bf16.mxu0 0
        %1387 = vmatpush1.bf16.msra.mxu0 0
        %1388 = vmatprep.subr.bf16.mxu0 0
        %1389 = vmatpush1.bf16.msra.mxu0 0
        %1390 = vmatprep.subr.bf16.mxu0 0
        %1391 = vmatpush1.bf16.msra.mxu0 0
        %1392 = vmatprep.subr.bf16.mxu0 0
        %1393 = vmatpush1.bf16.msra.mxu0 0
        %1394 = vmatprep.subr.bf16.mxu0 0
        %1395 = vmatpush1.bf16.msra.mxu0 0
        %1396 = vmatprep.mubr.bf16.mxu0 0
        %1397 = vmatmul.mubr.bf16.gmra.mrb[0].mxu0 %v1026
        %v1398 = vpop.f32.mrb[0].mxu0
        %v1399 = vadd.f32 %v1239, %v1398
        %v1400 = vpop.f32.mrb[0].mxu0
        %v1401 = vpop.f32.mrb[0].mxu0
        %v1402 = vpop.f32.mrb[0].mxu0
        %1403 = vdwg.mxu0
        %v1408 = vunpack.c.l.b16 %v955
        %v1409 = vunpack.c.l.b16 %v956
        %v1410 = vunpack.c.l.b16 %v957
        %v1411 = vunpack.c.l.b16 %v958
        %v1412 = vpack.c.b16 %v1409, %v1408
        %v1413 = vpack.c.b16 %v1411, %v1410
        %1416 = vmatprep.subr.bf16.mxu0 0
        %1417 = vmatpush1.bf16.msra.mxu0 %v1412
        %1418 = vmatprep.subr.bf16.mxu0 0
        %1419 = vmatpush1.bf16.msra.mxu0 %v1413
        %1420 = vmatprep.subr.bf16.mxu0 0
        %1421 = vmatpush1.bf16.msra.mxu0 0
        %1422 = vmatprep.subr.bf16.mxu0 0
        %1423 = vmatpush1.bf16.msra.mxu0 0
        %1424 = vmatprep.subr.bf16.mxu0 0
        %1425 = vmatpush1.bf16.msra.mxu0 0
        %1426 = vmatprep.subr.bf16.mxu0 0
        %1427 = vmatpush1.bf16.msra.mxu0 0
        %1428 = vmatprep.subr.bf16.mxu0 0
        %1429 = vmatpush1.bf16.msra.mxu0 0
        %1430 = vmatprep.subr.bf16.mxu0 0
        %1431 = vmatpush1.bf16.msra.mxu0 0
        %1432 = vmatprep.subr.bf16.mxu0 0
        %1433 = vmatpush1.bf16.msra.mxu0 0
        %1434 = vmatprep.subr.bf16.mxu0 0
        %1435 = vmatpush1.bf16.msra.mxu0 0
        %1436 = vmatprep.subr.bf16.mxu0 0
        %1437 = vmatpush1.bf16.msra.mxu0 0
        %1438 = vmatprep.subr.bf16.mxu0 0
        %1439 = vmatpush1.bf16.msra.mxu0 0
        %1440 = vmatprep.subr.bf16.mxu0 0
        %1441 = vmatpush1.bf16.msra.mxu0 0
        %1442 = vmatprep.subr.bf16.mxu0 0
        %1443 = vmatpush1.bf16.msra.mxu0 0
        %1444 = vmatprep.subr.bf16.mxu0 0
        %1445 = vmatpush1.bf16.msra.mxu0 0
        %1446 = vmatprep.subr.bf16.mxu0 0
        %1447 = vmatpush1.bf16.msra.mxu0 0
        %1448 = vmatprep.mubr.bf16.mxu0 0
        %1449 = vmatmul.mubr.bf16.gmra.mrb[0].mxu0 %v1026
        %v1450 = vpop.f32.mrb[0].mxu0
        %v1451 = vadd.f32 %v1243, %v1450
        %v1452 = vpop.f32.mrb[0].mxu0
        %v1453 = vpop.f32.mrb[0].mxu0
        %v1454 = vpop.f32.mrb[0].mxu0
        %1455 = vdwg.mxu0
        %v1460 = vlaneseq
        %v1461 = vshrl.u32 %v1460, 7
        %v1462 = vsub.s32 0, %v1461
        %v1463 = vrot.slane %v983, %v1462
        %v1464 = vlaneseq
        %v1465 = vshrl.u32 %v1464, 7
        %v1466 = vsub.s32 0, %v1465
        %v1467 = vrot.slane %v984, %v1466
        %v1468 = vlaneseq
        %v1469 = vshrl.u32 %v1468, 7
        %v1470 = vsub.s32 0, %v1469
        %v1471 = vrot.slane %v985, %v1470
        %v1472 = vlaneseq
        %v1473 = vshrl.u32 %v1472, 7
        %v1474 = vsub.s32 0, %v1473
        %v1475 = vrot.slane %v986, %v1474
        %v1484 = vunpack.c.l.b16 %v959
        %v1485 = vunpack.c.l.b16 %v960
        %v1486 = vunpack.c.l.b16 %v961
        %v1487 = vunpack.c.l.b16 %v962
        %v1488 = vpack.c.b16 %v1485, %v1484
        %v1489 = vpack.c.b16 %v1487, %v1486
        %1492 = vmatprep.subr.bf16.mxu0 0
        %1493 = vmatpush1.bf16.msra.mxu0 %v1488
        %1494 = vmatprep.subr.bf16.mxu0 0
        %1495 = vmatpush1.bf16.msra.mxu0 %v1489
        %1496 = vmatprep.subr.bf16.mxu0 0
        %1497 = vmatpush1.bf16.msra.mxu0 0
        %1498 = vmatprep.subr.bf16.mxu0 0
        %1499 = vmatpush1.bf16.msra.mxu0 0
        %1500 = vmatprep.subr.bf16.mxu0 0
        %1501 = vmatpush1.bf16.msra.mxu0 0
        %1502 = vmatprep.subr.bf16.mxu0 0
        %1503 = vmatpush1.bf16.msra.mxu0 0
        %1504 = vmatprep.subr.bf16.mxu0 0
        %1505 = vmatpush1.bf16.msra.mxu0 0
        %1506 = vmatprep.subr.bf16.mxu0 0
        %1507 = vmatpush1.bf16.msra.mxu0 0
        %1508 = vmatprep.subr.bf16.mxu0 0
        %1509 = vmatpush1.bf16.msra.mxu0 0
        %1510 = vmatprep.subr.bf16.mxu0 0
        %1511 = vmatpush1.bf16.msra.mxu0 0
        %1512 = vmatprep.subr.bf16.mxu0 0
        %1513 = vmatpush1.bf16.msra.mxu0 0
        %1514 = vmatprep.subr.bf16.mxu0 0
        %1515 = vmatpush1.bf16.msra.mxu0 0
        %1516 = vmatprep.subr.bf16.mxu0 0
        %1517 = vmatpush1.bf16.msra.mxu0 0
        %1518 = vmatprep.subr.bf16.mxu0 0
        %1519 = vmatpush1.bf16.msra.mxu0 0
        %1520 = vmatprep.subr.bf16.mxu0 0
        %1521 = vmatpush1.bf16.msra.mxu0 0
        %1522 = vmatprep.subr.bf16.mxu0 0
        %1523 = vmatpush1.bf16.msra.mxu0 0
        %1524 = vmatprep.mubr.bf16.mxu0 0
        %1525 = vmatmul.mubr.bf16.gmra.mrb[0].mxu0 %v1026
        %v1526 = vpop.f32.mrb[0].mxu0
        %v1527 = vadd.f32 %v1463, %v1526
        %v1528 = vpop.f32.mrb[0].mxu0
        %v1529 = vpop.f32.mrb[0].mxu0
        %v1530 = vpop.f32.mrb[0].mxu0
        %1531 = vdwg.mxu0
        %v1536 = vunpack.c.l.b16 %v963
        %v1537 = vunpack.c.l.b16 %v964
        %v1538 = vunpack.c.l.b16 %v965
        %v1539 = vunpack.c.l.b16 %v966
        %v1540 = vpack.c.b16 %v1537, %v1536
        %v1541 = vpack.c.b16 %v1539, %v1538
        %1544 = vmatprep.subr.bf16.mxu0 0
        %1545 = vmatpush1.bf16.msra.mxu0 %v1540
        %1546 = vmatprep.subr.bf16.mxu0 0
        %1547 = vmatpush1.bf16.msra.mxu0 %v1541
        %1548 = vmatprep.subr.bf16.mxu0 0
        %1549 = vmatpush1.bf16.msra.mxu0 0
        %1550 = vmatprep.subr.bf16.mxu0 0
        %1551 = vmatpush1.bf16.msra.mxu0 0
        %1552 = vmatprep.subr.bf16.mxu0 0
        %1553 = vmatpush1.bf16.msra.mxu0 0
        %1554 = vmatprep.subr.bf16.mxu0 0
        %1555 = vmatpush1.bf16.msra.mxu0 0
        %1556 = vmatprep.subr.bf16.mxu0 0
        %1557 = vmatpush1.bf16.msra.mxu0 0
        %1558 = vmatprep.subr.bf16.mxu0 0
        %1559 = vmatpush1.bf16.msra.mxu0 0
        %1560 = vmatprep.subr.bf16.mxu0 0
        %1561 = vmatpush1.bf16.msra.mxu0 0
        %1562 = vmatprep.subr.bf16.mxu0 0
        %1563 = vmatpush1.bf16.msra.mxu0 0
        %1564 = vmatprep.subr.bf16.mxu0 0
        %1565 = vmatpush1.bf16.msra.mxu0 0
        %1566 = vmatprep.subr.bf16.mxu0 0
        %1567 = vmatpush1.bf16.msra.mxu0 0
        %1568 = vmatprep.subr.bf16.mxu0 0
        %1569 = vmatpush1.bf16.msra.mxu0 0
        %1570 = vmatprep.subr.bf16.mxu0 0
        %1571 = vmatpush1.bf16.msra.mxu0 0
        %1572 = vmatprep.subr.bf16.mxu0 0
        %1573 = vmatpush1.bf16.msra.mxu0 0
        %1574 = vmatprep.subr.bf16.mxu0 0
        %1575 = vmatpush1.bf16.msra.mxu0 0
        %1576 = vmatprep.mubr.bf16.mxu0 0
        %1577 = vmatmul.mubr.bf16.gmra.mrb[0].mxu0 %v1026
        %v1578 = vpop.f32.mrb[0].mxu0
        %v1579 = vadd.f32 %v1467, %v1578
        %v1580 = vpop.f32.mrb[0].mxu0
        %v1581 = vpop.f32.mrb[0].mxu0
        %v1582 = vpop.f32.mrb[0].mxu0
        %1583 = vdwg.mxu0
        %v1588 = vunpack.c.l.b16 %v967
        %v1589 = vunpack.c.l.b16 %v968
        %v1590 = vunpack.c.l.b16 %v969
        %v1591 = vunpack.c.l.b16 %v970
        %v1592 = vpack.c.b16 %v1589, %v1588
        %v1593 = vpack.c.b16 %v1591, %v1590
        %1596 = vmatprep.subr.bf16.mxu0 0
        %1597 = vmatpush1.bf16.msra.mxu0 %v1592
        %1598 = vmatprep.subr.bf16.mxu0 0
        %1599 = vmatpush1.bf16.msra.mxu0 %v1593
        %1600 = vmatprep.subr.bf16.mxu0 0
        %1601 = vmatpush1.bf16.msra.mxu0 0
        %1602 = vmatprep.subr.bf16.mxu0 0
        %1603 = vmatpush1.bf16.msra.mxu0 0
        %1604 = vmatprep.subr.bf16.mxu0 0
        %1605 = vmatpush1.bf16.msra.mxu0 0
        %1606 = vmatprep.subr.bf16.mxu0 0
        %1607 = vmatpush1.bf16.msra.mxu0 0
        %1608 = vmatprep.subr.bf16.mxu0 0
        %1609 = vmatpush1.bf16.msra.mxu0 0
        %1610 = vmatprep.subr.bf16.mxu0 0
        %1611 = vmatpush1.bf16.msra.mxu0 0
        %1612 = vmatprep.subr.bf16.mxu0 0
        %1613 = vmatpush1.bf16.msra.mxu0 0
        %1614 = vmatprep.subr.bf16.mxu0 0
        %1615 = vmatpush1.bf16.msra.mxu0 0
        %1616 = vmatprep.subr.bf16.mxu0 0
        %1617 = vmatpush1.bf16.msra.mxu0 0
        %1618 = vmatprep.subr.bf16.mxu0 0
        %1619 = vmatpush1.bf16.msra.mxu0 0
        %1620 = vmatprep.subr.bf16.mxu0 0
        %1621 = vmatpush1.bf16.msra.mxu0 0
        %1622 = vmatprep.subr.bf16.mxu0 0
        %1623 = vmatpush1.bf16.msra.mxu0 0
        %1624 = vmatprep.subr.bf16.mxu0 0
        %1625 = vmatpush1.bf16.msra.mxu0 0
        %1626 = vmatprep.subr.bf16.mxu0 0
        %1627 = vmatpush1.bf16.msra.mxu0 0
        %1628 = vmatprep.mubr.bf16.mxu0 0
        %1629 = vmatmul.mubr.bf16.gmra.mrb[0].mxu0 %v1026
        %v1630 = vpop.f32.mrb[0].mxu0
        %v1631 = vadd.f32 %v1471, %v1630
        %v1632 = vpop.f32.mrb[0].mxu0
        %v1633 = vpop.f32.mrb[0].mxu0
        %v1634 = vpop.f32.mrb[0].mxu0
        %1635 = vdwg.mxu0
        %v1640 = vunpack.c.l.b16 %v971
        %v1641 = vunpack.c.l.b16 %v972
        %v1642 = vunpack.c.l.b16 %v973
        %v1643 = vunpack.c.l.b16 %v974
        %v1644 = vpack.c.b16 %v1641, %v1640
        %v1645 = vpack.c.b16 %v1643, %v1642
        %1648 = vmatprep.subr.bf16.mxu0 0
        %1649 = vmatpush1.bf16.msra.mxu0 %v1644
        %1650 = vmatprep.subr.bf16.mxu0 0
        %1651 = vmatpush1.bf16.msra.mxu0 %v1645
        %1652 = vmatprep.subr.bf16.mxu0 0
        %1653 = vmatpush1.bf16.msra.mxu0 0
        %1654 = vmatprep.subr.bf16.mxu0 0
        %1655 = vmatpush1.bf16.msra.mxu0 0
        %1656 = vmatprep.subr.bf16.mxu0 0
        %1657 = vmatpush1.bf16.msra.mxu0 0
        %1658 = vmatprep.subr.bf16.mxu0 0
        %1659 = vmatpush1.bf16.msra.mxu0 0
        %1660 = vmatprep.subr.bf16.mxu0 0
        %1661 = vmatpush1.bf16.msra.mxu0 0
        %1662 = vmatprep.subr.bf16.mxu0 0
        %1663 = vmatpush1.bf16.msra.mxu0 0
        %1664 = vmatprep.subr.bf16.mxu0 0
        %1665 = vmatpush1.bf16.msra.mxu0 0
        %1666 = vmatprep.subr.bf16.mxu0 0
        %1667 = vmatpush1.bf16.msra.mxu0 0
        %1668 = vmatprep.subr.bf16.mxu0 0
        %1669 = vmatpush1.bf16.msra.mxu0 0
        %1670 = vmatprep.subr.bf16.mxu0 0
        %1671 = vmatpush1.bf16.msra.mxu0 0
        %1672 = vmatprep.subr.bf16.mxu0 0
        %1673 = vmatpush1.bf16.msra.mxu0 0
        %1674 = vmatprep.subr.bf16.mxu0 0
        %1675 = vmatpush1.bf16.msra.mxu0 0
        %1676 = vmatprep.subr.bf16.mxu0 0
        %1677 = vmatpush1.bf16.msra.mxu0 0
        %1678 = vmatprep.subr.bf16.mxu0 0
        %1679 = vmatpush1.bf16.msra.mxu0 0
        %1680 = vmatprep.mubr.bf16.mxu0 0
        %1681 = vmatmul.mubr.bf16.gmra.mrb[0].mxu0 %v1026
        %v1682 = vpop.f32.mrb[0].mxu0
        %v1683 = vadd.f32 %v1475, %v1682
        %v1684 = vpop.f32.mrb[0].mxu0
        %v1685 = vpop.f32.mrb[0].mxu0
        %v1686 = vpop.f32.mrb[0].mxu0
        %1687 = vdwg.mxu0
        %v1688 = vld [vmem:[%s864] sm:$0xf]
        %v1689 = vld [vmem:[%s864 + $0x4] sm:$0xf]
        %v1690 = vld [vmem:[%s864 + $0x8] sm:$0xf]
        %v1691 = vld [vmem:[%s864 + $0xc] sm:$0xf]
        %v1692 = vld [vmem:[%s867] sm:$0x1]
        %v1693 = vpack.c.bf16 %v1063, %v1063
        %v1694 = vpack.c.bf16 %v1115, %v1115
        %v1695 = vpack.c.bf16 %v1167, %v1167
        %v1696 = vpack.c.bf16 %v1219, %v1219
        %v1697 = vpack.c.bf16 %v1295, %v1295
        %v1698 = vpack.c.bf16 %v1347, %v1347
        %v1699 = vpack.c.bf16 %v1399, %v1399
        %v1700 = vpack.c.bf16 %v1451, %v1451
        %vm1701 = vcmask 64512
        %v1703 = vsel %vm1701, %v1693, 0
        %v1706 = vsel %vm1701, %v1697, 0
        %1708 = vmatprep.subr.bf16.mxu0 0
        %1709 = vmatpush1.bf16.xpose.msra.mxu0 %v1706
        %1710 = vmatprep.subr.bf16.mxu0 0
        %1711 = vmatpush1.bf16.xpose.msra.mxu0 0
        %1712 = vmatprep.subr.bf16.mxu0 0
        %1713 = vmatpush1.bf16.xpose.msra.mxu0 0
        %1714 = vmatprep.subr.bf16.mxu0 0
        %1715 = vmatpush1.bf16.xpose.msra.mxu0 0
        %1716 = vmatprep.subr.bf16.mxu0 0
        %1717 = vmatpush1.bf16.xpose.msra.mxu0 0
        %1718 = vmatprep.subr.bf16.mxu0 0
        %1719 = vmatpush1.bf16.xpose.msra.mxu0 0
        %1720 = vmatprep.subr.bf16.mxu0 0
        %1721 = vmatpush1.bf16.xpose.msra.mxu0 0
        %1722 = vmatprep.subr.bf16.mxu0 0
        %1723 = vmatpush1.bf16.xpose.msra.mxu0 0
        %1724 = vmatprep.subr.bf16.mxu0 0
        %1725 = vmatpush1.bf16.xpose.msra.mxu0 0
        %1726 = vmatprep.subr.bf16.mxu0 0
        %1727 = vmatpush1.bf16.xpose.msra.mxu0 0
        %1728 = vmatprep.subr.bf16.mxu0 0
        %1729 = vmatpush1.bf16.xpose.msra.mxu0 0
        %1730 = vmatprep.subr.bf16.mxu0 0
        %1731 = vmatpush1.bf16.xpose.msra.mxu0 0
        %1732 = vmatprep.subr.bf16.mxu0 0
        %1733 = vmatpush1.bf16.xpose.msra.mxu0 0
        %1734 = vmatprep.subr.bf16.mxu0 0
        %1735 = vmatpush1.bf16.xpose.msra.mxu0 0
        %1736 = vmatprep.subr.bf16.mxu0 0
        %1737 = vmatpush1.bf16.xpose.msra.mxu0 0
        %1738 = vmatprep.subr.bf16.mxu0 0
        %1739 = vmatpush1.bf16.xpose.msra.mxu0 0
        %1740 = vmatprep.mubr.bf16.mxu0 0
        %1741 = vmatmul.mubr.bf16.gmra.mrb[0].mxu0 %v1703
        %v1742 = vpop.f32.mrb[0].mxu0
        %v1743 = vadd.f32 0.0, %v1742
        %v1744 = vpop.f32.mrb[0].mxu0
        %v1745 = vpop.f32.mrb[0].mxu0
        %v1746 = vpop.f32.mrb[0].mxu0
        %1747 = vdwg.mxu0
        %v1749 = vsel %vm1701, %v1694, 0
        %v1752 = vsel %vm1701, %v1698, 0
        %1754 = vmatprep.subr.bf16.mxu0 0
        %1755 = vmatpush1.bf16.xpose.msra.mxu0 %v1752
        %1756 = vmatprep.subr.bf16.mxu0 0
        %1757 = vmatpush1.bf16.xpose.msra.mxu0 0
        %1758 = vmatprep.subr.bf16.mxu0 0
        %1759 = vmatpush1.bf16.xpose.msra.mxu0 0
        %1760 = vmatprep.subr.bf16.mxu0 0
        %1761 = vmatpush1.bf16.xpose.msra.mxu0 0
        %1762 = vmatprep.subr.bf16.mxu0 0
        %1763 = vmatpush1.bf16.xpose.msra.mxu0 0
        %1764 = vmatprep.subr.bf16.mxu0 0
        %1765 = vmatpush1.bf16.xpose.msra.mxu0 0
        %1766 = vmatprep.subr.bf16.mxu0 0
        %1767 = vmatpush1.bf16.xpose.msra.mxu0 0
        %1768 = vmatprep.subr.bf16.mxu0 0
        %1769 = vmatpush1.bf16.xpose.msra.mxu0 0
        %1770 = vmatprep.subr.bf16.mxu0 0
        %1771 = vmatpush1.bf16.xpose.msra.mxu0 0
        %1772 = vmatprep.subr.bf16.mxu0 0
        %1773 = vmatpush1.bf16.xpose.msra.mxu0 0
        %1774 = vmatprep.subr.bf16.mxu0 0
        %1775 = vmatpush1.bf16.xpose.msra.mxu0 0
        %1776 = vmatprep.subr.bf16.mxu0 0
        %1777 = vmatpush1.bf16.xpose.msra.mxu0 0
        %1778 = vmatprep.subr.bf16.mxu0 0
        %1779 = vmatpush1.bf16.xpose.msra.mxu0 0
        %1780 = vmatprep.subr.bf16.mxu0 0
        %1781 = vmatpush1.bf16.xpose.msra.mxu0 0
        %1782 = vmatprep.subr.bf16.mxu0 0
        %1783 = vmatpush1.bf16.xpose.msra.mxu0 0
        %1784 = vmatprep.subr.bf16.mxu0 0
        %1785 = vmatpush1.bf16.xpose.msra.mxu0 0
        %1786 = vmatprep.mubr.bf16.mxu0 0
        %1787 = vmatmul.mubr.bf16.gmra.mrb[0].mxu0 %v1749
        %v1788 = vpop.f32.mrb[0].mxu0
        %v1789 = vadd.f32 0.0, %v1788
        %v1790 = vpop.f32.mrb[0].mxu0
        %v1791 = vpop.f32.mrb[0].mxu0
        %v1792 = vpop.f32.mrb[0].mxu0
        %1793 = vdwg.mxu0
        %v1795 = vsel %vm1701, %v1695, 0
        %v1798 = vsel %vm1701, %v1699, 0
        %1800 = vmatprep.subr.bf16.mxu0 0
        %1801 = vmatpush1.bf16.xpose.msra.mxu0 %v1798
        %1802 = vmatprep.subr.bf16.mxu0 0
        %1803 = vmatpush1.bf16.xpose.msra.mxu0 0
        %1804 = vmatprep.subr.bf16.mxu0 0
        %1805 = vmatpush1.bf16.xpose.msra.mxu0 0
        %1806 = vmatprep.subr.bf16.mxu0 0
        %1807 = vmatpush1.bf16.xpose.msra.mxu0 0
        %1808 = vmatprep.subr.bf16.mxu0 0
        %1809 = vmatpush1.bf16.xpose.msra.mxu0 0
        %1810 = vmatprep.subr.bf16.mxu0 0
        %1811 = vmatpush1.bf16.xpose.msra.mxu0 0
        %1812 = vmatprep.subr.bf16.mxu0 0
        %1813 = vmatpush1.bf16.xpose.msra.mxu0 0
        %1814 = vmatprep.subr.bf16.mxu0 0
        %1815 = vmatpush1.bf16.xpose.msra.mxu0 0
        %1816 = vmatprep.subr.bf16.mxu0 0
        %1817 = vmatpush1.bf16.xpose.msra.mxu0 0
        %1818 = vmatprep.subr.bf16.mxu0 0
        %1819 = vmatpush1.bf16.xpose.msra.mxu0 0
        %1820 = vmatprep.subr.bf16.mxu0 0
        %1821 = vmatpush1.bf16.xpose.msra.mxu0 0
        %1822 = vmatprep.subr.bf16.mxu0 0
        %1823 = vmatpush1.bf16.xpose.msra.mxu0 0
        %1824 = vmatprep.subr.bf16.mxu0 0
        %1825 = vmatpush1.bf16.xpose.msra.mxu0 0
        %1826 = vmatprep.subr.bf16.mxu0 0
        %1827 = vmatpush1.bf16.xpose.msra.mxu0 0
        %1828 = vmatprep.subr.bf16.mxu0 0
        %1829 = vmatpush1.bf16.xpose.msra.mxu0 0
        %1830 = vmatprep.subr.bf16.mxu0 0
        %1831 = vmatpush1.bf16.xpose.msra.mxu0 0
        %1832 = vmatprep.mubr.bf16.mxu0 0
        %1833 = vmatmul.mubr.bf16.gmra.mrb[0].mxu0 %v1795
        %v1834 = vpop.f32.mrb[0].mxu0
        %v1835 = vadd.f32 0.0, %v1834
        %v1836 = vpop.f32.mrb[0].mxu0
        %v1837 = vpop.f32.mrb[0].mxu0
        %v1838 = vpop.f32.mrb[0].mxu0
        %1839 = vdwg.mxu0
        %v1841 = vsel %vm1701, %v1696, 0
        %v1844 = vsel %vm1701, %v1700, 0
        %1846 = vmatprep.subr.bf16.mxu0 0
        %1847 = vmatpush1.bf16.xpose.msra.mxu0 %v1844
        %1848 = vmatprep.subr.bf16.mxu0 0
        %1849 = vmatpush1.bf16.xpose.msra.mxu0 0
        %1850 = vmatprep.subr.bf16.mxu0 0
        %1851 = vmatpush1.bf16.xpose.msra.mxu0 0
        %1852 = vmatprep.subr.bf16.mxu0 0
        %1853 = vmatpush1.bf16.xpose.msra.mxu0 0
        %1854 = vmatprep.subr.bf16.mxu0 0
        %1855 = vmatpush1.bf16.xpose.msra.mxu0 0
        %1856 = vmatprep.subr.bf16.mxu0 0
        %1857 = vmatpush1.bf16.xpose.msra.mxu0 0
        %1858 = vmatprep.subr.bf16.mxu0 0
        %1859 = vmatpush1.bf16.xpose.msra.mxu0 0
        %1860 = vmatprep.subr.bf16.mxu0 0
        %1861 = vmatpush1.bf16.xpose.msra.mxu0 0
        %1862 = vmatprep.subr.bf16.mxu0 0
        %1863 = vmatpush1.bf16.xpose.msra.mxu0 0
        %1864 = vmatprep.subr.bf16.mxu0 0
        %1865 = vmatpush1.bf16.xpose.msra.mxu0 0
        %1866 = vmatprep.subr.bf16.mxu0 0
        %1867 = vmatpush1.bf16.xpose.msra.mxu0 0
        %1868 = vmatprep.subr.bf16.mxu0 0
        %1869 = vmatpush1.bf16.xpose.msra.mxu0 0
        %1870 = vmatprep.subr.bf16.mxu0 0
        %1871 = vmatpush1.bf16.xpose.msra.mxu0 0
        %1872 = vmatprep.subr.bf16.mxu0 0
        %1873 = vmatpush1.bf16.xpose.msra.mxu0 0
        %1874 = vmatprep.subr.bf16.mxu0 0
        %1875 = vmatpush1.bf16.xpose.msra.mxu0 0
        %1876 = vmatprep.subr.bf16.mxu0 0
        %1877 = vmatpush1.bf16.xpose.msra.mxu0 0
        %1878 = vmatprep.mubr.bf16.mxu0 0
        %1879 = vmatmul.mubr.bf16.gmra.mrb[0].mxu0 %v1841
        %v1880 = vpop.f32.mrb[0].mxu0
        %v1881 = vadd.f32 0.0, %v1880
        %v1882 = vpop.f32.mrb[0].mxu0
        %v1883 = vpop.f32.mrb[0].mxu0
        %v1884 = vpop.f32.mrb[0].mxu0
        %1885 = vdwg.mxu0
        %v1886 = vsel %vm1701, %v1743, -inf
        %1887 = vmax.xlane.f32.xlu0 %v1886
        %v1888 = vpop.xlane.xlu0 %1887
        %v1889 = vsel %vm1701, %v1789, -inf
        %1890 = vmax.xlane.f32.xlu0 %v1889
        %v1891 = vpop.xlane.xlu0 %1890
        %v1892 = vsel %vm1701, %v1835, -inf
        %1893 = vmax.xlane.f32.xlu0 %v1892
        %v1894 = vpop.xlane.xlu0 %1893
        %v1895 = vsel %vm1701, %v1881, -inf
        %1896 = vmax.xlane.f32.xlu0 %v1895
        %v1897 = vpop.xlane.xlu0 %1896
        %v1898 = vsub.f32 %v1743, %v1888
        %v1899 = vsub.f32 %v1789, %v1891
        %v1900 = vsub.f32 %v1835, %v1894
        %v1901 = vsub.f32 %v1881, %v1897
        %v1902 = vmul.f32 %v1898, 1.442695
        %v1903 = vpow.pop %v1902
        %v1904 = vmul.f32 %v1899, 1.442695
        %v1905 = vpow.pop %v1904
        %v1906 = vmul.f32 %v1900, 1.442695
        %v1907 = vpow.pop %v1906
        %v1908 = vmul.f32 %v1901, 1.442695
        %v1909 = vpow.pop %v1908
        %v1910 = vsel %vm1701, %v1903, 0.0
        %1911 = vadd.xlane.f32.xlu0 %v1910
        %v1912 = vpop.xlane.xlu0 %1911
        %v1913 = vsel %vm1701, %v1905, 0.0
        %1914 = vadd.xlane.f32.xlu0 %v1913
        %v1915 = vpop.xlane.xlu0 %1914
        %v1916 = vsel %vm1701, %v1907, 0.0
        %1917 = vadd.xlane.f32.xlu0 %v1916
        %v1918 = vpop.xlane.xlu0 %1917
        %v1919 = vsel %vm1701, %v1909, 0.0
        %1920 = vadd.xlane.f32.xlu0 %v1919
        %v1921 = vpop.xlane.xlu0 %1920
        %v1922 = vrcp.pop %v1912
        %v1923 = vrcp.pop %v1915
        %v1924 = vrcp.pop %v1918
        %v1925 = vrcp.pop %v1921
        %v1926 = vmul.f32 %v1903, %v1922
        %v1927 = vmul.f32 %v1905, %v1923
        %v1928 = vmul.f32 %v1907, %v1924
        %v1929 = vmul.f32 %v1909, %v1925
        %v1930 = vpack.c.bf16 %v1926, %v1926
        %v1931 = vpack.c.bf16 %v1927, %v1927
        %v1932 = vpack.c.bf16 %v1928, %v1928
        %v1933 = vpack.c.bf16 %v1929, %v1929
        %v1934 = vpack.c.bf16 %v1527, %v1527
        %v1935 = vpack.c.bf16 %v1579, %v1579
        %v1936 = vpack.c.bf16 %v1631, %v1631
        %v1937 = vpack.c.bf16 %v1683, %v1683
        %v1939 = vsel %vm1701, %v1930, 0
        %vm1941 = vcmask 1043456
        %v1943 = vsel %vm1941, %v1934, 0
        %1945 = vmatprep.subr.bf16.mxu0 0
        %1946 = vmatpush1.bf16.msra.mxu0 %v1943
        %1947 = vmatprep.subr.bf16.mxu0 0
        %1948 = vmatpush1.bf16.msra.mxu0 0
        %1949 = vmatprep.subr.bf16.mxu0 0
        %1950 = vmatpush1.bf16.msra.mxu0 0
        %1951 = vmatprep.subr.bf16.mxu0 0
        %1952 = vmatpush1.bf16.msra.mxu0 0
        %1953 = vmatprep.subr.bf16.mxu0 0
        %1954 = vmatpush1.bf16.msra.mxu0 0
        %1955 = vmatprep.subr.bf16.mxu0 0
        %1956 = vmatpush1.bf16.msra.mxu0 0
        %1957 = vmatprep.subr.bf16.mxu0 0
        %1958 = vmatpush1.bf16.msra.mxu0 0
        %1959 = vmatprep.subr.bf16.mxu0 0
        %1960 = vmatpush1.bf16.msra.mxu0 0
        %1961 = vmatprep.subr.bf16.mxu0 0
        %1962 = vmatpush1.bf16.msra.mxu0 0
        %1963 = vmatprep.subr.bf16.mxu0 0
        %1964 = vmatpush1.bf16.msra.mxu0 0
        %1965 = vmatprep.subr.bf16.mxu0 0
        %1966 = vmatpush1.bf16.msra.mxu0 0
        %1967 = vmatprep.subr.bf16.mxu0 0
        %1968 = vmatpush1.bf16.msra.mxu0 0
        %1969 = vmatprep.subr.bf16.mxu0 0
        %1970 = vmatpush1.bf16.msra.mxu0 0
        %1971 = vmatprep.subr.bf16.mxu0 0
        %1972 = vmatpush1.bf16.msra.mxu0 0
        %1973 = vmatprep.subr.bf16.mxu0 0
        %1974 = vmatpush1.bf16.msra.mxu0 0
        %1975 = vmatprep.subr.bf16.mxu0 0
        %1976 = vmatpush1.bf16.msra.mxu0 0
        %1977 = vmatprep.mubr.bf16.mxu0 0
        %1978 = vmatmul.mubr.bf16.gmra.mrb[0].mxu0 %v1939
        %v1979 = vpop.f32.mrb[0].mxu0
        %v1980 = vadd.f32 0.0, %v1979
        %v1981 = vpop.f32.mrb[0].mxu0
        %v1982 = vpop.f32.mrb[0].mxu0
        %v1983 = vpop.f32.mrb[0].mxu0
        %1984 = vdwg.mxu0
        %v1986 = vsel %vm1701, %v1931, 0
        %v1989 = vsel %vm1941, %v1935, 0
        %1991 = vmatprep.subr.bf16.mxu0 0
        %1992 = vmatpush1.bf16.msra.mxu0 %v1989
        %1993 = vmatprep.subr.bf16.mxu0 0
        %1994 = vmatpush1.bf16.msra.mxu0 0
        %1995 = vmatprep.subr.bf16.mxu0 0
        %1996 = vmatpush1.bf16.msra.mxu0 0
        %1997 = vmatprep.subr.bf16.mxu0 0
        %1998 = vmatpush1.bf16.msra.mxu0 0
        %1999 = vmatprep.subr.bf16.mxu0 0
        %2000 = vmatpush1.bf16.msra.mxu0 0
        %2001 = vmatprep.subr.bf16.mxu0 0
        %2002 = vmatpush1.bf16.msra.mxu0 0
        %2003 = vmatprep.subr.bf16.mxu0 0
        %2004 = vmatpush1.bf16.msra.mxu0 0
        %2005 = vmatprep.subr.bf16.mxu0 0
        %2006 = vmatpush1.bf16.msra.mxu0 0
        %2007 = vmatprep.subr.bf16.mxu0 0
        %2008 = vmatpush1.bf16.msra.mxu0 0
        %2009 = vmatprep.subr.bf16.mxu0 0
        %2010 = vmatpush1.bf16.msra.mxu0 0
        %2011 = vmatprep.subr.bf16.mxu0 0
        %2012 = vmatpush1.bf16.msra.mxu0 0
        %2013 = vmatprep.subr.bf16.mxu0 0
        %2014 = vmatpush1.bf16.msra.mxu0 0
        %2015 = vmatprep.subr.bf16.mxu0 0
        %2016 = vmatpush1.bf16.msra.mxu0 0
        %2017 = vmatprep.subr.bf16.mxu0 0
        %2018 = vmatpush1.bf16.msra.mxu0 0
        %2019 = vmatprep.subr.bf16.mxu0 0
        %2020 = vmatpush1.bf16.msra.mxu0 0
        %2021 = vmatprep.subr.bf16.mxu0 0
        %2022 = vmatpush1.bf16.msra.mxu0 0
        %2023 = vmatprep.mubr.bf16.mxu0 0
        %2024 = vmatmul.mubr.bf16.gmra.mrb[0].mxu0 %v1986
        %v2025 = vpop.f32.mrb[0].mxu0
        %v2026 = vadd.f32 0.0, %v2025
        %v2027 = vpop.f32.mrb[0].mxu0
        %v2028 = vpop.f32.mrb[0].mxu0
        %v2029 = vpop.f32.mrb[0].mxu0
        %2030 = vdwg.mxu0
        %v2032 = vsel %vm1701, %v1932, 0
        %v2035 = vsel %vm1941, %v1936, 0
        %2037 = vmatprep.subr.bf16.mxu0 0
        %2038 = vmatpush1.bf16.msra.mxu0 %v2035
        %2039 = vmatprep.subr.bf16.mxu0 0
        %2040 = vmatpush1.bf16.msra.mxu0 0
        %2041 = vmatprep.subr.bf16.mxu0 0
        %2042 = vmatpush1.bf16.msra.mxu0 0
        %2043 = vmatprep.subr.bf16.mxu0 0
        %2044 = vmatpush1.bf16.msra.mxu0 0
        %2045 = vmatprep.subr.bf16.mxu0 0
        %2046 = vmatpush1.bf16.msra.mxu0 0
        %2047 = vmatprep.subr.bf16.mxu0 0
        %2048 = vmatpush1.bf16.msra.mxu0 0
        %2049 = vmatprep.subr.bf16.mxu0 0
        %2050 = vmatpush1.bf16.msra.mxu0 0
        %2051 = vmatprep.subr.bf16.mxu0 0
        %2052 = vmatpush1.bf16.msra.mxu0 0
        %2053 = vmatprep.subr.bf16.mxu0 0
        %2054 = vmatpush1.bf16.msra.mxu0 0
        %2055 = vmatprep.subr.bf16.mxu0 0
        %2056 = vmatpush1.bf16.msra.mxu0 0
        %2057 = vmatprep.subr.bf16.mxu0 0
        %2058 = vmatpush1.bf16.msra.mxu0 0
        %2059 = vmatprep.subr.bf16.mxu0 0
        %2060 = vmatpush1.bf16.msra.mxu0 0
        %2061 = vmatprep.subr.bf16.mxu0 0
        %2062 = vmatpush1.bf16.msra.mxu0 0
        %2063 = vmatprep.subr.bf16.mxu0 0
        %2064 = vmatpush1.bf16.msra.mxu0 0
        %2065 = vmatprep.subr.bf16.mxu0 0
        %2066 = vmatpush1.bf16.msra.mxu0 0
        %2067 = vmatprep.subr.bf16.mxu0 0
        %2068 = vmatpush1.bf16.msra.mxu0 0
        %2069 = vmatprep.mubr.bf16.mxu0 0
        %2070 = vmatmul.mubr.bf16.gmra.mrb[0].mxu0 %v2032
        %v2071 = vpop.f32.mrb[0].mxu0
        %v2072 = vadd.f32 0.0, %v2071
        %v2073 = vpop.f32.mrb[0].mxu0
        %v2074 = vpop.f32.mrb[0].mxu0
        %v2075 = vpop.f32.mrb[0].mxu0
        %2076 = vdwg.mxu0
        %v2078 = vsel %vm1701, %v1933, 0
        %v2081 = vsel %vm1941, %v1937, 0
        %2083 = vmatprep.subr.bf16.mxu0 0
        %2084 = vmatpush1.bf16.msra.mxu0 %v2081
        %2085 = vmatprep.subr.bf16.mxu0 0
        %2086 = vmatpush1.bf16.msra.mxu0 0
        %2087 = vmatprep.subr.bf16.mxu0 0
        %2088 = vmatpush1.bf16.msra.mxu0 0
        %2089 = vmatprep.subr.bf16.mxu0 0
        %2090 = vmatpush1.bf16.msra.mxu0 0
        %2091 = vmatprep.subr.bf16.mxu0 0
        %2092 = vmatpush1.bf16.msra.mxu0 0
        %2093 = vmatprep.subr.bf16.mxu0 0
        %2094 = vmatpush1.bf16.msra.mxu0 0
        %2095 = vmatprep.subr.bf16.mxu0 0
        %2096 = vmatpush1.bf16.msra.mxu0 0
        %2097 = vmatprep.subr.bf16.mxu0 0
        %2098 = vmatpush1.bf16.msra.mxu0 0
        %2099 = vmatprep.subr.bf16.mxu0 0
        %2100 = vmatpush1.bf16.msra.mxu0 0
        %2101 = vmatprep.subr.bf16.mxu0 0
        %2102 = vmatpush1.bf16.msra.mxu0 0
        %2103 = vmatprep.subr.bf16.mxu0 0
        %2104 = vmatpush1.bf16.msra.mxu0 0
        %2105 = vmatprep.subr.bf16.mxu0 0
        %2106 = vmatpush1.bf16.msra.mxu0 0
        %2107 = vmatprep.subr.bf16.mxu0 0
        %2108 = vmatpush1.bf16.msra.mxu0 0
        %2109 = vmatprep.subr.bf16.mxu0 0
        %2110 = vmatpush1.bf16.msra.mxu0 0
        %2111 = vmatprep.subr.bf16.mxu0 0
        %2112 = vmatpush1.bf16.msra.mxu0 0
        %2113 = vmatprep.subr.bf16.mxu0 0
        %2114 = vmatpush1.bf16.msra.mxu0 0
        %2115 = vmatprep.mubr.bf16.mxu0 0
        %2116 = vmatmul.mubr.bf16.gmra.mrb[0].mxu0 %v2078
        %v2117 = vpop.f32.mrb[0].mxu0
        %v2118 = vadd.f32 0.0, %v2117
        %v2119 = vpop.f32.mrb[0].mxu0
        %v2120 = vpop.f32.mrb[0].mxu0
        %v2121 = vpop.f32.mrb[0].mxu0
        %2122 = vdwg.mxu0
        %v2123 = vpack.c.bf16 %v1980, %v1980
        %v2124 = vpack.c.bf16 %v2026, %v2026
        %v2125 = vpack.c.bf16 %v2072, %v2072
        %v2126 = vpack.c.bf16 %v2118, %v2118
        %v2128 = vsel %vm1701, %v2123, 0
        %v2131 = vsel %vm1941, %v1688, 0
        %2133 = vmatprep.subr.bf16.mxu0 0
        %2134 = vmatpush1.bf16.msra.mxu0 %v2131
        %2135 = vmatprep.subr.bf16.mxu0 0
        %2136 = vmatpush1.bf16.msra.mxu0 0
        %2137 = vmatprep.subr.bf16.mxu0 0
        %2138 = vmatpush1.bf16.msra.mxu0 0
        %2139 = vmatprep.subr.bf16.mxu0 0
        %2140 = vmatpush1.bf16.msra.mxu0 0
        %2141 = vmatprep.subr.bf16.mxu0 0
        %2142 = vmatpush1.bf16.msra.mxu0 0
        %2143 = vmatprep.subr.bf16.mxu0 0
        %2144 = vmatpush1.bf16.msra.mxu0 0
        %2145 = vmatprep.subr.bf16.mxu0 0
        %2146 = vmatpush1.bf16.msra.mxu0 0
        %2147 = vmatprep.subr.bf16.mxu0 0
        %2148 = vmatpush1.bf16.msra.mxu0 0
        %2149 = vmatprep.subr.bf16.mxu0 0
        %2150 = vmatpush1.bf16.msra.mxu0 0
        %2151 = vmatprep.subr.bf16.mxu0 0
        %2152 = vmatpush1.bf16.msra.mxu0 0
        %2153 = vmatprep.subr.bf16.mxu0 0
        %2154 = vmatpush1.bf16.msra.mxu0 0
        %2155 = vmatprep.subr.bf16.mxu0 0
        %2156 = vmatpush1.bf16.msra.mxu0 0
        %2157 = vmatprep.subr.bf16.mxu0 0
        %2158 = vmatpush1.bf16.msra.mxu0 0
        %2159 = vmatprep.subr.bf16.mxu0 0
        %2160 = vmatpush1.bf16.msra.mxu0 0
        %2161 = vmatprep.subr.bf16.mxu0 0
        %2162 = vmatpush1.bf16.msra.mxu0 0
        %2163 = vmatprep.subr.bf16.mxu0 0
        %2164 = vmatpush1.bf16.msra.mxu0 0
        %2165 = vmatprep.mubr.bf16.mxu0 0
        %2166 = vmatmul.mubr.bf16.gmra.mrb[0].mxu0 %v2128
        %v2167 = vpop.f32.mrb[0].mxu0
        %v2168 = vadd.f32 0.0, %v2167
        %v2169 = vpop.f32.mrb[0].mxu0
        %v2170 = vpop.f32.mrb[0].mxu0
        %v2171 = vpop.f32.mrb[0].mxu0
        %2172 = vdwg.mxu0
        %v2174 = vsel %vm1701, %v2124, 0
        %v2177 = vsel %vm1941, %v1689, 0
        %2179 = vmatprep.subr.bf16.mxu0 0
        %2180 = vmatpush1.bf16.msra.mxu0 %v2177
        %2181 = vmatprep.subr.bf16.mxu0 0
        %2182 = vmatpush1.bf16.msra.mxu0 0
        %2183 = vmatprep.subr.bf16.mxu0 0
        %2184 = vmatpush1.bf16.msra.mxu0 0
        %2185 = vmatprep.subr.bf16.mxu0 0
        %2186 = vmatpush1.bf16.msra.mxu0 0
        %2187 = vmatprep.subr.bf16.mxu0 0
        %2188 = vmatpush1.bf16.msra.mxu0 0
        %2189 = vmatprep.subr.bf16.mxu0 0
        %2190 = vmatpush1.bf16.msra.mxu0 0
        %2191 = vmatprep.subr.bf16.mxu0 0
        %2192 = vmatpush1.bf16.msra.mxu0 0
        %2193 = vmatprep.subr.bf16.mxu0 0
        %2194 = vmatpush1.bf16.msra.mxu0 0
        %2195 = vmatprep.subr.bf16.mxu0 0
        %2196 = vmatpush1.bf16.msra.mxu0 0
        %2197 = vmatprep.subr.bf16.mxu0 0
        %2198 = vmatpush1.bf16.msra.mxu0 0
        %2199 = vmatprep.subr.bf16.mxu0 0
        %2200 = vmatpush1.bf16.msra.mxu0 0
        %2201 = vmatprep.subr.bf16.mxu0 0
        %2202 = vmatpush1.bf16.msra.mxu0 0
        %2203 = vmatprep.subr.bf16.mxu0 0
        %2204 = vmatpush1.bf16.msra.mxu0 0
        %2205 = vmatprep.subr.bf16.mxu0 0
        %2206 = vmatpush1.bf16.msra.mxu0 0
        %2207 = vmatprep.subr.bf16.mxu0 0
        %2208 = vmatpush1.bf16.msra.mxu0 0
        %2209 = vmatprep.subr.bf16.mxu0 0
        %2210 = vmatpush1.bf16.msra.mxu0 0
        %2211 = vmatprep.mubr.bf16.mxu0 0
        %2212 = vmatmul.mubr.bf16.gmra.mrb[0].mxu0 %v2174
        %v2213 = vpop.f32.mrb[0].mxu0
        %v2214 = vadd.f32 0.0, %v2213
        %v2215 = vpop.f32.mrb[0].mxu0
        %v2216 = vpop.f32.mrb[0].mxu0
        %v2217 = vpop.f32.mrb[0].mxu0
        %2218 = vdwg.mxu0
        %v2220 = vsel %vm1701, %v2125, 0
        %v2223 = vsel %vm1941, %v1690, 0
        %2225 = vmatprep.subr.bf16.mxu0 0
        %2226 = vmatpush1.bf16.msra.mxu0 %v2223
        %2227 = vmatprep.subr.bf16.mxu0 0
        %2228 = vmatpush1.bf16.msra.mxu0 0
        %2229 = vmatprep.subr.bf16.mxu0 0
        %2230 = vmatpush1.bf16.msra.mxu0 0
        %2231 = vmatprep.subr.bf16.mxu0 0
        %2232 = vmatpush1.bf16.msra.mxu0 0
        %2233 = vmatprep.subr.bf16.mxu0 0
        %2234 = vmatpush1.bf16.msra.mxu0 0
        %2235 = vmatprep.subr.bf16.mxu0 0
        %2236 = vmatpush1.bf16.msra.mxu0 0
        %2237 = vmatprep.subr.bf16.mxu0 0
        %2238 = vmatpush1.bf16.msra.mxu0 0
        %2239 = vmatprep.subr.bf16.mxu0 0
        %2240 = vmatpush1.bf16.msra.mxu0 0
        %2241 = vmatprep.subr.bf16.mxu0 0
        %2242 = vmatpush1.bf16.msra.mxu0 0
        %2243 = vmatprep.subr.bf16.mxu0 0
        %2244 = vmatpush1.bf16.msra.mxu0 0
        %2245 = vmatprep.subr.bf16.mxu0 0
        %2246 = vmatpush1.bf16.msra.mxu0 0
        %2247 = vmatprep.subr.bf16.mxu0 0
        %2248 = vmatpush1.bf16.msra.mxu0 0
        %2249 = vmatprep.subr.bf16.mxu0 0
        %2250 = vmatpush1.bf16.msra.mxu0 0
        %2251 = vmatprep.subr.bf16.mxu0 0
        %2252 = vmatpush1.bf16.msra.mxu0 0
        %2253 = vmatprep.subr.bf16.mxu0 0
        %2254 = vmatpush1.bf16.msra.mxu0 0
        %2255 = vmatprep.subr.bf16.mxu0 0
        %2256 = vmatpush1.bf16.msra.mxu0 0
        %2257 = vmatprep.mubr.bf16.mxu0 0
        %2258 = vmatmul.mubr.bf16.gmra.mrb[0].mxu0 %v2220
        %v2259 = vpop.f32.mrb[0].mxu0
        %v2260 = vadd.f32 0.0, %v2259
        %v2261 = vpop.f32.mrb[0].mxu0
        %v2262 = vpop.f32.mrb[0].mxu0
        %v2263 = vpop.f32.mrb[0].mxu0
        %2264 = vdwg.mxu0
        %v2266 = vsel %vm1701, %v2126, 0
        %v2269 = vsel %vm1941, %v1691, 0
        %2271 = vmatprep.subr.bf16.mxu0 0
        %2272 = vmatpush1.bf16.msra.mxu0 %v2269
        %2273 = vmatprep.subr.bf16.mxu0 0
        %2274 = vmatpush1.bf16.msra.mxu0 0
        %2275 = vmatprep.subr.bf16.mxu0 0
        %2276 = vmatpush1.bf16.msra.mxu0 0
        %2277 = vmatprep.subr.bf16.mxu0 0
        %2278 = vmatpush1.bf16.msra.mxu0 0
        %2279 = vmatprep.subr.bf16.mxu0 0
        %2280 = vmatpush1.bf16.msra.mxu0 0
        %2281 = vmatprep.subr.bf16.mxu0 0
        %2282 = vmatpush1.bf16.msra.mxu0 0
        %2283 = vmatprep.subr.bf16.mxu0 0
        %2284 = vmatpush1.bf16.msra.mxu0 0
        %2285 = vmatprep.subr.bf16.mxu0 0
        %2286 = vmatpush1.bf16.msra.mxu0 0
        %2287 = vmatprep.subr.bf16.mxu0 0
        %2288 = vmatpush1.bf16.msra.mxu0 0
        %2289 = vmatprep.subr.bf16.mxu0 0
        %2290 = vmatpush1.bf16.msra.mxu0 0
        %2291 = vmatprep.subr.bf16.mxu0 0
        %2292 = vmatpush1.bf16.msra.mxu0 0
        %2293 = vmatprep.subr.bf16.mxu0 0
        %2294 = vmatpush1.bf16.msra.mxu0 0
        %2295 = vmatprep.subr.bf16.mxu0 0
        %2296 = vmatpush1.bf16.msra.mxu0 0
        %2297 = vmatprep.subr.bf16.mxu0 0
        %2298 = vmatpush1.bf16.msra.mxu0 0
        %2299 = vmatprep.subr.bf16.mxu0 0
        %2300 = vmatpush1.bf16.msra.mxu0 0
        %2301 = vmatprep.subr.bf16.mxu0 0
        %2302 = vmatpush1.bf16.msra.mxu0 0
        %2303 = vmatprep.mubr.bf16.mxu0 0
        %2304 = vmatmul.mubr.bf16.gmra.mrb[0].mxu0 %v2266
        %v2305 = vpop.f32.mrb[0].mxu0
        %v2306 = vadd.f32 0.0, %v2305
        %v2307 = vpop.f32.mrb[0].mxu0
        %v2308 = vpop.f32.mrb[0].mxu0
        %v2309 = vpop.f32.mrb[0].mxu0
        %2310 = vdwg.mxu0
        %v2311 = vsel %vm1024, %v2168, 0.0
        %v2312 = vsel %vm1024, %v2214, 0.0
        %v2313 = vadd.f32 %v2311, %v2312
        %v2314 = vsel %vm1024, %v2260, 0.0
        %v2315 = vadd.f32 %v2313, %v2314
        %v2316 = vsel %vm1024, %v2306, 0.0
        %v2317 = vadd.f32 %v2315, %v2316
        %v2319 = vlaneseq
        %v2320 = vshrl.u32 %v2319, 7
        %v2321 = vsub.s32 0, %v2320
        %v2322 = vrot.slane %v1692, %v2321
        %v2324 = vadd.f32 %v2317, %v2322
        %v2325 = vadd.f32 %v924, %v2324
        %v2326 = vsel %vm1024, %v2325, 0.0
        %2327 = vadd.xlane.f32.xlu0 %v2326
        %v2328 = vpop.xlane.xlu0 %2327
        %v2329 = vrcp.pop 32.0
        %v2330 = vmul.f32 %v2328, %v2329
        %v2331 = vsub.f32 %v2325, %v2330
        %v2332 = vmul.f32 %v2331, %v2331
        %v2333 = vsel %vm1024, %v2332, 0.0
        %2334 = vadd.xlane.f32.xlu0 %v2333
        %v2335 = vpop.xlane.xlu0 %2334
        %v2336 = vmul.f32 %v2335, %v2329
        %v2337 = vadd.f32 %v2336, 1e-05
        %v2338 = vrsqrt.pop %v2337
        %v2339 = vmul.f32 %v2331, %v2338
        %v2341 = vlaneseq
        %v2342 = vshrl.u32 %v2341, 7
        %v2343 = vsub.s32 0, %v2342
        %v2344 = vrot.slane %v925, %v2343
        %v2346 = vmul.f32 %v2339, %v2344
        %v2348 = vlaneseq
        %v2349 = vshrl.u32 %v2348, 7
        %v2350 = vsub.s32 0, %v2349
        %v2351 = vrot.slane %v926, %v2350
        %v2353 = vadd.f32 %v2346, %v2351
        %v2354 = vld [vmem:[%s881] sm:$0xf]
        %v2355 = vld [vmem:[%s881 + $0x4] sm:$0xf]
        %v2356 = vld [vmem:[%s881 + $0x8] sm:$0xf]
        %v2357 = vld [vmem:[%s881 + $0xc] sm:$0xf]
        %v2358 = vld [vmem:[%s881 + $0x10] sm:$0xf]
        %v2359 = vld [vmem:[%s881 + $0x14] sm:$0xf]
        %v2360 = vld [vmem:[%s881 + $0x18] sm:$0xf]
        %v2361 = vld [vmem:[%s881 + $0x1c] sm:$0xf]
        %v2362 = vld [vmem:[%s881 + $0x20] sm:$0xf]
        %v2363 = vld [vmem:[%s881 + $0x24] sm:$0xf]
        %v2364 = vld [vmem:[%s881 + $0x28] sm:$0xf]
        %v2365 = vld [vmem:[%s881 + $0x2c] sm:$0xf]
        %v2366 = vld [vmem:[%s881 + $0x30] sm:$0xf]
        %v2367 = vld [vmem:[%s881 + $0x34] sm:$0xf]
        %v2368 = vld [vmem:[%s881 + $0x38] sm:$0xf]
        %v2369 = vld [vmem:[%s881 + $0x3c] sm:$0xf]
        %v2370 = vld [vmem:[%s881 + $0x40] sm:$0xf]
        %v2371 = vld [vmem:[%s881 + $0x44] sm:$0xf]
        %v2372 = vld [vmem:[%s881 + $0x48] sm:$0xf]
        %v2373 = vld [vmem:[%s881 + $0x4c] sm:$0xf]
        %v2374 = vld [vmem:[%s881 + $0x50] sm:$0xf]
        %v2375 = vld [vmem:[%s881 + $0x54] sm:$0xf]
        %v2376 = vld [vmem:[%s881 + $0x58] sm:$0xf]
        %v2377 = vld [vmem:[%s881 + $0x5c] sm:$0xf]
        %v2378 = vld [vmem:[%s881 + $0x60] sm:$0xf]
        %v2379 = vld [vmem:[%s881 + $0x64] sm:$0xf]
        %v2380 = vld [vmem:[%s881 + $0x68] sm:$0xf]
        %v2381 = vld [vmem:[%s881 + $0x6c] sm:$0xf]
        %v2382 = vld [vmem:[%s881 + $0x70] sm:$0xf]
        %v2383 = vld [vmem:[%s881 + $0x74] sm:$0xf]
        %v2384 = vld [vmem:[%s881 + $0x78] sm:$0xf]
        %v2385 = vld [vmem:[%s881 + $0x7c] sm:$0xf]
        %v2386 = vld [vmem:[%s885] sm:$0x1]
        %v2387 = vld [vmem:[%s885 + $0x1] sm:$0x1]
        %v2388 = vld [vmem:[%s885 + $0x2] sm:$0x1]
        %v2389 = vld [vmem:[%s885 + $0x3] sm:$0x1]
        %v2390 = vld [vmem:[%s885 + $0x4] sm:$0x1]
        %v2391 = vld [vmem:[%s885 + $0x5] sm:$0x1]
        %v2392 = vld [vmem:[%s885 + $0x6] sm:$0x1]
        %v2393 = vld [vmem:[%s885 + $0x7] sm:$0x1]
        %v2394 = vld [vmem:[%s847] sm:$0xf]
        %v2395 = vpack.c.bf16 %v2353, %v2353
        %v2396 = vld [vmem:[%s872] sm:$0xf]
        %v2397 = vld [vmem:[%s872 + $0x4] sm:$0xf]
        %v2398 = vld [vmem:[%s872 + $0x8] sm:$0xf]
        %v2399 = vld [vmem:[%s872 + $0xc] sm:$0xf]
        %v2400 = vld [vmem:[%s872 + $0x10] sm:$0xf]
        %v2401 = vld [vmem:[%s872 + $0x14] sm:$0xf]
        %v2402 = vld [vmem:[%s872 + $0x18] sm:$0xf]
        %v2403 = vld [vmem:[%s872 + $0x1c] sm:$0xf]
        %v2404 = vld [vmem:[%s872 + $0x20] sm:$0xf]
        %v2405 = vld [vmem:[%s872 + $0x24] sm:$0xf]
        %v2406 = vld [vmem:[%s872 + $0x28] sm:$0xf]
        %v2407 = vld [vmem:[%s872 + $0x2c] sm:$0xf]
        %v2408 = vld [vmem:[%s872 + $0x30] sm:$0xf]
        %v2409 = vld [vmem:[%s872 + $0x34] sm:$0xf]
        %v2410 = vld [vmem:[%s872 + $0x38] sm:$0xf]
        %v2411 = vld [vmem:[%s872 + $0x3c] sm:$0xf]
        %v2412 = vld [vmem:[%s876] sm:$0x1]
        %v2413 = vld [vmem:[%s876 + $0x1] sm:$0x1]
        %v2414 = vld [vmem:[%s876 + $0x2] sm:$0x1]
        %v2415 = vld [vmem:[%s876 + $0x3] sm:$0x1]
        %v2420 = vlaneseq
        %v2421 = vshrl.u32 %v2420, 7
        %v2422 = vsub.s32 0, %v2421
        %v2423 = vrot.slane %v2412, %v2422
        %v2424 = vlaneseq
        %v2425 = vshrl.u32 %v2424, 7
        %v2426 = vsub.s32 0, %v2425
        %v2427 = vrot.slane %v2413, %v2426
        %v2428 = vlaneseq
        %v2429 = vshrl.u32 %v2428, 7
        %v2430 = vsub.s32 0, %v2429
        %v2431 = vrot.slane %v2414, %v2430
        %v2432 = vlaneseq
        %v2433 = vshrl.u32 %v2432, 7
        %v2434 = vsub.s32 0, %v2433
        %v2435 = vrot.slane %v2415, %v2434
        %v2444 = vunpack.c.l.b16 %v2396
        %v2445 = vunpack.c.l.b16 %v2397
        %v2446 = vunpack.c.l.b16 %v2398
        %v2447 = vunpack.c.l.b16 %v2399
        %v2448 = vpack.c.b16 %v2445, %v2444
        %v2449 = vpack.c.b16 %v2447, %v2446
        %v2453 = vsel %vm1024, %v2395, 0
        %2455 = vmatprep.subr.bf16.mxu0 0
        %2456 = vmatpush1.bf16.msra.mxu0 %v2448
        %2457 = vmatprep.subr.bf16.mxu0 0
        %2458 = vmatpush1.bf16.msra.mxu0 %v2449
        %2459 = vmatprep.subr.bf16.mxu0 0
        %2460 = vmatpush1.bf16.msra.mxu0 0
        %2461 = vmatprep.subr.bf16.mxu0 0
        %2462 = vmatpush1.bf16.msra.mxu0 0
        %2463 = vmatprep.subr.bf16.mxu0 0
        %2464 = vmatpush1.bf16.msra.mxu0 0
        %2465 = vmatprep.subr.bf16.mxu0 0
        %2466 = vmatpush1.bf16.msra.mxu0 0
        %2467 = vmatprep.subr.bf16.mxu0 0
        %2468 = vmatpush1.bf16.msra.mxu0 0
        %2469 = vmatprep.subr.bf16.mxu0 0
        %2470 = vmatpush1.bf16.msra.mxu0 0
        %2471 = vmatprep.subr.bf16.mxu0 0
        %2472 = vmatpush1.bf16.msra.mxu0 0
        %2473 = vmatprep.subr.bf16.mxu0 0
        %2474 = vmatpush1.bf16.msra.mxu0 0
        %2475 = vmatprep.subr.bf16.mxu0 0
        %2476 = vmatpush1.bf16.msra.mxu0 0
        %2477 = vmatprep.subr.bf16.mxu0 0
        %2478 = vmatpush1.bf16.msra.mxu0 0
        %2479 = vmatprep.subr.bf16.mxu0 0
        %2480 = vmatpush1.bf16.msra.mxu0 0
        %2481 = vmatprep.subr.bf16.mxu0 0
        %2482 = vmatpush1.bf16.msra.mxu0 0
        %2483 = vmatprep.subr.bf16.mxu0 0
        %2484 = vmatpush1.bf16.msra.mxu0 0
        %2485 = vmatprep.subr.bf16.mxu0 0
        %2486 = vmatpush1.bf16.msra.mxu0 0
        %2487 = vmatprep.mubr.bf16.mxu0 0
        %2488 = vmatmul.mubr.bf16.gmra.mrb[0].mxu0 %v2453
        %v2489 = vpop.f32.mrb[0].mxu0
        %v2490 = vadd.f32 %v2423, %v2489
        %v2491 = vpop.f32.mrb[0].mxu0
        %v2492 = vpop.f32.mrb[0].mxu0
        %v2493 = vpop.f32.mrb[0].mxu0
        %2494 = vdwg.mxu0
        %v2499 = vunpack.c.l.b16 %v2400
        %v2500 = vunpack.c.l.b16 %v2401
        %v2501 = vunpack.c.l.b16 %v2402
        %v2502 = vunpack.c.l.b16 %v2403
        %v2503 = vpack.c.b16 %v2500, %v2499
        %v2504 = vpack.c.b16 %v2502, %v2501
        %2507 = vmatprep.subr.bf16.mxu0 0
        %2508 = vmatpush1.bf16.msra.mxu0 %v2503
        %2509 = vmatprep.subr.bf16.mxu0 0
        %2510 = vmatpush1.bf16.msra.mxu0 %v2504
        %2511 = vmatprep.subr.bf16.mxu0 0
        %2512 = vmatpush1.bf16.msra.mxu0 0
        %2513 = vmatprep.subr.bf16.mxu0 0
        %2514 = vmatpush1.bf16.msra.mxu0 0
        %2515 = vmatprep.subr.bf16.mxu0 0
        %2516 = vmatpush1.bf16.msra.mxu0 0
        %2517 = vmatprep.subr.bf16.mxu0 0
        %2518 = vmatpush1.bf16.msra.mxu0 0
        %2519 = vmatprep.subr.bf16.mxu0 0
        %2520 = vmatpush1.bf16.msra.mxu0 0
        %2521 = vmatprep.subr.bf16.mxu0 0
        %2522 = vmatpush1.bf16.msra.mxu0 0
        %2523 = vmatprep.subr.bf16.mxu0 0
        %2524 = vmatpush1.bf16.msra.mxu0 0
        %2525 = vmatprep.subr.bf16.mxu0 0
        %2526 = vmatpush1.bf16.msra.mxu0 0
        %2527 = vmatprep.subr.bf16.mxu0 0
        %2528 = vmatpush1.bf16.msra.mxu0 0
        %2529 = vmatprep.subr.bf16.mxu0 0
        %2530 = vmatpush1.bf16.msra.mxu0 0
        %2531 = vmatprep.subr.bf16.mxu0 0
        %2532 = vmatpush1.bf16.msra.mxu0 0
        %2533 = vmatprep.subr.bf16.mxu0 0
        %2534 = vmatpush1.bf16.msra.mxu0 0
        %2535 = vmatprep.subr.bf16.mxu0 0
        %2536 = vmatpush1.bf16.msra.mxu0 0
        %2537 = vmatprep.subr.bf16.mxu0 0
        %2538 = vmatpush1.bf16.msra.mxu0 0
        %2539 = vmatprep.mubr.bf16.mxu0 0
        %2540 = vmatmul.mubr.bf16.gmra.mrb[0].mxu0 %v2453
        %v2541 = vpop.f32.mrb[0].mxu0
        %v2542 = vadd.f32 %v2427, %v2541
        %v2543 = vpop.f32.mrb[0].mxu0
        %v2544 = vpop.f32.mrb[0].mxu0
        %v2545 = vpop.f32.mrb[0].mxu0
        %2546 = vdwg.mxu0
        %v2551 = vunpack.c.l.b16 %v2404
        %v2552 = vunpack.c.l.b16 %v2405
        %v2553 = vunpack.c.l.b16 %v2406
        %v2554 = vunpack.c.l.b16 %v2407
        %v2555 = vpack.c.b16 %v2552, %v2551
        %v2556 = vpack.c.b16 %v2554, %v2553
        %2559 = vmatprep.subr.bf16.mxu0 0
        %2560 = vmatpush1.bf16.msra.mxu0 %v2555
        %2561 = vmatprep.subr.bf16.mxu0 0
        %2562 = vmatpush1.bf16.msra.mxu0 %v2556
        %2563 = vmatprep.subr.bf16.mxu0 0
        %2564 = vmatpush1.bf16.msra.mxu0 0
        %2565 = vmatprep.subr.bf16.mxu0 0
        %2566 = vmatpush1.bf16.msra.mxu0 0
        %2567 = vmatprep.subr.bf16.mxu0 0
        %2568 = vmatpush1.bf16.msra.mxu0 0
        %2569 = vmatprep.subr.bf16.mxu0 0
        %2570 = vmatpush1.bf16.msra.mxu0 0
        %2571 = vmatprep.subr.bf16.mxu0 0
        %2572 = vmatpush1.bf16.msra.mxu0 0
        %2573 = vmatprep.subr.bf16.mxu0 0
        %2574 = vmatpush1.bf16.msra.mxu0 0
        %2575 = vmatprep.subr.bf16.mxu0 0
        %2576 = vmatpush1.bf16.msra.mxu0 0
        %2577 = vmatprep.subr.bf16.mxu0 0
        %2578 = vmatpush1.bf16.msra.mxu0 0
        %2579 = vmatprep.subr.bf16.mxu0 0
        %2580 = vmatpush1.bf16.msra.mxu0 0
        %2581 = vmatprep.subr.bf16.mxu0 0
        %2582 = vmatpush1.bf16.msra.mxu0 0
        %2583 = vmatprep.subr.bf16.mxu0 0
        %2584 = vmatpush1.bf16.msra.mxu0 0
        %2585 = vmatprep.subr.bf16.mxu0 0
        %2586 = vmatpush1.bf16.msra.mxu0 0
        %2587 = vmatprep.subr.bf16.mxu0 0
        %2588 = vmatpush1.bf16.msra.mxu0 0
        %2589 = vmatprep.subr.bf16.mxu0 0
        %2590 = vmatpush1.bf16.msra.mxu0 0
        %2591 = vmatprep.mubr.bf16.mxu0 0
        %2592 = vmatmul.mubr.bf16.gmra.mrb[0].mxu0 %v2453
        %v2593 = vpop.f32.mrb[0].mxu0
        %v2594 = vadd.f32 %v2431, %v2593
        %v2595 = vpop.f32.mrb[0].mxu0
        %v2596 = vpop.f32.mrb[0].mxu0
        %v2597 = vpop.f32.mrb[0].mxu0
        %2598 = vdwg.mxu0
        %v2603 = vunpack.c.l.b16 %v2408
        %v2604 = vunpack.c.l.b16 %v2409
        %v2605 = vunpack.c.l.b16 %v2410
        %v2606 = vunpack.c.l.b16 %v2411
        %v2607 = vpack.c.b16 %v2604, %v2603
        %v2608 = vpack.c.b16 %v2606, %v2605
        %2611 = vmatprep.subr.bf16.mxu0 0
        %2612 = vmatpush1.bf16.msra.mxu0 %v2607
        %2613 = vmatprep.subr.bf16.mxu0 0
        %2614 = vmatpush1.bf16.msra.mxu0 %v2608
        %2615 = vmatprep.subr.bf16.mxu0 0
        %2616 = vmatpush1.bf16.msra.mxu0 0
        %2617 = vmatprep.subr.bf16.mxu0 0
        %2618 = vmatpush1.bf16.msra.mxu0 0
        %2619 = vmatprep.subr.bf16.mxu0 0
        %2620 = vmatpush1.bf16.msra.mxu0 0
        %2621 = vmatprep.subr.bf16.mxu0 0
        %2622 = vmatpush1.bf16.msra.mxu0 0
        %2623 = vmatprep.subr.bf16.mxu0 0
        %2624 = vmatpush1.bf16.msra.mxu0 0
        %2625 = vmatprep.subr.bf16.mxu0 0
        %2626 = vmatpush1.bf16.msra.mxu0 0
        %2627 = vmatprep.subr.bf16.mxu0 0
        %2628 = vmatpush1.bf16.msra.mxu0 0
        %2629 = vmatprep.subr.bf16.mxu0 0
        %2630 = vmatpush1.bf16.msra.mxu0 0
        %2631 = vmatprep.subr.bf16.mxu0 0
        %2632 = vmatpush1.bf16.msra.mxu0 0
        %2633 = vmatprep.subr.bf16.mxu0 0
        %2634 = vmatpush1.bf16.msra.mxu0 0
        %2635 = vmatprep.subr.bf16.mxu0 0
        %2636 = vmatpush1.bf16.msra.mxu0 0
        %2637 = vmatprep.subr.bf16.mxu0 0
        %2638 = vmatpush1.bf16.msra.mxu0 0
        %2639 = vmatprep.subr.bf16.mxu0 0
        %2640 = vmatpush1.bf16.msra.mxu0 0
        %2641 = vmatprep.subr.bf16.mxu0 0
        %2642 = vmatpush1.bf16.msra.mxu0 0
        %2643 = vmatprep.mubr.bf16.mxu0 0
        %2644 = vmatmul.mubr.bf16.gmra.mrb[0].mxu0 %v2453
        %v2645 = vpop.f32.mrb[0].mxu0
        %v2646 = vadd.f32 %v2435, %v2645
        %v2647 = vpop.f32.mrb[0].mxu0
        %v2648 = vpop.f32.mrb[0].mxu0
        %v2649 = vpop.f32.mrb[0].mxu0
        %2650 = vdwg.mxu0
        %v2655 = vlaneseq
        %v2656 = vshrl.u32 %v2655, 7
        %v2657 = vsub.s32 0, %v2656
        %v2658 = vrot.slane %v2386, %v2657
        %v2659 = vlaneseq
        %v2660 = vshrl.u32 %v2659, 7
        %v2661 = vsub.s32 0, %v2660
        %v2662 = vrot.slane %v2387, %v2661
        %v2663 = vlaneseq
        %v2664 = vshrl.u32 %v2663, 7
        %v2665 = vsub.s32 0, %v2664
        %v2666 = vrot.slane %v2388, %v2665
        %v2667 = vlaneseq
        %v2668 = vshrl.u32 %v2667, 7
        %v2669 = vsub.s32 0, %v2668
        %v2670 = vrot.slane %v2389, %v2669
        %v2679 = vunpack.c.l.b16 %v2354
        %v2680 = vunpack.c.l.b16 %v2355
        %v2681 = vunpack.c.l.b16 %v2356
        %v2682 = vunpack.c.l.b16 %v2357
        %v2683 = vpack.c.b16 %v2680, %v2679
        %v2684 = vpack.c.b16 %v2682, %v2681
        %v2688 = vsel %vm1024, %v2394, 0
        %2690 = vmatprep.subr.bf16.mxu0 0
        %2691 = vmatpush1.bf16.msra.mxu0 %v2683
        %2692 = vmatprep.subr.bf16.mxu0 0
        %2693 = vmatpush1.bf16.msra.mxu0 %v2684
        %2694 = vmatprep.subr.bf16.mxu0 0
        %2695 = vmatpush1.bf16.msra.mxu0 0
        %2696 = vmatprep.subr.bf16.mxu0 0
        %2697 = vmatpush1.bf16.msra.mxu0 0
        %2698 = vmatprep.subr.bf16.mxu0 0
        %2699 = vmatpush1.bf16.msra.mxu0 0
        %2700 = vmatprep.subr.bf16.mxu0 0
        %2701 = vmatpush1.bf16.msra.mxu0 0
        %2702 = vmatprep.subr.bf16.mxu0 0
        %2703 = vmatpush1.bf16.msra.mxu0 0
        %2704 = vmatprep.subr.bf16.mxu0 0
        %2705 = vmatpush1.bf16.msra.mxu0 0
        %2706 = vmatprep.subr.bf16.mxu0 0
        %2707 = vmatpush1.bf16.msra.mxu0 0
        %2708 = vmatprep.subr.bf16.mxu0 0
        %2709 = vmatpush1.bf16.msra.mxu0 0
        %2710 = vmatprep.subr.bf16.mxu0 0
        %2711 = vmatpush1.bf16.msra.mxu0 0
        %2712 = vmatprep.subr.bf16.mxu0 0
        %2713 = vmatpush1.bf16.msra.mxu0 0
        %2714 = vmatprep.subr.bf16.mxu0 0
        %2715 = vmatpush1.bf16.msra.mxu0 0
        %2716 = vmatprep.subr.bf16.mxu0 0
        %2717 = vmatpush1.bf16.msra.mxu0 0
        %2718 = vmatprep.subr.bf16.mxu0 0
        %2719 = vmatpush1.bf16.msra.mxu0 0
        %2720 = vmatprep.subr.bf16.mxu0 0
        %2721 = vmatpush1.bf16.msra.mxu0 0
        %2722 = vmatprep.mubr.bf16.mxu0 0
        %2723 = vmatmul.mubr.bf16.gmra.mrb[0].mxu0 %v2688
        %v2724 = vpop.f32.mrb[0].mxu0
        %v2725 = vadd.f32 %v2658, %v2724
        %v2726 = vpop.f32.mrb[0].mxu0
        %v2727 = vpop.f32.mrb[0].mxu0
        %v2728 = vpop.f32.mrb[0].mxu0
        %2729 = vdwg.mxu0
        %v2734 = vunpack.c.l.b16 %v2358
        %v2735 = vunpack.c.l.b16 %v2359
        %v2736 = vunpack.c.l.b16 %v2360
        %v2737 = vunpack.c.l.b16 %v2361
        %v2738 = vpack.c.b16 %v2735, %v2734
        %v2739 = vpack.c.b16 %v2737, %v2736
        %2742 = vmatprep.subr.bf16.mxu0 0
        %2743 = vmatpush1.bf16.msra.mxu0 %v2738
        %2744 = vmatprep.subr.bf16.mxu0 0
        %2745 = vmatpush1.bf16.msra.mxu0 %v2739
        %2746 = vmatprep.subr.bf16.mxu0 0
        %2747 = vmatpush1.bf16.msra.mxu0 0
        %2748 = vmatprep.subr.bf16.mxu0 0
        %2749 = vmatpush1.bf16.msra.mxu0 0
        %2750 = vmatprep.subr.bf16.mxu0 0
        %2751 = vmatpush1.bf16.msra.mxu0 0
        %2752 = vmatprep.subr.bf16.mxu0 0
        %2753 = vmatpush1.bf16.msra.mxu0 0
        %2754 = vmatprep.subr.bf16.mxu0 0
        %2755 = vmatpush1.bf16.msra.mxu0 0
        %2756 = vmatprep.subr.bf16.mxu0 0
        %2757 = vmatpush1.bf16.msra.mxu0 0
        %2758 = vmatprep.subr.bf16.mxu0 0
        %2759 = vmatpush1.bf16.msra.mxu0 0
        %2760 = vmatprep.subr.bf16.mxu0 0
        %2761 = vmatpush1.bf16.msra.mxu0 0
        %2762 = vmatprep.subr.bf16.mxu0 0
        %2763 = vmatpush1.bf16.msra.mxu0 0
        %2764 = vmatprep.subr.bf16.mxu0 0
        %2765 = vmatpush1.bf16.msra.mxu0 0
        %2766 = vmatprep.subr.bf16.mxu0 0
        %2767 = vmatpush1.bf16.msra.mxu0 0
        %2768 = vmatprep.subr.bf16.mxu0 0
        %2769 = vmatpush1.bf16.msra.mxu0 0
        %2770 = vmatprep.subr.bf16.mxu0 0
        %2771 = vmatpush1.bf16.msra.mxu0 0
        %2772 = vmatprep.subr.bf16.mxu0 0
        %2773 = vmatpush1.bf16.msra.mxu0 0
        %2774 = vmatprep.mubr.bf16.mxu0 0
        %2775 = vmatmul.mubr.bf16.gmra.mrb[0].mxu0 %v2688
        %v2776 = vpop.f32.mrb[0].mxu0
        %v2777 = vadd.f32 %v2662, %v2776
        %v2778 = vpop.f32.mrb[0].mxu0
        %v2779 = vpop.f32.mrb[0].mxu0
        %v2780 = vpop.f32.mrb[0].mxu0
        %2781 = vdwg.mxu0
        %v2786 = vunpack.c.l.b16 %v2362
        %v2787 = vunpack.c.l.b16 %v2363
        %v2788 = vunpack.c.l.b16 %v2364
        %v2789 = vunpack.c.l.b16 %v2365
        %v2790 = vpack.c.b16 %v2787, %v2786
        %v2791 = vpack.c.b16 %v2789, %v2788
        %2794 = vmatprep.subr.bf16.mxu0 0
        %2795 = vmatpush1.bf16.msra.mxu0 %v2790
        %2796 = vmatprep.subr.bf16.mxu0 0
        %2797 = vmatpush1.bf16.msra.mxu0 %v2791
        %2798 = vmatprep.subr.bf16.mxu0 0
        %2799 = vmatpush1.bf16.msra.mxu0 0
        %2800 = vmatprep.subr.bf16.mxu0 0
        %2801 = vmatpush1.bf16.msra.mxu0 0
        %2802 = vmatprep.subr.bf16.mxu0 0
        %2803 = vmatpush1.bf16.msra.mxu0 0
        %2804 = vmatprep.subr.bf16.mxu0 0
        %2805 = vmatpush1.bf16.msra.mxu0 0
        %2806 = vmatprep.subr.bf16.mxu0 0
        %2807 = vmatpush1.bf16.msra.mxu0 0
        %2808 = vmatprep.subr.bf16.mxu0 0
        %2809 = vmatpush1.bf16.msra.mxu0 0
        %2810 = vmatprep.subr.bf16.mxu0 0
        %2811 = vmatpush1.bf16.msra.mxu0 0
        %2812 = vmatprep.subr.bf16.mxu0 0
        %2813 = vmatpush1.bf16.msra.mxu0 0
        %2814 = vmatprep.subr.bf16.mxu0 0
        %2815 = vmatpush1.bf16.msra.mxu0 0
        %2816 = vmatprep.subr.bf16.mxu0 0
        %2817 = vmatpush1.bf16.msra.mxu0 0
        %2818 = vmatprep.subr.bf16.mxu0 0
        %2819 = vmatpush1.bf16.msra.mxu0 0
        %2820 = vmatprep.subr.bf16.mxu0 0
        %2821 = vmatpush1.bf16.msra.mxu0 0
        %2822 = vmatprep.subr.bf16.mxu0 0
        %2823 = vmatpush1.bf16.msra.mxu0 0
        %2824 = vmatprep.subr.bf16.mxu0 0
        %2825 = vmatpush1.bf16.msra.mxu0 0
        %2826 = vmatprep.mubr.bf16.mxu0 0
        %2827 = vmatmul.mubr.bf16.gmra.mrb[0].mxu0 %v2688
        %v2828 = vpop.f32.mrb[0].mxu0
        %v2829 = vadd.f32 %v2666, %v2828
        %v2830 = vpop.f32.mrb[0].mxu0
        %v2831 = vpop.f32.mrb[0].mxu0
        %v2832 = vpop.f32.mrb[0].mxu0
        %2833 = vdwg.mxu0
        %v2838 = vunpack.c.l.b16 %v2366
        %v2839 = vunpack.c.l.b16 %v2367
        %v2840 = vunpack.c.l.b16 %v2368
        %v2841 = vunpack.c.l.b16 %v2369
        %v2842 = vpack.c.b16 %v2839, %v2838
        %v2843 = vpack.c.b16 %v2841, %v2840
        %2846 = vmatprep.subr.bf16.mxu0 0
        %2847 = vmatpush1.bf16.msra.mxu0 %v2842
        %2848 = vmatprep.subr.bf16.mxu0 0
        %2849 = vmatpush1.bf16.msra.mxu0 %v2843
        %2850 = vmatprep.subr.bf16.mxu0 0
        %2851 = vmatpush1.bf16.msra.mxu0 0
        %2852 = vmatprep.subr.bf16.mxu0 0
        %2853 = vmatpush1.bf16.msra.mxu0 0
        %2854 = vmatprep.subr.bf16.mxu0 0
        %2855 = vmatpush1.bf16.msra.mxu0 0
        %2856 = vmatprep.subr.bf16.mxu0 0
        %2857 = vmatpush1.bf16.msra.mxu0 0
        %2858 = vmatprep.subr.bf16.mxu0 0
        %2859 = vmatpush1.bf16.msra.mxu0 0
        %2860 = vmatprep.subr.bf16.mxu0 0
        %2861 = vmatpush1.bf16.msra.mxu0 0
        %2862 = vmatprep.subr.bf16.mxu0 0
        %2863 = vmatpush1.bf16.msra.mxu0 0
        %2864 = vmatprep.subr.bf16.mxu0 0
        %2865 = vmatpush1.bf16.msra.mxu0 0
        %2866 = vmatprep.subr.bf16.mxu0 0
        %2867 = vmatpush1.bf16.msra.mxu0 0
        %2868 = vmatprep.subr.bf16.mxu0 0
        %2869 = vmatpush1.bf16.msra.mxu0 0
        %2870 = vmatprep.subr.bf16.mxu0 0
        %2871 = vmatpush1.bf16.msra.mxu0 0
        %2872 = vmatprep.subr.bf16.mxu0 0
        %2873 = vmatpush1.bf16.msra.mxu0 0
        %2874 = vmatprep.subr.bf16.mxu0 0
        %2875 = vmatpush1.bf16.msra.mxu0 0
        %2876 = vmatprep.subr.bf16.mxu0 0
        %2877 = vmatpush1.bf16.msra.mxu0 0
        %2878 = vmatprep.mubr.bf16.mxu0 0
        %2879 = vmatmul.mubr.bf16.gmra.mrb[0].mxu0 %v2688
        %v2880 = vpop.f32.mrb[0].mxu0
        %v2881 = vadd.f32 %v2670, %v2880
        %v2882 = vpop.f32.mrb[0].mxu0
        %v2883 = vpop.f32.mrb[0].mxu0
        %v2884 = vpop.f32.mrb[0].mxu0
        %2885 = vdwg.mxu0
        %v2890 = vlaneseq
        %v2891 = vshrl.u32 %v2890, 7
        %v2892 = vsub.s32 0, %v2891
        %v2893 = vrot.slane %v2390, %v2892
        %v2894 = vlaneseq
        %v2895 = vshrl.u32 %v2894, 7
        %v2896 = vsub.s32 0, %v2895
        %v2897 = vrot.slane %v2391, %v2896
        %v2898 = vlaneseq
        %v2899 = vshrl.u32 %v2898, 7
        %v2900 = vsub.s32 0, %v2899
        %v2901 = vrot.slane %v2392, %v2900
        %v2902 = vlaneseq
        %v2903 = vshrl.u32 %v2902, 7
        %v2904 = vsub.s32 0, %v2903
        %v2905 = vrot.slane %v2393, %v2904
        %v2914 = vunpack.c.l.b16 %v2370
        %v2915 = vunpack.c.l.b16 %v2371
        %v2916 = vunpack.c.l.b16 %v2372
        %v2917 = vunpack.c.l.b16 %v2373
        %v2918 = vpack.c.b16 %v2915, %v2914
        %v2919 = vpack.c.b16 %v2917, %v2916
        %2922 = vmatprep.subr.bf16.mxu0 0
        %2923 = vmatpush1.bf16.msra.mxu0 %v2918
        %2924 = vmatprep.subr.bf16.mxu0 0
        %2925 = vmatpush1.bf16.msra.mxu0 %v2919
        %2926 = vmatprep.subr.bf16.mxu0 0
        %2927 = vmatpush1.bf16.msra.mxu0 0
        %2928 = vmatprep.subr.bf16.mxu0 0
        %2929 = vmatpush1.bf16.msra.mxu0 0
        %2930 = vmatprep.subr.bf16.mxu0 0
        %2931 = vmatpush1.bf16.msra.mxu0 0
        %2932 = vmatprep.subr.bf16.mxu0 0
        %2933 = vmatpush1.bf16.msra.mxu0 0
        %2934 = vmatprep.subr.bf16.mxu0 0
        %2935 = vmatpush1.bf16.msra.mxu0 0
        %2936 = vmatprep.subr.bf16.mxu0 0
        %2937 = vmatpush1.bf16.msra.mxu0 0
        %2938 = vmatprep.subr.bf16.mxu0 0
        %2939 = vmatpush1.bf16.msra.mxu0 0
        %2940 = vmatprep.subr.bf16.mxu0 0
        %2941 = vmatpush1.bf16.msra.mxu0 0
        %2942 = vmatprep.subr.bf16.mxu0 0
        %2943 = vmatpush1.bf16.msra.mxu0 0
        %2944 = vmatprep.subr.bf16.mxu0 0
        %2945 = vmatpush1.bf16.msra.mxu0 0
        %2946 = vmatprep.subr.bf16.mxu0 0
        %2947 = vmatpush1.bf16.msra.mxu0 0
        %2948 = vmatprep.subr.bf16.mxu0 0
        %2949 = vmatpush1.bf16.msra.mxu0 0
        %2950 = vmatprep.subr.bf16.mxu0 0
        %2951 = vmatpush1.bf16.msra.mxu0 0
        %2952 = vmatprep.subr.bf16.mxu0 0
        %2953 = vmatpush1.bf16.msra.mxu0 0
        %2954 = vmatprep.mubr.bf16.mxu0 0
        %2955 = vmatmul.mubr.bf16.gmra.mrb[0].mxu0 %v2688
        %v2956 = vpop.f32.mrb[0].mxu0
        %v2957 = vadd.f32 %v2893, %v2956
        %v2958 = vpop.f32.mrb[0].mxu0
        %v2959 = vpop.f32.mrb[0].mxu0
        %v2960 = vpop.f32.mrb[0].mxu0
        %2961 = vdwg.mxu0
        %v2966 = vunpack.c.l.b16 %v2374
        %v2967 = vunpack.c.l.b16 %v2375
        %v2968 = vunpack.c.l.b16 %v2376
        %v2969 = vunpack.c.l.b16 %v2377
        %v2970 = vpack.c.b16 %v2967, %v2966
        %v2971 = vpack.c.b16 %v2969, %v2968
        %2974 = vmatprep.subr.bf16.mxu0 0
        %2975 = vmatpush1.bf16.msra.mxu0 %v2970
        %2976 = vmatprep.subr.bf16.mxu0 0
        %2977 = vmatpush1.bf16.msra.mxu0 %v2971
        %2978 = vmatprep.subr.bf16.mxu0 0
        %2979 = vmatpush1.bf16.msra.mxu0 0
        %2980 = vmatprep.subr.bf16.mxu0 0
        %2981 = vmatpush1.bf16.msra.mxu0 0
        %2982 = vmatprep.subr.bf16.mxu0 0
        %2983 = vmatpush1.bf16.msra.mxu0 0
        %2984 = vmatprep.subr.bf16.mxu0 0
        %2985 = vmatpush1.bf16.msra.mxu0 0
        %2986 = vmatprep.subr.bf16.mxu0 0
        %2987 = vmatpush1.bf16.msra.mxu0 0
        %2988 = vmatprep.subr.bf16.mxu0 0
        %2989 = vmatpush1.bf16.msra.mxu0 0
        %2990 = vmatprep.subr.bf16.mxu0 0
        %2991 = vmatpush1.bf16.msra.mxu0 0
        %2992 = vmatprep.subr.bf16.mxu0 0
        %2993 = vmatpush1.bf16.msra.mxu0 0
        %2994 = vmatprep.subr.bf16.mxu0 0
        %2995 = vmatpush1.bf16.msra.mxu0 0
        %2996 = vmatprep.subr.bf16.mxu0 0
        %2997 = vmatpush1.bf16.msra.mxu0 0
        %2998 = vmatprep.subr.bf16.mxu0 0
        %2999 = vmatpush1.bf16.msra.mxu0 0
        %3000 = vmatprep.subr.bf16.mxu0 0
        %3001 = vmatpush1.bf16.msra.mxu0 0
        %3002 = vmatprep.subr.bf16.mxu0 0
        %3003 = vmatpush1.bf16.msra.mxu0 0
        %3004 = vmatprep.subr.bf16.mxu0 0
        %3005 = vmatpush1.bf16.msra.mxu0 0
        %3006 = vmatprep.mubr.bf16.mxu0 0
        %3007 = vmatmul.mubr.bf16.gmra.mrb[0].mxu0 %v2688
        %v3008 = vpop.f32.mrb[0].mxu0
        %v3009 = vadd.f32 %v2897, %v3008
        %v3010 = vpop.f32.mrb[0].mxu0
        %v3011 = vpop.f32.mrb[0].mxu0
        %v3012 = vpop.f32.mrb[0].mxu0
        %3013 = vdwg.mxu0
        %v3018 = vunpack.c.l.b16 %v2378
        %v3019 = vunpack.c.l.b16 %v2379
        %v3020 = vunpack.c.l.b16 %v2380
        %v3021 = vunpack.c.l.b16 %v2381
        %v3022 = vpack.c.b16 %v3019, %v3018
        %v3023 = vpack.c.b16 %v3021, %v3020
        %3026 = vmatprep.subr.bf16.mxu0 0
        %3027 = vmatpush1.bf16.msra.mxu0 %v3022
        %3028 = vmatprep.subr.bf16.mxu0 0
        %3029 = vmatpush1.bf16.msra.mxu0 %v3023
        %3030 = vmatprep.subr.bf16.mxu0 0
        %3031 = vmatpush1.bf16.msra.mxu0 0
        %3032 = vmatprep.subr.bf16.mxu0 0
        %3033 = vmatpush1.bf16.msra.mxu0 0
        %3034 = vmatprep.subr.bf16.mxu0 0
        %3035 = vmatpush1.bf16.msra.mxu0 0
        %3036 = vmatprep.subr.bf16.mxu0 0
        %3037 = vmatpush1.bf16.msra.mxu0 0
        %3038 = vmatprep.subr.bf16.mxu0 0
        %3039 = vmatpush1.bf16.msra.mxu0 0
        %3040 = vmatprep.subr.bf16.mxu0 0
        %3041 = vmatpush1.bf16.msra.mxu0 0
        %3042 = vmatprep.subr.bf16.mxu0 0
        %3043 = vmatpush1.bf16.msra.mxu0 0
        %3044 = vmatprep.subr.bf16.mxu0 0
        %3045 = vmatpush1.bf16.msra.mxu0 0
        %3046 = vmatprep.subr.bf16.mxu0 0
        %3047 = vmatpush1.bf16.msra.mxu0 0
        %3048 = vmatprep.subr.bf16.mxu0 0
        %3049 = vmatpush1.bf16.msra.mxu0 0
        %3050 = vmatprep.subr.bf16.mxu0 0
        %3051 = vmatpush1.bf16.msra.mxu0 0
        %3052 = vmatprep.subr.bf16.mxu0 0
        %3053 = vmatpush1.bf16.msra.mxu0 0
        %3054 = vmatprep.subr.bf16.mxu0 0
        %3055 = vmatpush1.bf16.msra.mxu0 0
        %3056 = vmatprep.subr.bf16.mxu0 0
        %3057 = vmatpush1.bf16.msra.mxu0 0
        %3058 = vmatprep.mubr.bf16.mxu0 0
        %3059 = vmatmul.mubr.bf16.gmra.mrb[0].mxu0 %v2688
        %v3060 = vpop.f32.mrb[0].mxu0
        %v3061 = vadd.f32 %v2901, %v3060
        %v3062 = vpop.f32.mrb[0].mxu0
        %v3063 = vpop.f32.mrb[0].mxu0
        %v3064 = vpop.f32.mrb[0].mxu0
        %3065 = vdwg.mxu0
        %v3070 = vunpack.c.l.b16 %v2382
        %v3071 = vunpack.c.l.b16 %v2383
        %v3072 = vunpack.c.l.b16 %v2384
        %v3073 = vunpack.c.l.b16 %v2385
        %v3074 = vpack.c.b16 %v3071, %v3070
        %v3075 = vpack.c.b16 %v3073, %v3072
        %3078 = vmatprep.subr.bf16.mxu0 0
        %3079 = vmatpush1.bf16.msra.mxu0 %v3074
        %3080 = vmatprep.subr.bf16.mxu0 0
        %3081 = vmatpush1.bf16.msra.mxu0 %v3075
        %3082 = vmatprep.subr.bf16.mxu0 0
        %3083 = vmatpush1.bf16.msra.mxu0 0
        %3084 = vmatprep.subr.bf16.mxu0 0
        %3085 = vmatpush1.bf16.msra.mxu0 0
        %3086 = vmatprep.subr.bf16.mxu0 0
        %3087 = vmatpush1.bf16.msra.mxu0 0
        %3088 = vmatprep.subr.bf16.mxu0 0
        %3089 = vmatpush1.bf16.msra.mxu0 0
        %3090 = vmatprep.subr.bf16.mxu0 0
        %3091 = vmatpush1.bf16.msra.mxu0 0
        %3092 = vmatprep.subr.bf16.mxu0 0
        %3093 = vmatpush1.bf16.msra.mxu0 0
        %3094 = vmatprep.subr.bf16.mxu0 0
        %3095 = vmatpush1.bf16.msra.mxu0 0
        %3096 = vmatprep.subr.bf16.mxu0 0
        %3097 = vmatpush1.bf16.msra.mxu0 0
        %3098 = vmatprep.subr.bf16.mxu0 0
        %3099 = vmatpush1.bf16.msra.mxu0 0
        %3100 = vmatprep.subr.bf16.mxu0 0
        %3101 = vmatpush1.bf16.msra.mxu0 0
        %3102 = vmatprep.subr.bf16.mxu0 0
        %3103 = vmatpush1.bf16.msra.mxu0 0
        %3104 = vmatprep.subr.bf16.mxu0 0
        %3105 = vmatpush1.bf16.msra.mxu0 0
        %3106 = vmatprep.subr.bf16.mxu0 0
        %3107 = vmatpush1.bf16.msra.mxu0 0
        %3108 = vmatprep.subr.bf16.mxu0 0
        %3109 = vmatpush1.bf16.msra.mxu0 0
        %3110 = vmatprep.mubr.bf16.mxu0 0
        %3111 = vmatmul.mubr.bf16.gmra.mrb[0].mxu0 %v2688
        %v3112 = vpop.f32.mrb[0].mxu0
        %v3113 = vadd.f32 %v2905, %v3112
        %v3114 = vpop.f32.mrb[0].mxu0
        %v3115 = vpop.f32.mrb[0].mxu0
        %v3116 = vpop.f32.mrb[0].mxu0
        %3117 = vdwg.mxu0
        %v3118 = vld [vmem:[%s890] sm:$0xf]
        %v3119 = vld [vmem:[%s890 + $0x4] sm:$0xf]
        %v3120 = vld [vmem:[%s890 + $0x8] sm:$0xf]
        %v3121 = vld [vmem:[%s890 + $0xc] sm:$0xf]
        %v3122 = vld [vmem:[%s893] sm:$0x1]
        %v3123 = vld [vmem:[%s850] sm:$0x1]
        %v3124 = vpack.c.bf16 %v2490, %v2490
        %v3125 = vpack.c.bf16 %v2542, %v2542
        %v3126 = vpack.c.bf16 %v2594, %v2594
        %v3127 = vpack.c.bf16 %v2646, %v2646
        %v3128 = vpack.c.bf16 %v2725, %v2725
        %v3129 = vpack.c.bf16 %v2777, %v2777
        %v3130 = vpack.c.bf16 %v2829, %v2829
        %v3131 = vpack.c.bf16 %v2881, %v2881
        %v3133 = vlaneseq
        %v3134 = vshrl.u32 %v3133, 7
        %v3135 = vsub.s32 0, %v3134
        %v3136 = vrot.slane %v3123, %v3135
        %v3139 = vsel %vm1701, %v3124, 0
        %v3142 = vsel %vm1701, %v3128, 0
        %3144 = vmatprep.subr.bf16.mxu0 0
        %3145 = vmatpush1.bf16.xpose.msra.mxu0 %v3142
        %3146 = vmatprep.subr.bf16.mxu0 0
        %3147 = vmatpush1.bf16.xpose.msra.mxu0 0
        %3148 = vmatprep.subr.bf16.mxu0 0
        %3149 = vmatpush1.bf16.xpose.msra.mxu0 0
        %3150 = vmatprep.subr.bf16.mxu0 0
        %3151 = vmatpush1.bf16.xpose.msra.mxu0 0
        %3152 = vmatprep.subr.bf16.mxu0 0
        %3153 = vmatpush1.bf16.xpose.msra.mxu0 0
        %3154 = vmatprep.subr.bf16.mxu0 0
        %3155 = vmatpush1.bf16.xpose.msra.mxu0 0
        %3156 = vmatprep.subr.bf16.mxu0 0
        %3157 = vmatpush1.bf16.xpose.msra.mxu0 0
        %3158 = vmatprep.subr.bf16.mxu0 0
        %3159 = vmatpush1.bf16.xpose.msra.mxu0 0
        %3160 = vmatprep.subr.bf16.mxu0 0
        %3161 = vmatpush1.bf16.xpose.msra.mxu0 0
        %3162 = vmatprep.subr.bf16.mxu0 0
        %3163 = vmatpush1.bf16.xpose.msra.mxu0 0
        %3164 = vmatprep.subr.bf16.mxu0 0
        %3165 = vmatpush1.bf16.xpose.msra.mxu0 0
        %3166 = vmatprep.subr.bf16.mxu0 0
        %3167 = vmatpush1.bf16.xpose.msra.mxu0 0
        %3168 = vmatprep.subr.bf16.mxu0 0
        %3169 = vmatpush1.bf16.xpose.msra.mxu0 0
        %3170 = vmatprep.subr.bf16.mxu0 0
        %3171 = vmatpush1.bf16.xpose.msra.mxu0 0
        %3172 = vmatprep.subr.bf16.mxu0 0
        %3173 = vmatpush1.bf16.xpose.msra.mxu0 0
        %3174 = vmatprep.subr.bf16.mxu0 0
        %3175 = vmatpush1.bf16.xpose.msra.mxu0 0
        %3176 = vmatprep.mubr.bf16.mxu0 0
        %3177 = vmatmul.mubr.bf16.gmra.mrb[0].mxu0 %v3139
        %v3178 = vpop.f32.mrb[0].mxu0
        %v3179 = vadd.f32 %v3136, %v3178
        %v3180 = vpop.f32.mrb[0].mxu0
        %v3181 = vpop.f32.mrb[0].mxu0
        %v3182 = vpop.f32.mrb[0].mxu0
        %3183 = vdwg.mxu0
        %v3185 = vsel %vm1701, %v3125, 0
        %v3188 = vsel %vm1701, %v3129, 0
        %3190 = vmatprep.subr.bf16.mxu0 0
        %3191 = vmatpush1.bf16.xpose.msra.mxu0 %v3188
        %3192 = vmatprep.subr.bf16.mxu0 0
        %3193 = vmatpush1.bf16.xpose.msra.mxu0 0
        %3194 = vmatprep.subr.bf16.mxu0 0
        %3195 = vmatpush1.bf16.xpose.msra.mxu0 0
        %3196 = vmatprep.subr.bf16.mxu0 0
        %3197 = vmatpush1.bf16.xpose.msra.mxu0 0
        %3198 = vmatprep.subr.bf16.mxu0 0
        %3199 = vmatpush1.bf16.xpose.msra.mxu0 0
        %3200 = vmatprep.subr.bf16.mxu0 0
        %3201 = vmatpush1.bf16.xpose.msra.mxu0 0
        %3202 = vmatprep.subr.bf16.mxu0 0
        %3203 = vmatpush1.bf16.xpose.msra.mxu0 0
        %3204 = vmatprep.subr.bf16.mxu0 0
        %3205 = vmatpush1.bf16.xpose.msra.mxu0 0
        %3206 = vmatprep.subr.bf16.mxu0 0
        %3207 = vmatpush1.bf16.xpose.msra.mxu0 0
        %3208 = vmatprep.subr.bf16.mxu0 0
        %3209 = vmatpush1.bf16.xpose.msra.mxu0 0
        %3210 = vmatprep.subr.bf16.mxu0 0
        %3211 = vmatpush1.bf16.xpose.msra.mxu0 0
        %3212 = vmatprep.subr.bf16.mxu0 0
        %3213 = vmatpush1.bf16.xpose.msra.mxu0 0
        %3214 = vmatprep.subr.bf16.mxu0 0
        %3215 = vmatpush1.bf16.xpose.msra.mxu0 0
        %3216 = vmatprep.subr.bf16.mxu0 0
        %3217 = vmatpush1.bf16.xpose.msra.mxu0 0
        %3218 = vmatprep.subr.bf16.mxu0 0
        %3219 = vmatpush1.bf16.xpose.msra.mxu0 0
        %3220 = vmatprep.subr.bf16.mxu0 0
        %3221 = vmatpush1.bf16.xpose.msra.mxu0 0
        %3222 = vmatprep.mubr.bf16.mxu0 0
        %3223 = vmatmul.mubr.bf16.gmra.mrb[0].mxu0 %v3185
        %v3224 = vpop.f32.mrb[0].mxu0
        %v3225 = vadd.f32 %v3136, %v3224
        %v3226 = vpop.f32.mrb[0].mxu0
        %v3227 = vpop.f32.mrb[0].mxu0
        %v3228 = vpop.f32.mrb[0].mxu0
        %3229 = vdwg.mxu0
        %v3231 = vsel %vm1701, %v3126, 0
        %v3234 = vsel %vm1701, %v3130, 0
        %3236 = vmatprep.subr.bf16.mxu0 0
        %3237 = vmatpush1.bf16.xpose.msra.mxu0 %v3234
        %3238 = vmatprep.subr.bf16.mxu0 0
        %3239 = vmatpush1.bf16.xpose.msra.mxu0 0
        %3240 = vmatprep.subr.bf16.mxu0 0
        %3241 = vmatpush1.bf16.xpose.msra.mxu0 0
        %3242 = vmatprep.subr.bf16.mxu0 0
        %3243 = vmatpush1.bf16.xpose.msra.mxu0 0
        %3244 = vmatprep.subr.bf16.mxu0 0
        %3245 = vmatpush1.bf16.xpose.msra.mxu0 0
        %3246 = vmatprep.subr.bf16.mxu0 0
        %3247 = vmatpush1.bf16.xpose.msra.mxu0 0
        %3248 = vmatprep.subr.bf16.mxu0 0
        %3249 = vmatpush1.bf16.xpose.msra.mxu0 0
        %3250 = vmatprep.subr.bf16.mxu0 0
        %3251 = vmatpush1.bf16.xpose.msra.mxu0 0
        %3252 = vmatprep.subr.bf16.mxu0 0
        %3253 = vmatpush1.bf16.xpose.msra.mxu0 0
        %3254 = vmatprep.subr.bf16.mxu0 0
        %3255 = vmatpush1.bf16.xpose.msra.mxu0 0
        %3256 = vmatprep.subr.bf16.mxu0 0
        %3257 = vmatpush1.bf16.xpose.msra.mxu0 0
        %3258 = vmatprep.subr.bf16.mxu0 0
        %3259 = vmatpush1.bf16.xpose.msra.mxu0 0
        %3260 = vmatprep.subr.bf16.mxu0 0
        %3261 = vmatpush1.bf16.xpose.msra.mxu0 0
        %3262 = vmatprep.subr.bf16.mxu0 0
        %3263 = vmatpush1.bf16.xpose.msra.mxu0 0
        %3264 = vmatprep.subr.bf16.mxu0 0
        %3265 = vmatpush1.bf16.xpose.msra.mxu0 0
        %3266 = vmatprep.subr.bf16.mxu0 0
        %3267 = vmatpush1.bf16.xpose.msra.mxu0 0
        %3268 = vmatprep.mubr.bf16.mxu0 0
        %3269 = vmatmul.mubr.bf16.gmra.mrb[0].mxu0 %v3231
        %v3270 = vpop.f32.mrb[0].mxu0
        %v3271 = vadd.f32 %v3136, %v3270
        %v3272 = vpop.f32.mrb[0].mxu0
        %v3273 = vpop.f32.mrb[0].mxu0
        %v3274 = vpop.f32.mrb[0].mxu0
        %3275 = vdwg.mxu0
        %v3277 = vsel %vm1701, %v3127, 0
        %v3280 = vsel %vm1701, %v3131, 0
        %3282 = vmatprep.subr.bf16.mxu0 0
        %3283 = vmatpush1.bf16.xpose.msra.mxu0 %v3280
        %3284 = vmatprep.subr.bf16.mxu0 0
        %3285 = vmatpush1.bf16.xpose.msra.mxu0 0
        %3286 = vmatprep.subr.bf16.mxu0 0
        %3287 = vmatpush1.bf16.xpose.msra.mxu0 0
        %3288 = vmatprep.subr.bf16.mxu0 0
        %3289 = vmatpush1.bf16.xpose.msra.mxu0 0
        %3290 = vmatprep.subr.bf16.mxu0 0
        %3291 = vmatpush1.bf16.xpose.msra.mxu0 0
        %3292 = vmatprep.subr.bf16.mxu0 0
        %3293 = vmatpush1.bf16.xpose.msra.mxu0 0
        %3294 = vmatprep.subr.bf16.mxu0 0
        %3295 = vmatpush1.bf16.xpose.msra.mxu0 0
        %3296 = vmatprep.subr.bf16.mxu0 0
        %3297 = vmatpush1.bf16.xpose.msra.mxu0 0
        %3298 = vmatprep.subr.bf16.mxu0 0
        %3299 = vmatpush1.bf16.xpose.msra.mxu0 0
        %3300 = vmatprep.subr.bf16.mxu0 0
        %3301 = vmatpush1.bf16.xpose.msra.mxu0 0
        %3302 = vmatprep.subr.bf16.mxu0 0
        %3303 = vmatpush1.bf16.xpose.msra.mxu0 0
        %3304 = vmatprep.subr.bf16.mxu0 0
        %3305 = vmatpush1.bf16.xpose.msra.mxu0 0
        %3306 = vmatprep.subr.bf16.mxu0 0
        %3307 = vmatpush1.bf16.xpose.msra.mxu0 0
        %3308 = vmatprep.subr.bf16.mxu0 0
        %3309 = vmatpush1.bf16.xpose.msra.mxu0 0
        %3310 = vmatprep.subr.bf16.mxu0 0
        %3311 = vmatpush1.bf16.xpose.msra.mxu0 0
        %3312 = vmatprep.subr.bf16.mxu0 0
        %3313 = vmatpush1.bf16.xpose.msra.mxu0 0
        %3314 = vmatprep.mubr.bf16.mxu0 0
        %3315 = vmatmul.mubr.bf16.gmra.mrb[0].mxu0 %v3277
        %v3316 = vpop.f32.mrb[0].mxu0
        %v3317 = vadd.f32 %v3136, %v3316
        %v3318 = vpop.f32.mrb[0].mxu0
        %v3319 = vpop.f32.mrb[0].mxu0
        %v3320 = vpop.f32.mrb[0].mxu0
        %3321 = vdwg.mxu0
        %v3322 = vsel %vm1701, %v3179, -inf
        %3323 = vmax.xlane.f32.xlu0 %v3322
        %v3324 = vpop.xlane.xlu0 %3323
        %v3325 = vsel %vm1701, %v3225, -inf
        %3326 = vmax.xlane.f32.xlu0 %v3325
        %v3327 = vpop.xlane.xlu0 %3326
        %v3328 = vsel %vm1701, %v3271, -inf
        %3329 = vmax.xlane.f32.xlu0 %v3328
        %v3330 = vpop.xlane.xlu0 %3329
        %v3331 = vsel %vm1701, %v3317, -inf
        %3332 = vmax.xlane.f32.xlu0 %v3331
        %v3333 = vpop.xlane.xlu0 %3332
        %v3334 = vsub.f32 %v3179, %v3324
        %v3335 = vsub.f32 %v3225, %v3327
        %v3336 = vsub.f32 %v3271, %v3330
        %v3337 = vsub.f32 %v3317, %v3333
        %v3338 = vmul.f32 %v3334, 1.442695
        %v3339 = vpow.pop %v3338
        %v3340 = vmul.f32 %v3335, 1.442695
        %v3341 = vpow.pop %v3340
        %v3342 = vmul.f32 %v3336, 1.442695
        %v3343 = vpow.pop %v3342
        %v3344 = vmul.f32 %v3337, 1.442695
        %v3345 = vpow.pop %v3344
        %v3346 = vsel %vm1701, %v3339, 0.0
        %3347 = vadd.xlane.f32.xlu0 %v3346
        %v3348 = vpop.xlane.xlu0 %3347
        %v3349 = vsel %vm1701, %v3341, 0.0
        %3350 = vadd.xlane.f32.xlu0 %v3349
        %v3351 = vpop.xlane.xlu0 %3350
        %v3352 = vsel %vm1701, %v3343, 0.0
        %3353 = vadd.xlane.f32.xlu0 %v3352
        %v3354 = vpop.xlane.xlu0 %3353
        %v3355 = vsel %vm1701, %v3345, 0.0
        %3356 = vadd.xlane.f32.xlu0 %v3355
        %v3357 = vpop.xlane.xlu0 %3356
        %v3358 = vrcp.pop %v3348
        %v3359 = vrcp.pop %v3351
        %v3360 = vrcp.pop %v3354
        %v3361 = vrcp.pop %v3357
        %v3362 = vmul.f32 %v3339, %v3358
        %v3363 = vmul.f32 %v3341, %v3359
        %v3364 = vmul.f32 %v3343, %v3360
        %v3365 = vmul.f32 %v3345, %v3361
        %v3366 = vpack.c.bf16 %v3362, %v3362
        %v3367 = vpack.c.bf16 %v3363, %v3363
        %v3368 = vpack.c.bf16 %v3364, %v3364
        %v3369 = vpack.c.bf16 %v3365, %v3365
        %v3370 = vpack.c.bf16 %v2957, %v2957
        %v3371 = vpack.c.bf16 %v3009, %v3009
        %v3372 = vpack.c.bf16 %v3061, %v3061
        %v3373 = vpack.c.bf16 %v3113, %v3113
        %v3375 = vsel %vm1701, %v3366, 0
        %v3378 = vsel %vm1941, %v3370, 0
        %3380 = vmatprep.subr.bf16.mxu0 0
        %3381 = vmatpush1.bf16.msra.mxu0 %v3378
        %3382 = vmatprep.subr.bf16.mxu0 0
        %3383 = vmatpush1.bf16.msra.mxu0 0
        %3384 = vmatprep.subr.bf16.mxu0 0
        %3385 = vmatpush1.bf16.msra.mxu0 0
        %3386 = vmatprep.subr.bf16.mxu0 0
        %3387 = vmatpush1.bf16.msra.mxu0 0
        %3388 = vmatprep.subr.bf16.mxu0 0
        %3389 = vmatpush1.bf16.msra.mxu0 0
        %3390 = vmatprep.subr.bf16.mxu0 0
        %3391 = vmatpush1.bf16.msra.mxu0 0
        %3392 = vmatprep.subr.bf16.mxu0 0
        %3393 = vmatpush1.bf16.msra.mxu0 0
        %3394 = vmatprep.subr.bf16.mxu0 0
        %3395 = vmatpush1.bf16.msra.mxu0 0
        %3396 = vmatprep.subr.bf16.mxu0 0
        %3397 = vmatpush1.bf16.msra.mxu0 0
        %3398 = vmatprep.subr.bf16.mxu0 0
        %3399 = vmatpush1.bf16.msra.mxu0 0
        %3400 = vmatprep.subr.bf16.mxu0 0
        %3401 = vmatpush1.bf16.msra.mxu0 0
        %3402 = vmatprep.subr.bf16.mxu0 0
        %3403 = vmatpush1.bf16.msra.mxu0 0
        %3404 = vmatprep.subr.bf16.mxu0 0
        %3405 = vmatpush1.bf16.msra.mxu0 0
        %3406 = vmatprep.subr.bf16.mxu0 0
        %3407 = vmatpush1.bf16.msra.mxu0 0
        %3408 = vmatprep.subr.bf16.mxu0 0
        %3409 = vmatpush1.bf16.msra.mxu0 0
        %3410 = vmatprep.subr.bf16.mxu0 0
        %3411 = vmatpush1.bf16.msra.mxu0 0
        %3412 = vmatprep.mubr.bf16.mxu0 0
        %3413 = vmatmul.mubr.bf16.gmra.mrb[0].mxu0 %v3375
        %v3414 = vpop.f32.mrb[0].mxu0
        %v3415 = vadd.f32 0.0, %v3414
        %v3416 = vpop.f32.mrb[0].mxu0
        %v3417 = vpop.f32.mrb[0].mxu0
        %v3418 = vpop.f32.mrb[0].mxu0
        %3419 = vdwg.mxu0
        %v3421 = vsel %vm1701, %v3367, 0
        %v3424 = vsel %vm1941, %v3371, 0
        %3426 = vmatprep.subr.bf16.mxu0 0
        %3427 = vmatpush1.bf16.msra.mxu0 %v3424
        %3428 = vmatprep.subr.bf16.mxu0 0
        %3429 = vmatpush1.bf16.msra.mxu0 0
        %3430 = vmatprep.subr.bf16.mxu0 0
        %3431 = vmatpush1.bf16.msra.mxu0 0
        %3432 = vmatprep.subr.bf16.mxu0 0
        %3433 = vmatpush1.bf16.msra.mxu0 0
        %3434 = vmatprep.subr.bf16.mxu0 0
        %3435 = vmatpush1.bf16.msra.mxu0 0
        %3436 = vmatprep.subr.bf16.mxu0 0
        %3437 = vmatpush1.bf16.msra.mxu0 0
        %3438 = vmatprep.subr.bf16.mxu0 0
        %3439 = vmatpush1.bf16.msra.mxu0 0
        %3440 = vmatprep.subr.bf16.mxu0 0
        %3441 = vmatpush1.bf16.msra.mxu0 0
        %3442 = vmatprep.subr.bf16.mxu0 0
        %3443 = vmatpush1.bf16.msra.mxu0 0
        %3444 = vmatprep.subr.bf16.mxu0 0
        %3445 = vmatpush1.bf16.msra.mxu0 0
        %3446 = vmatprep.subr.bf16.mxu0 0
        %3447 = vmatpush1.bf16.msra.mxu0 0
        %3448 = vmatprep.subr.bf16.mxu0 0
        %3449 = vmatpush1.bf16.msra.mxu0 0
        %3450 = vmatprep.subr.bf16.mxu0 0
        %3451 = vmatpush1.bf16.msra.mxu0 0
        %3452 = vmatprep.subr.bf16.mxu0 0
        %3453 = vmatpush1.bf16.msra.mxu0 0
        %3454 = vmatprep.subr.bf16.mxu0 0
        %3455 = vmatpush1.bf16.msra.mxu0 0
        %3456 = vmatprep.subr.bf16.mxu0 0
        %3457 = vmatpush1.bf16.msra.mxu0 0
        %3458 = vmatprep.mubr.bf16.mxu0 0
        %3459 = vmatmul.mubr.bf16.gmra.mrb[0].mxu0 %v3421
        %v3460 = vpop.f32.mrb[0].mxu0
        %v3461 = vadd.f32 0.0, %v3460
        %v3462 = vpop.f32.mrb[0].mxu0
        %v3463 = vpop.f32.mrb[0].mxu0
        %v3464 = vpop.f32.mrb[0].mxu0
        %3465 = vdwg.mxu0
        %v3467 = vsel %vm1701, %v3368, 0
        %v3470 = vsel %vm1941, %v3372, 0
        %3472 = vmatprep.subr.bf16.mxu0 0
        %3473 = vmatpush1.bf16.msra.mxu0 %v3470
        %3474 = vmatprep.subr.bf16.mxu0 0
        %3475 = vmatpush1.bf16.msra.mxu0 0
        %3476 = vmatprep.subr.bf16.mxu0 0
        %3477 = vmatpush1.bf16.msra.mxu0 0
        %3478 = vmatprep.subr.bf16.mxu0 0
        %3479 = vmatpush1.bf16.msra.mxu0 0
        %3480 = vmatprep.subr.bf16.mxu0 0
        %3481 = vmatpush1.bf16.msra.mxu0 0
        %3482 = vmatprep.subr.bf16.mxu0 0
        %3483 = vmatpush1.bf16.msra.mxu0 0
        %3484 = vmatprep.subr.bf16.mxu0 0
        %3485 = vmatpush1.bf16.msra.mxu0 0
        %3486 = vmatprep.subr.bf16.mxu0 0
        %3487 = vmatpush1.bf16.msra.mxu0 0
        %3488 = vmatprep.subr.bf16.mxu0 0
        %3489 = vmatpush1.bf16.msra.mxu0 0
        %3490 = vmatprep.subr.bf16.mxu0 0
        %3491 = vmatpush1.bf16.msra.mxu0 0
        %3492 = vmatprep.subr.bf16.mxu0 0
        %3493 = vmatpush1.bf16.msra.mxu0 0
        %3494 = vmatprep.subr.bf16.mxu0 0
        %3495 = vmatpush1.bf16.msra.mxu0 0
        %3496 = vmatprep.subr.bf16.mxu0 0
        %3497 = vmatpush1.bf16.msra.mxu0 0
        %3498 = vmatprep.subr.bf16.mxu0 0
        %3499 = vmatpush1.bf16.msra.mxu0 0
        %3500 = vmatprep.subr.bf16.mxu0 0
        %3501 = vmatpush1.bf16.msra.mxu0 0
        %3502 = vmatprep.subr.bf16.mxu0 0
        %3503 = vmatpush1.bf16.msra.mxu0 0
        %3504 = vmatprep.mubr.bf16.mxu0 0
        %3505 = vmatmul.mubr.bf16.gmra.mrb[0].mxu0 %v3467
        %v3506 = vpop.f32.mrb[0].mxu0
        %v3507 = vadd.f32 0.0, %v3506
        %v3508 = vpop.f32.mrb[0].mxu0
        %v3509 = vpop.f32.mrb[0].mxu0
        %v3510 = vpop.f32.mrb[0].mxu0
        %3511 = vdwg.mxu0
        %v3513 = vsel %vm1701, %v3369, 0
        %v3516 = vsel %vm1941, %v3373, 0
        %3518 = vmatprep.subr.bf16.mxu0 0
        %3519 = vmatpush1.bf16.msra.mxu0 %v3516
        %3520 = vmatprep.subr.bf16.mxu0 0
        %3521 = vmatpush1.bf16.msra.mxu0 0
        %3522 = vmatprep.subr.bf16.mxu0 0
        %3523 = vmatpush1.bf16.msra.mxu0 0
        %3524 = vmatprep.subr.bf16.mxu0 0
        %3525 = vmatpush1.bf16.msra.mxu0 0
        %3526 = vmatprep.subr.bf16.mxu0 0
        %3527 = vmatpush1.bf16.msra.mxu0 0
        %3528 = vmatprep.subr.bf16.mxu0 0
        %3529 = vmatpush1.bf16.msra.mxu0 0
        %3530 = vmatprep.subr.bf16.mxu0 0
        %3531 = vmatpush1.bf16.msra.mxu0 0
        %3532 = vmatprep.subr.bf16.mxu0 0
        %3533 = vmatpush1.bf16.msra.mxu0 0
        %3534 = vmatprep.subr.bf16.mxu0 0
        %3535 = vmatpush1.bf16.msra.mxu0 0
        %3536 = vmatprep.subr.bf16.mxu0 0
        %3537 = vmatpush1.bf16.msra.mxu0 0
        %3538 = vmatprep.subr.bf16.mxu0 0
        %3539 = vmatpush1.bf16.msra.mxu0 0
        %3540 = vmatprep.subr.bf16.mxu0 0
        %3541 = vmatpush1.bf16.msra.mxu0 0
        %3542 = vmatprep.subr.bf16.mxu0 0
        %3543 = vmatpush1.bf16.msra.mxu0 0
        %3544 = vmatprep.subr.bf16.mxu0 0
        %3545 = vmatpush1.bf16.msra.mxu0 0
        %3546 = vmatprep.subr.bf16.mxu0 0
        %3547 = vmatpush1.bf16.msra.mxu0 0
        %3548 = vmatprep.subr.bf16.mxu0 0
        %3549 = vmatpush1.bf16.msra.mxu0 0
        %3550 = vmatprep.mubr.bf16.mxu0 0
        %3551 = vmatmul.mubr.bf16.gmra.mrb[0].mxu0 %v3513
        %v3552 = vpop.f32.mrb[0].mxu0
        %v3553 = vadd.f32 0.0, %v3552
        %v3554 = vpop.f32.mrb[0].mxu0
        %v3555 = vpop.f32.mrb[0].mxu0
        %v3556 = vpop.f32.mrb[0].mxu0
        %3557 = vdwg.mxu0
        %v3558 = vpack.c.bf16 %v3415, %v3415
        %v3559 = vpack.c.bf16 %v3461, %v3461
        %v3560 = vpack.c.bf16 %v3507, %v3507
        %v3561 = vpack.c.bf16 %v3553, %v3553
        %v3563 = vsel %vm1701, %v3558, 0
        %v3566 = vsel %vm1941, %v3118, 0
        %3568 = vmatprep.subr.bf16.mxu0 0
        %3569 = vmatpush1.bf16.msra.mxu0 %v3566
        %3570 = vmatprep.subr.bf16.mxu0 0
        %3571 = vmatpush1.bf16.msra.mxu0 0
        %3572 = vmatprep.subr.bf16.mxu0 0
        %3573 = vmatpush1.bf16.msra.mxu0 0
        %3574 = vmatprep.subr.bf16.mxu0 0
        %3575 = vmatpush1.bf16.msra.mxu0 0
        %3576 = vmatprep.subr.bf16.mxu0 0
        %3577 = vmatpush1.bf16.msra.mxu0 0
        %3578 = vmatprep.subr.bf16.mxu0 0
        %3579 = vmatpush1.bf16.msra.mxu0 0
        %3580 = vmatprep.subr.bf16.mxu0 0
        %3581 = vmatpush1.bf16.msra.mxu0 0
        %3582 = vmatprep.subr.bf16.mxu0 0
        %3583 = vmatpush1.bf16.msra.mxu0 0
        %3584 = vmatprep.subr.bf16.mxu0 0
        %3585 = vmatpush1.bf16.msra.mxu0 0
        %3586 = vmatprep.subr.bf16.mxu0 0
        %3587 = vmatpush1.bf16.msra.mxu0 0
        %3588 = vmatprep.subr.bf16.mxu0 0
        %3589 = vmatpush1.bf16.msra.mxu0 0
        %3590 = vmatprep.subr.bf16.mxu0 0
        %3591 = vmatpush1.bf16.msra.mxu0 0
        %3592 = vmatprep.subr.bf16.mxu0 0
        %3593 = vmatpush1.bf16.msra.mxu0 0
        %3594 = vmatprep.subr.bf16.mxu0 0
        %3595 = vmatpush1.bf16.msra.mxu0 0
        %3596 = vmatprep.subr.bf16.mxu0 0
        %3597 = vmatpush1.bf16.msra.mxu0 0
        %3598 = vmatprep.subr.bf16.mxu0 0
        %3599 = vmatpush1.bf16.msra.mxu0 0
        %3600 = vmatprep.mubr.bf16.mxu0 0
        %3601 = vmatmul.mubr.bf16.gmra.mrb[0].mxu0 %v3563
        %v3602 = vpop.f32.mrb[0].mxu0
        %v3603 = vadd.f32 0.0, %v3602
        %v3604 = vpop.f32.mrb[0].mxu0
        %v3605 = vpop.f32.mrb[0].mxu0
        %v3606 = vpop.f32.mrb[0].mxu0
        %3607 = vdwg.mxu0
        %v3609 = vsel %vm1701, %v3559, 0
        %v3612 = vsel %vm1941, %v3119, 0
        %3614 = vmatprep.subr.bf16.mxu0 0
        %3615 = vmatpush1.bf16.msra.mxu0 %v3612
        %3616 = vmatprep.subr.bf16.mxu0 0
        %3617 = vmatpush1.bf16.msra.mxu0 0
        %3618 = vmatprep.subr.bf16.mxu0 0
        %3619 = vmatpush1.bf16.msra.mxu0 0
        %3620 = vmatprep.subr.bf16.mxu0 0
        %3621 = vmatpush1.bf16.msra.mxu0 0
        %3622 = vmatprep.subr.bf16.mxu0 0
        %3623 = vmatpush1.bf16.msra.mxu0 0
        %3624 = vmatprep.subr.bf16.mxu0 0
        %3625 = vmatpush1.bf16.msra.mxu0 0
        %3626 = vmatprep.subr.bf16.mxu0 0
        %3627 = vmatpush1.bf16.msra.mxu0 0
        %3628 = vmatprep.subr.bf16.mxu0 0
        %3629 = vmatpush1.bf16.msra.mxu0 0
        %3630 = vmatprep.subr.bf16.mxu0 0
        %3631 = vmatpush1.bf16.msra.mxu0 0
        %3632 = vmatprep.subr.bf16.mxu0 0
        %3633 = vmatpush1.bf16.msra.mxu0 0
        %3634 = vmatprep.subr.bf16.mxu0 0
        %3635 = vmatpush1.bf16.msra.mxu0 0
        %3636 = vmatprep.subr.bf16.mxu0 0
        %3637 = vmatpush1.bf16.msra.mxu0 0
        %3638 = vmatprep.subr.bf16.mxu0 0
        %3639 = vmatpush1.bf16.msra.mxu0 0
        %3640 = vmatprep.subr.bf16.mxu0 0
        %3641 = vmatpush1.bf16.msra.mxu0 0
        %3642 = vmatprep.subr.bf16.mxu0 0
        %3643 = vmatpush1.bf16.msra.mxu0 0
        %3644 = vmatprep.subr.bf16.mxu0 0
        %3645 = vmatpush1.bf16.msra.mxu0 0
        %3646 = vmatprep.mubr.bf16.mxu0 0
        %3647 = vmatmul.mubr.bf16.gmra.mrb[0].mxu0 %v3609
        %v3648 = vpop.f32.mrb[0].mxu0
        %v3649 = vadd.f32 0.0, %v3648
        %v3650 = vpop.f32.mrb[0].mxu0
        %v3651 = vpop.f32.mrb[0].mxu0
        %v3652 = vpop.f32.mrb[0].mxu0
        %3653 = vdwg.mxu0
        %v3655 = vsel %vm1701, %v3560, 0
        %v3658 = vsel %vm1941, %v3120, 0
        %3660 = vmatprep.subr.bf16.mxu0 0
        %3661 = vmatpush1.bf16.msra.mxu0 %v3658
        %3662 = vmatprep.subr.bf16.mxu0 0
        %3663 = vmatpush1.bf16.msra.mxu0 0
        %3664 = vmatprep.subr.bf16.mxu0 0
        %3665 = vmatpush1.bf16.msra.mxu0 0
        %3666 = vmatprep.subr.bf16.mxu0 0
        %3667 = vmatpush1.bf16.msra.mxu0 0
        %3668 = vmatprep.subr.bf16.mxu0 0
        %3669 = vmatpush1.bf16.msra.mxu0 0
        %3670 = vmatprep.subr.bf16.mxu0 0
        %3671 = vmatpush1.bf16.msra.mxu0 0
        %3672 = vmatprep.subr.bf16.mxu0 0
        %3673 = vmatpush1.bf16.msra.mxu0 0
        %3674 = vmatprep.subr.bf16.mxu0 0
        %3675 = vmatpush1.bf16.msra.mxu0 0
        %3676 = vmatprep.subr.bf16.mxu0 0
        %3677 = vmatpush1.bf16.msra.mxu0 0
        %3678 = vmatprep.subr.bf16.mxu0 0
        %3679 = vmatpush1.bf16.msra.mxu0 0
        %3680 = vmatprep.subr.bf16.mxu0 0
        %3681 = vmatpush1.bf16.msra.mxu0 0
        %3682 = vmatprep.subr.bf16.mxu0 0
        %3683 = vmatpush1.bf16.msra.mxu0 0
        %3684 = vmatprep.subr.bf16.mxu0 0
        %3685 = vmatpush1.bf16.msra.mxu0 0
        %3686 = vmatprep.subr.bf16.mxu0 0
        %3687 = vmatpush1.bf16.msra.mxu0 0
        %3688 = vmatprep.subr.bf16.mxu0 0
        %3689 = vmatpush1.bf16.msra.mxu0 0
        %3690 = vmatprep.subr.bf16.mxu0 0
        %3691 = vmatpush1.bf16.msra.mxu0 0
        %3692 = vmatprep.mubr.bf16.mxu0 0
        %3693 = vmatmul.mubr.bf16.gmra.mrb[0].mxu0 %v3655
        %v3694 = vpop.f32.mrb[0].mxu0
        %v3695 = vadd.f32 0.0, %v3694
        %v3696 = vpop.f32.mrb[0].mxu0
        %v3697 = vpop.f32.mrb[0].mxu0
        %v3698 = vpop.f32.mrb[0].mxu0
        %3699 = vdwg.mxu0
        %v3701 = vsel %vm1701, %v3561, 0
        %v3704 = vsel %vm1941, %v3121, 0
        %3706 = vmatprep.subr.bf16.mxu0 0
        %3707 = vmatpush1.bf16.msra.mxu0 %v3704
        %3708 = vmatprep.subr.bf16.mxu0 0
        %3709 = vmatpush1.bf16.msra.mxu0 0
        %3710 = vmatprep.subr.bf16.mxu0 0
        %3711 = vmatpush1.bf16.msra.mxu0 0
        %3712 = vmatprep.subr.bf16.mxu0 0
        %3713 = vmatpush1.bf16.msra.mxu0 0
        %3714 = vmatprep.subr.bf16.mxu0 0
        %3715 = vmatpush1.bf16.msra.mxu0 0
        %3716 = vmatprep.subr.bf16.mxu0 0
        %3717 = vmatpush1.bf16.msra.mxu0 0
        %3718 = vmatprep.subr.bf16.mxu0 0
        %3719 = vmatpush1.bf16.msra.mxu0 0
        %3720 = vmatprep.subr.bf16.mxu0 0
        %3721 = vmatpush1.bf16.msra.mxu0 0
        %3722 = vmatprep.subr.bf16.mxu0 0
        %3723 = vmatpush1.bf16.msra.mxu0 0
        %3724 = vmatprep.subr.bf16.mxu0 0
        %3725 = vmatpush1.bf16.msra.mxu0 0
        %3726 = vmatprep.subr.bf16.mxu0 0
        %3727 = vmatpush1.bf16.msra.mxu0 0
        %3728 = vmatprep.subr.bf16.mxu0 0
        %3729 = vmatpush1.bf16.msra.mxu0 0
        %3730 = vmatprep.subr.bf16.mxu0 0
        %3731 = vmatpush1.bf16.msra.mxu0 0
        %3732 = vmatprep.subr.bf16.mxu0 0
        %3733 = vmatpush1.bf16.msra.mxu0 0
        %3734 = vmatprep.subr.bf16.mxu0 0
        %3735 = vmatpush1.bf16.msra.mxu0 0
        %3736 = vmatprep.subr.bf16.mxu0 0
        %3737 = vmatpush1.bf16.msra.mxu0 0
        %3738 = vmatprep.mubr.bf16.mxu0 0
        %3739 = vmatmul.mubr.bf16.gmra.mrb[0].mxu0 %v3701
        %v3740 = vpop.f32.mrb[0].mxu0
        %v3741 = vadd.f32 0.0, %v3740
        %v3742 = vpop.f32.mrb[0].mxu0
        %v3743 = vpop.f32.mrb[0].mxu0
        %v3744 = vpop.f32.mrb[0].mxu0
        %3745 = vdwg.mxu0
        %v3746 = vsel %vm1024, %v3603, 0.0
        %v3747 = vsel %vm1024, %v3649, 0.0
        %v3748 = vadd.f32 %v3746, %v3747
        %v3749 = vsel %vm1024, %v3695, 0.0
        %v3750 = vadd.f32 %v3748, %v3749
        %v3751 = vsel %vm1024, %v3741, 0.0
        %v3752 = vadd.f32 %v3750, %v3751
        %v3754 = vlaneseq
        %v3755 = vshrl.u32 %v3754, 7
        %v3756 = vsub.s32 0, %v3755
        %v3757 = vrot.slane %v3122, %v3756
        %v3759 = vadd.f32 %v3752, %v3757
        %v3760 = vadd.f32 %v2353, %v3759
        %v3761 = vsel %vm1024, %v3760, 0.0
        %3762 = vadd.xlane.f32.xlu0 %v3761
        %v3763 = vpop.xlane.xlu0 %3762
        %v3764 = vmul.f32 %v3763, %v2329
        %v3765 = vsub.f32 %v3760, %v3764
        %v3766 = vmul.f32 %v3765, %v3765
        %v3767 = vsel %vm1024, %v3766, 0.0
        %3768 = vadd.xlane.f32.xlu0 %v3767
        %v3769 = vpop.xlane.xlu0 %3768
        %v3770 = vmul.f32 %v3769, %v2329
        %v3771 = vadd.f32 %v3770, 1e-05
        %v3772 = vrsqrt.pop %v3771
        %v3773 = vmul.f32 %v3765, %v3772
        %v3774 = vmul.f32 %v3773, %v2344
        %v3775 = vadd.f32 %v3774, %v2351
        %v3776 = vpack.c.bf16 %v3775, %v3775
        %v3777 = vld [vmem:[%s904] sm:$0xf]
        %v3778 = vld [vmem:[%s904 + $0x4] sm:$0xf]
        %v3779 = vld [vmem:[%s904 + $0x8] sm:$0xf]
        %v3780 = vld [vmem:[%s904 + $0xc] sm:$0xf]
        %v3781 = vld [vmem:[%s907] sm:$0x1]
        %v3783 = vlaneseq
        %v3784 = vshrl.u32 %v3783, 7
        %v3785 = vsub.s32 0, %v3784
        %v3786 = vrot.slane %v3781, %v3785
        %v3792 = vunpack.c.l.b16 %v3777
        %v3793 = vunpack.c.l.b16 %v3778
        %v3794 = vunpack.c.l.b16 %v3779
        %v3795 = vunpack.c.l.b16 %v3780
        %v3796 = vpack.c.b16 %v3793, %v3792
        %v3797 = vpack.c.b16 %v3795, %v3794
        %v3801 = vsel %vm1024, %v3776, 0
        %3803 = vmatprep.subr.bf16.mxu0 0
        %3804 = vmatpush1.bf16.msra.mxu0 %v3796
        %3805 = vmatprep.subr.bf16.mxu0 0
        %3806 = vmatpush1.bf16.msra.mxu0 %v3797
        %3807 = vmatprep.subr.bf16.mxu0 0
        %3808 = vmatpush1.bf16.msra.mxu0 0
        %3809 = vmatprep.subr.bf16.mxu0 0
        %3810 = vmatpush1.bf16.msra.mxu0 0
        %3811 = vmatprep.subr.bf16.mxu0 0
        %3812 = vmatpush1.bf16.msra.mxu0 0
        %3813 = vmatprep.subr.bf16.mxu0 0
        %3814 = vmatpush1.bf16.msra.mxu0 0
        %3815 = vmatprep.subr.bf16.mxu0 0
        %3816 = vmatpush1.bf16.msra.mxu0 0
        %3817 = vmatprep.subr.bf16.mxu0 0
        %3818 = vmatpush1.bf16.msra.mxu0 0
        %3819 = vmatprep.subr.bf16.mxu0 0
        %3820 = vmatpush1.bf16.msra.mxu0 0
        %3821 = vmatprep.subr.bf16.mxu0 0
        %3822 = vmatpush1.bf16.msra.mxu0 0
        %3823 = vmatprep.subr.bf16.mxu0 0
        %3824 = vmatpush1.bf16.msra.mxu0 0
        %3825 = vmatprep.subr.bf16.mxu0 0
        %3826 = vmatpush1.bf16.msra.mxu0 0
        %3827 = vmatprep.subr.bf16.mxu0 0
        %3828 = vmatpush1.bf16.msra.mxu0 0
        %3829 = vmatprep.subr.bf16.mxu0 0
        %3830 = vmatpush1.bf16.msra.mxu0 0
        %3831 = vmatprep.subr.bf16.mxu0 0
        %3832 = vmatpush1.bf16.msra.mxu0 0
        %3833 = vmatprep.subr.bf16.mxu0 0
        %3834 = vmatpush1.bf16.msra.mxu0 0
        %3835 = vmatprep.mubr.bf16.mxu0 0
        %3836 = vmatmul.mubr.bf16.gmra.mrb[0].mxu0 %v3801
        %v3837 = vpop.f32.mrb[0].mxu0
        %v3838 = vadd.f32 %v3786, %v3837
        %v3839 = vpop.f32.mrb[0].mxu0
        %v3840 = vpop.f32.mrb[0].mxu0
        %v3841 = vpop.f32.mrb[0].mxu0
        %3842 = vdwg.mxu0
        %v3843 = vmax.f32 %v3838, 0.0
        %v3844 = vpack.c.bf16 %v3843, %v3843
        %v3845 = vld [vmem:[%s912] sm:$0xf]
        %v3846 = vld [vmem:[%s912 + $0x4] sm:$0xf]
        %v3847 = vld [vmem:[%s912 + $0x8] sm:$0xf]
        %v3848 = vld [vmem:[%s912 + $0xc] sm:$0xf]
        %v3849 = vld [vmem:[%s912 + $0x10] sm:$0xf]
        %v3850 = vld [vmem:[%s912 + $0x14] sm:$0xf]
        %v3851 = vld [vmem:[%s912 + $0x18] sm:$0xf]
        %v3852 = vld [vmem:[%s912 + $0x1c] sm:$0xf]
        %v3853 = vld [vmem:[%s912 + $0x20] sm:$0xf]
        %v3854 = vld [vmem:[%s912 + $0x24] sm:$0xf]
        %v3855 = vld [vmem:[%s912 + $0x28] sm:$0xf]
        %v3856 = vld [vmem:[%s912 + $0x2c] sm:$0xf]
        %v3857 = vld [vmem:[%s912 + $0x30] sm:$0xf]
        %v3858 = vld [vmem:[%s912 + $0x34] sm:$0xf]
        %v3859 = vld [vmem:[%s912 + $0x38] sm:$0xf]
        %v3860 = vld [vmem:[%s912 + $0x3c] sm:$0xf]
        %v3861 = vld [vmem:[%s915] sm:$0x1]
        %v3863 = vlaneseq
        %v3864 = vshrl.u32 %v3863, 7
        %v3865 = vsub.s32 0, %v3864
        %v3866 = vrot.slane %v3861, %v3865
        %v3884 = vunpack.c.l.b16 %v3845
        %v3885 = vunpack.c.l.b16 %v3846
        %v3886 = vunpack.c.l.b16 %v3847
        %v3887 = vunpack.c.l.b16 %v3848
        %v3888 = vunpack.c.l.b16 %v3849
        %v3889 = vunpack.c.l.b16 %v3850
        %v3890 = vunpack.c.l.b16 %v3851
        %v3891 = vunpack.c.l.b16 %v3852
        %v3892 = vunpack.c.l.b16 %v3853
        %v3893 = vunpack.c.l.b16 %v3854
        %v3894 = vunpack.c.l.b16 %v3855
        %v3895 = vunpack.c.l.b16 %v3856
        %v3896 = vunpack.c.l.b16 %v3857
        %v3897 = vunpack.c.l.b16 %v3858
        %v3898 = vunpack.c.l.b16 %v3859
        %v3899 = vunpack.c.l.b16 %v3860
        %v3900 = vpack.c.b16 %v3885, %v3884
        %v3901 = vpack.c.b16 %v3887, %v3886
        %v3902 = vpack.c.b16 %v3889, %v3888
        %v3903 = vpack.c.b16 %v3891, %v3890
        %v3904 = vpack.c.b16 %v3893, %v3892
        %v3905 = vpack.c.b16 %v3895, %v3894
        %v3906 = vpack.c.b16 %v3897, %v3896
        %v3907 = vpack.c.b16 %v3899, %v3898
        %3916 = vmatprep.subr.bf16.mxu0 0
        %3917 = vmatpush1.bf16.msra.mxu0 %v3900
        %3918 = vmatprep.subr.bf16.mxu0 0
        %3919 = vmatpush1.bf16.msra.mxu0 %v3901
        %3920 = vmatprep.subr.bf16.mxu0 0
        %3921 = vmatpush1.bf16.msra.mxu0 %v3902
        %3922 = vmatprep.subr.bf16.mxu0 0
        %3923 = vmatpush1.bf16.msra.mxu0 %v3903
        %3924 = vmatprep.subr.bf16.mxu0 0
        %3925 = vmatpush1.bf16.msra.mxu0 %v3904
        %3926 = vmatprep.subr.bf16.mxu0 0
        %3927 = vmatpush1.bf16.msra.mxu0 %v3905
        %3928 = vmatprep.subr.bf16.mxu0 0
        %3929 = vmatpush1.bf16.msra.mxu0 %v3906
        %3930 = vmatprep.subr.bf16.mxu0 0
        %3931 = vmatpush1.bf16.msra.mxu0 %v3907
        %3932 = vmatprep.subr.bf16.mxu0 0
        %3933 = vmatpush1.bf16.msra.mxu0 0
        %3934 = vmatprep.subr.bf16.mxu0 0
        %3935 = vmatpush1.bf16.msra.mxu0 0
        %3936 = vmatprep.subr.bf16.mxu0 0
        %3937 = vmatpush1.bf16.msra.mxu0 0
        %3938 = vmatprep.subr.bf16.mxu0 0
        %3939 = vmatpush1.bf16.msra.mxu0 0
        %3940 = vmatprep.subr.bf16.mxu0 0
        %3941 = vmatpush1.bf16.msra.mxu0 0
        %3942 = vmatprep.subr.bf16.mxu0 0
        %3943 = vmatpush1.bf16.msra.mxu0 0
        %3944 = vmatprep.subr.bf16.mxu0 0
        %3945 = vmatpush1.bf16.msra.mxu0 0
        %3946 = vmatprep.subr.bf16.mxu0 0
        %3947 = vmatpush1.bf16.msra.mxu0 0
        %3948 = vmatprep.mubr.bf16.mxu0 0
        %3949 = vmatmul.mubr.bf16.gmra.mrb[0].mxu0 %v3844
        %v3950 = vpop.f32.mrb[0].mxu0
        %v3951 = vadd.f32 %v3866, %v3950
        %v3952 = vpop.f32.mrb[0].mxu0
        %v3953 = vpop.f32.mrb[0].mxu0
        %v3954 = vpop.f32.mrb[0].mxu0
        %3955 = vdwg.mxu0
        %v3956 = vadd.f32 %v3775, %v3951
        %v3957 = vsel %vm1024, %v3956, 0.0
        %3958 = vadd.xlane.f32.xlu0 %v3957
        %v3959 = vpop.xlane.xlu0 %3958
        %v3960 = vmul.f32 %v3959, %v2329
        %v3961 = vsub.f32 %v3956, %v3960
        %v3962 = vmul.f32 %v3961, %v3961
        %v3963 = vsel %vm1024, %v3962, 0.0
        %3964 = vadd.xlane.f32.xlu0 %v3963
        %v3965 = vpop.xlane.xlu0 %3964
        %v3966 = vmul.f32 %v3965, %v2329
        %v3967 = vadd.f32 %v3966, 1e-05
        %v3968 = vrsqrt.pop %v3967
        %v3969 = vmul.f32 %v3961, %v3968
        %v3970 = vmul.f32 %v3969, %v2344
        %v3971 = vadd.f32 %v3970, %v2351
        %3972 = vst.msk [vmem:[%s839] sm:$0xff] %vm1024, %v3971
        %s3973 = sand.u32 %s547, 1
        %s3974 = scalar_lea.sflag [#allocation3], %s3973
        %s3975 = sand.u32 %s547, 1
        %s3976 = smul.addr %s3975, 8
        %s3977 = scalar_lea.vmem [#allocation2], %s3976
        // Predicated region
        $region101: #{transformer_decoder.1} parent=95 // pred_check
          %p3978 = pneg %p557
        $region102: #{transformer_decoder.1} parent=95 // pred_check_branch
          %3980 = sbr.rel (%p3978) target = $region104
        $region103: #{transformer_decoder.1} parent=95 // pred_region
          %s3982 = ssub.s32 128, 128
          %3983 = vsyncadd %s3974, %s3982
          %s3984 = smul.addr %s37, 128
          %s3985 = scalar_lea.hbm %s19, %s3984
          %s3987 = sshll.u32 %s3977, 4
          %s3988 = int_to_ptr.vmem [resolvable:$true] %s3987
          %3990 = dma.vmem_to_hbm [thread:$0]  %s3988, 128, %s3985, %s3974
        $region104: #{transformer_decoder.1} parent=95 // pred_fallthru
          _
      $region96: #{transformer_decoder.1} parent=5 // pred_fallthru
        _
      %p3991 = scmp.le.s32.totalorder 2, %s28
      // Predicated region
      $region105: #{transformer_decoder.1} parent=5 // pred_check
        %p3992 = pneg %p3991
      $region106: #{transformer_decoder.1} parent=5 // pred_check_branch
        %3994 = sbr.rel (%p3992) target = $region108
      $region107: #{transformer_decoder.1} parent=5 // pred_region
        %s3995 = ssub.s32 %s28, 2
        // Predicated region
        $region109: #{transformer_decoder.1} parent=107 // pred_check
          %p3996 = pneg %p563
        $region110: #{transformer_decoder.1} parent=107 // pred_check_branch
          %3998 = sbr.rel (%p3996) target = $region112
        $region111: #{transformer_decoder.1} parent=107 // pred_region
          %s3999 = sand.u32 %s548, 1
          %s4000 = scalar_lea.sflag [#allocation3], %s3999
          %s4001 = sand.u32 %s548, 1
          %s4002 = smul.addr %s4001, 8
          %s4003 = scalar_lea.vmem [#allocation2], %s4002
          %4004 = dma.done %s4000, 128
        $region112: #{transformer_decoder.1} parent=107 // pred_fallthru
          _
      $region108: #{transformer_decoder.1} parent=5 // pred_fallthru
        _
    $region6: #{transformer_decoder.1} parent=1 // loop_footer
      %s32 = sadd.s32 1, %s28
    $region7: #{transformer_decoder.1} parent=1 // loop_footer_branch
      %27 = sbr.rel target = $region3
    $region8: #{transformer_decoder.1} parent=1 // loop_exit
      _
    %4005 = vsyncpa [#allocation3], 1
    %s4006 = scalar_lea.sflag [#allocation3], 1
    %4007 = vsyncpa %s4006, 1

</llo_original>
